<compile_context>
chip_gen: v7x
topology: tpu7x:2x2x1
jax: 0.10.0
libtpu: 0.0.40
codegen_flags: <defaults>
</compile_context>

<pallas_src>
import functools

import jax
import jax.numpy as jnp
from jax.experimental import pallas as pl
from jax.experimental.pallas import tpu as pltpu

_BN_EPS = 1e-5


# --------------------------------- fused kernel ---------------------------------


def _fused_tcn_kernel(*refs, block_meta, b_blk, t_len, off):
    """Whole-network forward for one batch tile of b_blk samples.

    refs = (x_ref, *weight_refs, out_ref, pad_scratch).
    Activations are kept as a flat (b_blk*T, C) f32 slab for MXU-shaped matmuls; the 3-D pad
    scratch provides the per-sample zero halo for the dilated centered 'same' convolution.
    """
    x_ref, out_ref, pad_ref = refs[0], refs[-2], refs[-1]
    wrefs = refs[1:-2]
    _, t_pad, c_max = pad_ref.shape

    # Zero ONLY the halo rows, once per grid step (perf review item 3). They are never written
    # afterwards; every stage writes/reads exactly rows [off, off+T) and columns [0, Cin).
    pad_ref[:, 0:off, :] = jnp.zeros((b_blk, off, c_max), jnp.float32)
    pad_ref[:, off + t_len:t_pad, :] = jnp.zeros(
        (b_blk, t_pad - off - t_len, c_max), jnp.float32)

    c_in = x_ref.shape[2]
    y = x_ref[...].astype(jnp.float32).reshape(b_blk * t_len, c_in)

    def conv_stage(act, w_ref, shift_ref, dil):
        """All kernel-size branches of one Conv1d -> BN(eval) -> Chomp1d(sym) -> ReLU stage.

        w_ref: (Kmax, Cin, Cout_total) bf16, BN-scale folded, branches stacked along Cout with
        shorter kernels center-embedded as zero taps -> the channel concat is free and each tap
        is one (b_blk*T, Cin) @ (Cin, Cout_total) MXU matmul.
        """
        k_taps, cin, _ = w_ref.shape
        half = (k_taps - 1) * dil // 2
        # Sublane-aligned write offset (off % 8 == 0); halos around it stay zero.
        pad_ref[:, off:off + t_len, 0:cin] = act.reshape(b_blk, t_len, cin)
        acc = None
        for k in range(k_taps):                      # static tap loop -> k matmuls with M=128
            s = off - half + k * dil
            xk = pad_ref[:, s:s + t_len, 0:cin].reshape(b_blk * t_len, cin)
            # bf16-stored weight upcast in-vreg; default-precision f32 matmul rounds operands
            # through bf16 anyway, so this equals a native bf16 MXU pass numerically & in cost.
            d = jnp.dot(xk, w_ref[k].astype(jnp.float32),
                        preferred_element_type=jnp.float32)
            acc = d if acc is None else acc + d
        return acc + shift_ref[...]                  # folded BN shift (incl. conv bias), (1, Cout)

    wi = 0
    for dil, _kmax, has_down in block_meta:
        w0, sh0, w1, sh1 = wrefs[wi], wrefs[wi + 1], wrefs[wi + 2], wrefs[wi + 3]
        wi += 4
        if has_down:                                 # DownSample1d('norm'): 1x1 conv + BN(eval)
            dw, dsh = wrefs[wi], wrefs[wi + 1]
            wi += 2
            residual = jnp.dot(y, dw[...].astype(jnp.float32),
                               preferred_element_type=jnp.float32) + dsh[...]
        else:
            residual = y
        z = jnp.maximum(conv_stage(y, w0, sh0, dil), 0.0)   # conv stage 0 (+ReLU)
        z = jnp.maximum(conv_stage(z, w1, sh1, dil), 0.0)   # conv stage 1 (Dropout eval == id)
        y = jnp.maximum(z + residual, 0.0)                  # residual add + final ReLU

    # tcn_output: nn.Linear(hidden[-1], num_classes) contracts the CHANNEL axis (the lane dim of
    # y, so no sublane contraction / in-kernel transpose), padded to NC_PAD lanes -> dense store.
    lin_w, lin_b = wrefs[wi], wrefs[wi + 1]
    out = jnp.dot(y, lin_w[...].astype(jnp.float32),
                  preferred_element_type=jnp.float32) + lin_b[...]
    out_ref[...] = out.astype(out_ref.dtype)


def _full_spec(shape):
    # Whole-array block; constant index map across the batch grid -> DMA'd once.
    # (pl.Buffered(1) would additionally halve weight VMEM residency at production channel
    #  counts; unnecessary at these toy sizes.)
    if len(shape) == 2:
        return pl.BlockSpec(shape, lambda b: (0, 0))
    return pl.BlockSpec(shape, lambda b: (0, 0, 0))


def make_forward(flat_weights, block_meta, *, B, T, C_in, hidden_channels, num_classes,
                 nc_pad, batch_block, dtype=jnp.float32):
    assert B % batch_block == 0, "batch must be divisible by the batch tile"
    assert T % 8 == 0, "T must be sublane-aligned for the flat (B_blk*T, C) activation layout"
    half_max = max((km - 1) * d // 2 for d, km, _ in block_meta)
    off = max(8, 8 * pl.cdiv(half_max, 8))           # sublane-aligned halo offset
    c_max = max(C_in, *hidden_channels)
    t_pad = off + T + off

    in_specs = [pl.BlockSpec((batch_block, T, C_in), lambda b: (b, 0, 0))]
    in_specs += [_full_spec(w.shape) for w in flat_weights]

    kern = functools.partial(_fused_tcn_kernel, block_meta=block_meta,
                             b_blk=batch_block, t_len=T, off=off)
    call = pl.pallas_call(
        kern,
        out_shape=jax.ShapeDtypeStruct((B * T, nc_pad), dtype),
        grid=(B // batch_block,),
        in_specs=in_specs,
        out_specs=pl.BlockSpec((batch_block * T, nc_pad), lambda b: (b, 0)),
        scratch_shapes=[pltpu.VMEM((batch_block, t_pad, c_max), jnp.float32)],
        compiler_params=pltpu.CompilerParams(dimension_semantics=("parallel",)),
    )

    def forward(x):
        out = call(x, *flat_weights)                 # (B*T, NC_PAD): lane-dense writeback
        return out.reshape(B, T, nc_pad)[:, :, :num_classes]

    return forward


# ---------------------------- parameters (synthetic) -----------------------------


def _fold_bn(conv_bias, gamma, beta, mean, var, eps=_BN_EPS):
    scale = gamma / jnp.sqrt(var + eps)
    shift = (conv_bias - mean) * scale + beta
    return scale, shift


def init_params(key, in_channels, hidden_channels, kernel_sizes, num_classes):
    """Synthetic torch-equivalent parameters. Conv1d weights stored as (K, Cin, Cout)."""
    keys = iter(jax.random.split(key, 256))

    def nrm(shape, s=0.1):
        return s * jax.random.normal(next(keys), shape, jnp.float32)

    def bn(c):
        gamma = 1.0 + 0.05 * jax.random.normal(next(keys), (c,), jnp.float32)
        beta = 0.05 * jax.random.normal(next(keys), (c,), jnp.float32)
        mean = 0.05 * jax.random.normal(next(keys), (c,), jnp.float32)
        var = 1.0 + 0.1 * jax.random.uniform(next(keys), (c,), jnp.float32)
        return (gamma, beta, mean, var)

    n_br = len(kernel_sizes)
    blocks = []
    for bi, out_ch in enumerate(hidden_channels):
        in_ch = in_channels if bi == 0 else hidden_channels[bi - 1]
        assert out_ch % n_br == 0, "out_channels must be divisible by branches_num"
        bout = out_ch // n_br
        convs = []
        for conv_idx in range(2):                            # conv_num = 2
            cin = in_ch if conv_idx == 0 else out_ch
            convs.append([{'w': nrm((K, cin, bout)), 'b': nrm((bout,)), 'bn': bn(bout)}
                          for K in kernel_sizes])
        blocks.append({
            'convs': convs,
            'down': {'w': nrm((in_ch, out_ch)), 'b': nrm((out_ch,)), 'bn': bn(out_ch)},
        })
    linear = {'w': nrm((num_classes, hidden_channels[-1])), 'b': nrm((num_classes,))}
    return {'blocks': blocks, 'linear': linear}


def fuse_params(raw, kernel_sizes, hidden_channels, in_channels, num_classes, nc_pad):
    """Fold BN scale into conv weights, stack branches along Cout, cast matmul weights to bf16,
    zero-pad the classifier to nc_pad lanes, flatten everything for the kernel."""
    n_br = len(kernel_sizes)
    k_max = max(kernel_sizes)
    flat, meta = [], []
    for bi, blk in enumerate(raw['blocks']):
        dil = 2 ** bi
        in_ch = in_channels if bi == 0 else hidden_channels[bi - 1]
        out_ch = hidden_channels[bi]
        for conv_idx in range(2):
            cols, shifts = [], []
            for br, K in zip(blk['convs'][conv_idx], kernel_sizes):
                # symmetric Chomp1d == centered 'same' conv; requires even total padding.
                assert (K - 1) * dil % 2 == 0, "symmetric chomp needs even (K-1)*dilation"
                assert (k_max - K) % 2 == 0, "branch kernel sizes must share parity"
                scale, shift = _fold_bn(br['b'], *br['bn'])
                w = br['w'] * scale[None, None, :]            # fold BN scale into the weights
                lo = (k_max - K) // 2                         # center-embed into Kmax taps
                w = jnp.pad(w, ((lo, k_max - K - lo), (0, 0), (0, 0)))
                cols.append(w)
                shifts.append(shift)
            flat.append(jnp.concatenate(cols, axis=2).astype(jnp.bfloat16))  # (Kmax, cin, out_ch)
            flat.append(jnp.concatenate(shifts).reshape(1, out_ch))          # f32 shift
        # Literal source condition: `stride != 1 or in_channels // branches_num != out_channels`
        # (stride == 1 here, matching the upstream Lipreading-TCN code). Review note: if the
        # intended condition is simply in_ch != out_ch, both agree for this configuration.
        has_down = (in_ch // n_br) != out_ch
        assert has_down or in_ch == out_ch, "identity residual needs matching channel counts"
        if has_down:
            scale, shift = _fold_bn(blk['down']['b'], *blk['down']['bn'])
            flat.append((blk['down']['w'] * scale[None, :]).astype(jnp.bfloat16))  # (cin, out_ch)
            flat.append(shift.reshape(1, out_ch))
        meta.append((dil, k_max, has_down))
    # Classifier: contract hidden[-1]; zero-pad the output lanes to nc_pad for a dense store.
    h_last = hidden_channels[-1]
    lw_pad = jnp.zeros((h_last, nc_pad), jnp.float32).at[:, :num_classes].set(raw['linear']['w'].T)
    lb_pad = jnp.zeros((1, nc_pad), jnp.float32).at[:, :num_classes].set(raw['linear']['b'])
    flat.append(lw_pad.astype(jnp.bfloat16))
    flat.append(lb_pad)
    return flat, tuple(meta)


# ------------------------ pure-JAX reference (validation) ------------------------


def reference_forward(x, raw, kernel_sizes, hidden_channels, in_channels):
    """Unfused XLA re-implementation of the PyTorch module (eval mode) for validation."""
    n_br = len(kernel_sizes)
    B, T, _ = x.shape
    y = x
    for bi, blk in enumerate(raw['blocks']):
        dil = 2 ** bi
        in_ch = in_channels if bi == 0 else hidden_channels[bi - 1]
        out_ch = hidden_channels[bi]
        if (in_ch // n_br) != out_ch:                 # same (literal) downsample condition
            d = blk['down']
            g, be, m, v = d['bn']
            conv = jnp.einsum('btc,cd->btd', y, d['w']) + d['b']
            residual = (conv - m) / jnp.sqrt(v + _BN_EPS) * g + be
        else:
            residual = y
        z = y
        for conv_idx in range(2):
            outs = []
            for br, K in zip(blk['convs'][conv_idx], kernel_sizes):
                half = (K - 1) * dil // 2
                xp = jnp.pad(z, ((0, 0), (half, half), (0, 0)))
                acc = sum(jnp.einsum('btc,cd->btd', xp[:, k * dil:k * dil + T, :], br['w'][k])
                          for k in range(K))
                g, be, m, v = br['bn']
                bnv = (acc + br['b'] - m) / jnp.sqrt(v + _BN_EPS) * g + be
                outs.append(jnp.maximum(bnv, 0.0))
            z = jnp.concatenate(outs, axis=-1)
        y = jnp.maximum(z + residual, 0.0)
    lin = raw['linear']
    # nn.Linear(hidden[-1], num_classes): contract the channel axis -> (B, T, num_classes).
    return jnp.einsum('bth,nh->btn', y, lin['w']) + lin['b']


# -------------------------------------- main --------------------------------------


if __name__ == "__main__":
    B, T, C_in = 16, 16, 4
    hidden_channels = [8, 16]
    kernel_sizes = [3, 5]
    num_classes = 10
    NC_PAD = 128                 # lane-dense classifier padding
    B_BLK = 8                    # B_BLK * T = 128 rows per matmul / grid step; grid = (2,)

    key = jax.random.PRNGKey(0)
    kx, kp = jax.random.split(key)
    x = jax.random.normal(kx, (B, T, C_in), jnp.float32)

    raw = init_params(kp, C_in, hidden_channels, kernel_sizes, num_classes)
    flat_w, block_meta = fuse_params(raw, kernel_sizes, hidden_channels, C_in,
                                     num_classes, NC_PAD)

    fwd = jax.jit(make_forward(flat_w, block_meta, B=B, T=T, C_in=C_in,
                               hidden_channels=hidden_channels, num_classes=num_classes,
                               nc_pad=NC_PAD, batch_block=B_BLK))
    out = fwd(x)
    jax.block_until_ready(out)

    assert out.shape == (B, T, num_classes), out.shape
    assert out.dtype == jnp.float32

    # Validate against the unfused f32 XLA reference. Tolerance covers bf16-stored BN-folded
    # weights and TPU default-precision (bf16-rounded-operand) matmuls on both sides.
    ref = reference_forward(x, raw, kernel_sizes, hidden_channels, C_in)
    err = float(jnp.max(jnp.abs(out - ref)))
    scale = float(jnp.max(jnp.abs(ref)))
    assert err <= 3e-2 * max(1.0, scale), f"mismatch vs reference: max abs err {err} (scale {scale})"

    print("KERNEL_OK")
</pallas_src>

<mosaic_0001>
module attributes {stable_mosaic.version = 11 : i64} {
  func.func @_fused_tcn_kernel(%arg0: i32, %arg1: memref<8x16x4xf32, #tpu.memory_space<vmem>>, %arg2: memref<5x4x8xbf16, #tpu.memory_space<vmem>>, %arg3: memref<1x8xf32, #tpu.memory_space<vmem>>, %arg4: memref<5x8x8xbf16, #tpu.memory_space<vmem>>, %arg5: memref<1x8xf32, #tpu.memory_space<vmem>>, %arg6: memref<4x8xbf16, #tpu.memory_space<vmem>>, %arg7: memref<1x8xf32, #tpu.memory_space<vmem>>, %arg8: memref<5x8x16xbf16, #tpu.memory_space<vmem>>, %arg9: memref<1x16xf32, #tpu.memory_space<vmem>>, %arg10: memref<5x16x16xbf16, #tpu.memory_space<vmem>>, %arg11: memref<1x16xf32, #tpu.memory_space<vmem>>, %arg12: memref<8x16xbf16, #tpu.memory_space<vmem>>, %arg13: memref<1x16xf32, #tpu.memory_space<vmem>>, %arg14: memref<16x128xbf16, #tpu.memory_space<vmem>>, %arg15: memref<1x128xf32, #tpu.memory_space<vmem>>, %arg16: memref<128x128xf32, #tpu.memory_space<vmem>>, %arg17: memref<8x32x16xf32, #tpu.memory_space<vmem>>) attributes {dimension_semantics = [#tpu.dimension_semantics<parallel>], iteration_bounds = array<i64: 2>, scalar_prefetch = 0 : i64, scratch_operands = 1 : i64, tpu.core_type = #tpu.core_type<tc>, window_params = [{transform_indices = @transform_0, window_bounds = array<i64: 8, 16, 4>}, {pipeline_mode = #tpu.pipeline_mode<synchronous>, transform_indices = @transform_1, window_bounds = array<i64: 5, 4, 8>}, {pipeline_mode = #tpu.pipeline_mode<synchronous>, transform_indices = @transform_2, window_bounds = array<i64: 1, 8>}, {pipeline_mode = #tpu.pipeline_mode<synchronous>, transform_indices = @transform_3, window_bounds = array<i64: 5, 8, 8>}, {pipeline_mode = #tpu.pipeline_mode<synchronous>, transform_indices = @transform_4, window_bounds = array<i64: 1, 8>}, {pipeline_mode = #tpu.pipeline_mode<synchronous>, transform_indices = @transform_5, window_bounds = array<i64: 4, 8>}, {pipeline_mode = #tpu.pipeline_mode<synchronous>, transform_indices = @transform_6, window_bounds = array<i64: 1, 8>}, {pipeline_mode = #tpu.pipeline_mode<synchronous>, transform_indices = @transform_7, window_bounds = array<i64: 5, 8, 16>}, {pipeline_mode = #tpu.pipeline_mode<synchronous>, transform_indices = @transform_8, window_bounds = array<i64: 1, 16>}, {pipeline_mode = #tpu.pipeline_mode<synchronous>, transform_indices = @transform_9, window_bounds = array<i64: 5, 16, 16>}, {pipeline_mode = #tpu.pipeline_mode<synchronous>, transform_indices = @transform_10, window_bounds = array<i64: 1, 16>}, {pipeline_mode = #tpu.pipeline_mode<synchronous>, transform_indices = @transform_11, window_bounds = array<i64: 8, 16>}, {pipeline_mode = #tpu.pipeline_mode<synchronous>, transform_indices = @transform_12, window_bounds = array<i64: 1, 16>}, {pipeline_mode = #tpu.pipeline_mode<synchronous>, transform_indices = @transform_13, window_bounds = array<i64: 16, 128>}, {pipeline_mode = #tpu.pipeline_mode<synchronous>, transform_indices = @transform_14, window_bounds = array<i64: 1, 128>}, {transform_indices = @transform_15, window_bounds = array<i64: 128, 128>}]} {
    %cst = arith.constant 0.000000e+00 : f32
    %0 = vector.broadcast %cst : f32 to vector<8x8x16xf32>
    %c0 = arith.constant 0 : index
    %c0_0 = arith.constant 0 : index
    %c0_1 = arith.constant 0 : index
    %1 = vector.load %arg17[%c0, %c0_0, %c0_1] : memref<8x32x16xf32, #tpu.memory_space<vmem>>, vector<8x8x16xf32>
    tpu.vector_store %arg17[%c0, %c0_0, %c0_1], %0 {strides = array<i32>} : memref<8x32x16xf32, #tpu.memory_space<vmem>>, vector<8x8x16xf32>,
    %cst_2 = arith.constant 0.000000e+00 : f32
    %2 = vector.broadcast %cst_2 : f32 to vector<8x8x16xf32>
    %c0_3 = arith.constant 0 : index
    %c24 = arith.constant 24 : index
    %c0_4 = arith.constant 0 : index
    %3 = vector.load %arg17[%c0_3, %c24, %c0_4] : memref<8x32x16xf32, #tpu.memory_space<vmem>>, vector<8x8x16xf32>
    tpu.vector_store %arg17[%c0_3, %c24, %c0_4], %2 {strides = array<i32>} : memref<8x32x16xf32, #tpu.memory_space<vmem>>, vector<8x8x16xf32>,
    %c0_5 = arith.constant 0 : index
    %c0_6 = arith.constant 0 : index
    %c0_7 = arith.constant 0 : index
    %4 = vector.load %arg1[%c0_5, %c0_6, %c0_7] : memref<8x16x4xf32, #tpu.memory_space<vmem>>, vector<8x16x4xf32>
    %5 = vector.shape_cast %4 : vector<8x16x4xf32> to vector<128x4xf32>
    %c0_8 = arith.constant 0 : index
    %c0_9 = arith.constant 0 : index
    %6 = vector.load %arg6[%c0_8, %c0_9] : memref<4x8xbf16, #tpu.memory_space<vmem>>, vector<4x8xbf16>
    %7 = arith.extf %6 : vector<4x8xbf16> to vector<4x8xf32>
    %cst_10 = arith.constant dense<0.000000e+00> : vector<128x8xf32>
    %8 = tpu.matmul %5, %7, %cst_10 {dimension_numbers = #tpu.dot_dimension_numbers<[1], [0], [0], [1], [0, 0, 1, 1], [], []>} : vector<128x4xf32>, vector<4x8xf32>, vector<128x8xf32> -> vector<128x8xf32>
    %c0_11 = arith.constant 0 : index
    %c0_12 = arith.constant 0 : index
    %9 = vector.load %arg7[%c0_11, %c0_12] : memref<1x8xf32, #tpu.memory_space<vmem>>, vector<1x8xf32>
    %10 = vector.broadcast %9 : vector<1x8xf32> to vector<128x8xf32>
    %11 = arith.addf %8, %10 : vector<128x8xf32>
    %12 = vector.shape_cast %5 : vector<128x4xf32> to vector<8x16x4xf32>
    %c0_13 = arith.constant 0 : index
    %c8 = arith.constant 8 : index
    %c0_14 = arith.constant 0 : index
    %13 = vector.load %arg17[%c0_13, %c8, %c0_14] : memref<8x32x16xf32, #tpu.memory_space<vmem>>, vector<8x16x4xf32>
    tpu.vector_store %arg17[%c0_13, %c8, %c0_14], %12 {strides = array<i32>} : memref<8x32x16xf32, #tpu.memory_space<vmem>>, vector<8x16x4xf32>,
    %c0_15 = arith.constant 0 : index
    %c6 = arith.constant 6 : index
    %c0_16 = arith.constant 0 : index
    %14 = vector.load %arg17[%c0_15, %c6, %c0_16] : memref<8x32x16xf32, #tpu.memory_space<vmem>>, vector<8x16x4xf32>
    %15 = vector.shape_cast %14 : vector<8x16x4xf32> to vector<128x4xf32>
    %c0_17 = arith.constant 0 : index
    %c0_18 = arith.constant 0 : index
    %c0_19 = arith.constant 0 : index
    %16 = vector.load %arg2[%c0_17, %c0_18, %c0_19] : memref<5x4x8xbf16, #tpu.memory_space<vmem>>, vector<1x4x8xbf16>
    %17 = vector.shape_cast %16 : vector<1x4x8xbf16> to vector<4x8xbf16>
    %18 = arith.extf %17 : vector<4x8xbf16> to vector<4x8xf32>
    %cst_20 = arith.constant dense<0.000000e+00> : vector<128x8xf32>
    %19 = tpu.matmul %15, %18, %cst_20 {dimension_numbers = #tpu.dot_dimension_numbers<[1], [0], [0], [1], [0, 0, 1, 1], [], []>} : vector<128x4xf32>, vector<4x8xf32>, vector<128x8xf32> -> vector<128x8xf32>
    %c0_21 = arith.constant 0 : index
    %c7 = arith.constant 7 : index
    %c0_22 = arith.constant 0 : index
    %20 = vector.load %arg17[%c0_21, %c7, %c0_22] : memref<8x32x16xf32, #tpu.memory_space<vmem>>, vector<8x16x4xf32>
    %21 = vector.shape_cast %20 : vector<8x16x4xf32> to vector<128x4xf32>
    %c1 = arith.constant 1 : index
    %c0_23 = arith.constant 0 : index
    %c0_24 = arith.constant 0 : index
    %22 = vector.load %arg2[%c1, %c0_23, %c0_24] : memref<5x4x8xbf16, #tpu.memory_space<vmem>>, vector<1x4x8xbf16>
    %23 = vector.shape_cast %22 : vector<1x4x8xbf16> to vector<4x8xbf16>
    %24 = arith.extf %23 : vector<4x8xbf16> to vector<4x8xf32>
    %cst_25 = arith.constant dense<0.000000e+00> : vector<128x8xf32>
    %25 = tpu.matmul %21, %24, %cst_25 {dimension_numbers = #tpu.dot_dimension_numbers<[1], [0], [0], [1], [0, 0, 1, 1], [], []>} : vector<128x4xf32>, vector<4x8xf32>, vector<128x8xf32> -> vector<128x8xf32>
    %26 = arith.addf %19, %25 : vector<128x8xf32>
    %c0_26 = arith.constant 0 : index
    %c8_27 = arith.constant 8 : index
    %c0_28 = arith.constant 0 : index
    %27 = vector.load %arg17[%c0_26, %c8_27, %c0_28] : memref<8x32x16xf32, #tpu.memory_space<vmem>>, vector<8x16x4xf32>
    %28 = vector.shape_cast %27 : vector<8x16x4xf32> to vector<128x4xf32>
    %c2 = arith.constant 2 : index
    %c0_29 = arith.constant 0 : index
    %c0_30 = arith.constant 0 : index
    %29 = vector.load %arg2[%c2, %c0_29, %c0_30] : memref<5x4x8xbf16, #tpu.memory_space<vmem>>, vector<1x4x8xbf16>
    %30 = vector.shape_cast %29 : vector<1x4x8xbf16> to vector<4x8xbf16>
    %31 = arith.extf %30 : vector<4x8xbf16> to vector<4x8xf32>
    %cst_31 = arith.constant dense<0.000000e+00> : vector<128x8xf32>
    %32 = tpu.matmul %28, %31, %cst_31 {dimension_numbers = #tpu.dot_dimension_numbers<[1], [0], [0], [1], [0, 0, 1, 1], [], []>} : vector<128x4xf32>, vector<4x8xf32>, vector<128x8xf32> -> vector<128x8xf32>
    %33 = arith.addf %26, %32 : vector<128x8xf32>
    %c0_32 = arith.constant 0 : index
    %c9 = arith.constant 9 : index
    %c0_33 = arith.constant 0 : index
    %34 = vector.load %arg17[%c0_32, %c9, %c0_33] : memref<8x32x16xf32, #tpu.memory_space<vmem>>, vector<8x16x4xf32>
    %35 = vector.shape_cast %34 : vector<8x16x4xf32> to vector<128x4xf32>
    %c3 = arith.constant 3 : index
    %c0_34 = arith.constant 0 : index
    %c0_35 = arith.constant 0 : index
    %36 = vector.load %arg2[%c3, %c0_34, %c0_35] : memref<5x4x8xbf16, #tpu.memory_space<vmem>>, vector<1x4x8xbf16>
    %37 = vector.shape_cast %36 : vector<1x4x8xbf16> to vector<4x8xbf16>
    %38 = arith.extf %37 : vector<4x8xbf16> to vector<4x8xf32>
    %cst_36 = arith.constant dense<0.000000e+00> : vector<128x8xf32>
    %39 = tpu.matmul %35, %38, %cst_36 {dimension_numbers = #tpu.dot_dimension_numbers<[1], [0], [0], [1], [0, 0, 1, 1], [], []>} : vector<128x4xf32>, vector<4x8xf32>, vector<128x8xf32> -> vector<128x8xf32>
    %40 = arith.addf %33, %39 : vector<128x8xf32>
    %c0_37 = arith.constant 0 : index
    %c10 = arith.constant 10 : index
    %c0_38 = arith.constant 0 : index
    %41 = vector.load %arg17[%c0_37, %c10, %c0_38] : memref<8x32x16xf32, #tpu.memory_space<vmem>>, vector<8x16x4xf32>
    %42 = vector.shape_cast %41 : vector<8x16x4xf32> to vector<128x4xf32>
    %c4 = arith.constant 4 : index
    %c0_39 = arith.constant 0 : index
    %c0_40 = arith.constant 0 : index
    %43 = vector.load %arg2[%c4, %c0_39, %c0_40] : memref<5x4x8xbf16, #tpu.memory_space<vmem>>, vector<1x4x8xbf16>
    %44 = vector.shape_cast %43 : vector<1x4x8xbf16> to vector<4x8xbf16>
    %45 = arith.extf %44 : vector<4x8xbf16> to vector<4x8xf32>
    %cst_41 = arith.constant dense<0.000000e+00> : vector<128x8xf32>
    %46 = tpu.matmul %42, %45, %cst_41 {dimension_numbers = #tpu.dot_dimension_numbers<[1], [0], [0], [1], [0, 0, 1, 1], [], []>} : vector<128x4xf32>, vector<4x8xf32>, vector<128x8xf32> -> vector<128x8xf32>
    %47 = arith.addf %40, %46 : vector<128x8xf32>
    %c0_42 = arith.constant 0 : index
    %c0_43 = arith.constant 0 : index
    %48 = vector.load %arg3[%c0_42, %c0_43] : memref<1x8xf32, #tpu.memory_space<vmem>>, vector<1x8xf32>
    %49 = vector.broadcast %48 : vector<1x8xf32> to vector<128x8xf32>
    %50 = arith.addf %47, %49 : vector<128x8xf32>
    %cst_44 = arith.constant 0.000000e+00 : f32
    %51 = vector.broadcast %cst_44 : f32 to vector<128x8xf32>
    %52 = arith.maximumf %50, %51 : vector<128x8xf32>
    %53 = vector.shape_cast %52 : vector<128x8xf32> to vector<8x16x8xf32>
    %c0_45 = arith.constant 0 : index
    %c8_46 = arith.constant 8 : index
    %c0_47 = arith.constant 0 : index
    %54 = vector.load %arg17[%c0_45, %c8_46, %c0_47] : memref<8x32x16xf32, #tpu.memory_space<vmem>>, vector<8x16x8xf32>
    tpu.vector_store %arg17[%c0_45, %c8_46, %c0_47], %53 {strides = array<i32>} : memref<8x32x16xf32, #tpu.memory_space<vmem>>, vector<8x16x8xf32>,
    %c0_48 = arith.constant 0 : index
    %c6_49 = arith.constant 6 : index
    %c0_50 = arith.constant 0 : index
    %55 = vector.load %arg17[%c0_48, %c6_49, %c0_50] : memref<8x32x16xf32, #tpu.memory_space<vmem>>, vector<8x16x8xf32>
    %56 = vector.shape_cast %55 : vector<8x16x8xf32> to vector<128x8xf32>
    %c0_51 = arith.constant 0 : index
    %c0_52 = arith.constant 0 : index
    %c0_53 = arith.constant 0 : index
    %57 = vector.load %arg4[%c0_51, %c0_52, %c0_53] : memref<5x8x8xbf16, #tpu.memory_space<vmem>>, vector<1x8x8xbf16>
    %58 = vector.shape_cast %57 : vector<1x8x8xbf16> to vector<8x8xbf16>
    %59 = arith.extf %58 : vector<8x8xbf16> to vector<8x8xf32>
    %cst_54 = arith.constant dense<0.000000e+00> : vector<128x8xf32>
    %60 = tpu.matmul %56, %59, %cst_54 {dimension_numbers = #tpu.dot_dimension_numbers<[1], [0], [0], [1], [0, 0, 1, 1], [], []>} : vector<128x8xf32>, vector<8x8xf32>, vector<128x8xf32> -> vector<128x8xf32>
    %c0_55 = arith.constant 0 : index
    %c7_56 = arith.constant 7 : index
    %c0_57 = arith.constant 0 : index
    %61 = vector.load %arg17[%c0_55, %c7_56, %c0_57] : memref<8x32x16xf32, #tpu.memory_space<vmem>>, vector<8x16x8xf32>
    %62 = vector.shape_cast %61 : vector<8x16x8xf32> to vector<128x8xf32>
    %c1_58 = arith.constant 1 : index
    %c0_59 = arith.constant 0 : index
    %c0_60 = arith.constant 0 : index
    %63 = vector.load %arg4[%c1_58, %c0_59, %c0_60] : memref<5x8x8xbf16, #tpu.memory_space<vmem>>, vector<1x8x8xbf16>
    %64 = vector.shape_cast %63 : vector<1x8x8xbf16> to vector<8x8xbf16>
    %65 = arith.extf %64 : vector<8x8xbf16> to vector<8x8xf32>
    %cst_61 = arith.constant dense<0.000000e+00> : vector<128x8xf32>
    %66 = tpu.matmul %62, %65, %cst_61 {dimension_numbers = #tpu.dot_dimension_numbers<[1], [0], [0], [1], [0, 0, 1, 1], [], []>} : vector<128x8xf32>, vector<8x8xf32>, vector<128x8xf32> -> vector<128x8xf32>
    %67 = arith.addf %60, %66 : vector<128x8xf32>
    %c0_62 = arith.constant 0 : index
    %c8_63 = arith.constant 8 : index
    %c0_64 = arith.constant 0 : index
    %68 = vector.load %arg17[%c0_62, %c8_63, %c0_64] : memref<8x32x16xf32, #tpu.memory_space<vmem>>, vector<8x16x8xf32>
    %69 = vector.shape_cast %68 : vector<8x16x8xf32> to vector<128x8xf32>
    %c2_65 = arith.constant 2 : index
    %c0_66 = arith.constant 0 : index
    %c0_67 = arith.constant 0 : index
    %70 = vector.load %arg4[%c2_65, %c0_66, %c0_67] : memref<5x8x8xbf16, #tpu.memory_space<vmem>>, vector<1x8x8xbf16>
    %71 = vector.shape_cast %70 : vector<1x8x8xbf16> to vector<8x8xbf16>
    %72 = arith.extf %71 : vector<8x8xbf16> to vector<8x8xf32>
    %cst_68 = arith.constant dense<0.000000e+00> : vector<128x8xf32>
    %73 = tpu.matmul %69, %72, %cst_68 {dimension_numbers = #tpu.dot_dimension_numbers<[1], [0], [0], [1], [0, 0, 1, 1], [], []>} : vector<128x8xf32>, vector<8x8xf32>, vector<128x8xf32> -> vector<128x8xf32>
    %74 = arith.addf %67, %73 : vector<128x8xf32>
    %c0_69 = arith.constant 0 : index
    %c9_70 = arith.constant 9 : index
    %c0_71 = arith.constant 0 : index
    %75 = vector.load %arg17[%c0_69, %c9_70, %c0_71] : memref<8x32x16xf32, #tpu.memory_space<vmem>>, vector<8x16x8xf32>
    %76 = vector.shape_cast %75 : vector<8x16x8xf32> to vector<128x8xf32>
    %c3_72 = arith.constant 3 : index
    %c0_73 = arith.constant 0 : index
    %c0_74 = arith.constant 0 : index
    %77 = vector.load %arg4[%c3_72, %c0_73, %c0_74] : memref<5x8x8xbf16, #tpu.memory_space<vmem>>, vector<1x8x8xbf16>
    %78 = vector.shape_cast %77 : vector<1x8x8xbf16> to vector<8x8xbf16>
    %79 = arith.extf %78 : vector<8x8xbf16> to vector<8x8xf32>
    %cst_75 = arith.constant dense<0.000000e+00> : vector<128x8xf32>
    %80 = tpu.matmul %76, %79, %cst_75 {dimension_numbers = #tpu.dot_dimension_numbers<[1], [0], [0], [1], [0, 0, 1, 1], [], []>} : vector<128x8xf32>, vector<8x8xf32>, vector<128x8xf32> -> vector<128x8xf32>
    %81 = arith.addf %74, %80 : vector<128x8xf32>
    %c0_76 = arith.constant 0 : index
    %c10_77 = arith.constant 10 : index
    %c0_78 = arith.constant 0 : index
    %82 = vector.load %arg17[%c0_76, %c10_77, %c0_78] : memref<8x32x16xf32, #tpu.memory_space<vmem>>, vector<8x16x8xf32>
    %83 = vector.shape_cast %82 : vector<8x16x8xf32> to vector<128x8xf32>
    %c4_79 = arith.constant 4 : index
    %c0_80 = arith.constant 0 : index
    %c0_81 = arith.constant 0 : index
    %84 = vector.load %arg4[%c4_79, %c0_80, %c0_81] : memref<5x8x8xbf16, #tpu.memory_space<vmem>>, vector<1x8x8xbf16>
    %85 = vector.shape_cast %84 : vector<1x8x8xbf16> to vector<8x8xbf16>
    %86 = arith.extf %85 : vector<8x8xbf16> to vector<8x8xf32>
    %cst_82 = arith.constant dense<0.000000e+00> : vector<128x8xf32>
    %87 = tpu.matmul %83, %86, %cst_82 {dimension_numbers = #tpu.dot_dimension_numbers<[1], [0], [0], [1], [0, 0, 1, 1], [], []>} : vector<128x8xf32>, vector<8x8xf32>, vector<128x8xf32> -> vector<128x8xf32>
    %88 = arith.addf %81, %87 : vector<128x8xf32>
    %c0_83 = arith.constant 0 : index
    %c0_84 = arith.constant 0 : index
    %89 = vector.load %arg5[%c0_83, %c0_84] : memref<1x8xf32, #tpu.memory_space<vmem>>, vector<1x8xf32>
    %90 = vector.broadcast %89 : vector<1x8xf32> to vector<128x8xf32>
    %91 = arith.addf %88, %90 : vector<128x8xf32>
    %cst_85 = arith.constant 0.000000e+00 : f32
    %92 = vector.broadcast %cst_85 : f32 to vector<128x8xf32>
    %93 = arith.maximumf %91, %92 : vector<128x8xf32>
    %94 = arith.addf %93, %11 : vector<128x8xf32>
    %cst_86 = arith.constant 0.000000e+00 : f32
    %95 = vector.broadcast %cst_86 : f32 to vector<128x8xf32>
    %96 = arith.maximumf %94, %95 : vector<128x8xf32>
    %c0_87 = arith.constant 0 : index
    %c0_88 = arith.constant 0 : index
    %97 = vector.load %arg12[%c0_87, %c0_88] : memref<8x16xbf16, #tpu.memory_space<vmem>>, vector<8x16xbf16>
    %98 = arith.extf %97 : vector<8x16xbf16> to vector<8x16xf32>
    %cst_89 = arith.constant dense<0.000000e+00> : vector<128x16xf32>
    %99 = tpu.matmul %96, %98, %cst_89 {dimension_numbers = #tpu.dot_dimension_numbers<[1], [0], [0], [1], [0, 0, 1, 1], [], []>} : vector<128x8xf32>, vector<8x16xf32>, vector<128x16xf32> -> vector<128x16xf32>
    %c0_90 = arith.constant 0 : index
    %c0_91 = arith.constant 0 : index
    %100 = vector.load %arg13[%c0_90, %c0_91] : memref<1x16xf32, #tpu.memory_space<vmem>>, vector<1x16xf32>
    %101 = vector.broadcast %100 : vector<1x16xf32> to vector<128x16xf32>
    %102 = arith.addf %99, %101 : vector<128x16xf32>
    %103 = vector.shape_cast %96 : vector<128x8xf32> to vector<8x16x8xf32>
    %c0_92 = arith.constant 0 : index
    %c8_93 = arith.constant 8 : index
    %c0_94 = arith.constant 0 : index
    %104 = vector.load %arg17[%c0_92, %c8_93, %c0_94] : memref<8x32x16xf32, #tpu.memory_space<vmem>>, vector<8x16x8xf32>
    tpu.vector_store %arg17[%c0_92, %c8_93, %c0_94], %103 {strides = array<i32>} : memref<8x32x16xf32, #tpu.memory_space<vmem>>, vector<8x16x8xf32>,
    %c0_95 = arith.constant 0 : index
    %c4_96 = arith.constant 4 : index
    %c0_97 = arith.constant 0 : index
    %105 = vector.load %arg17[%c0_95, %c4_96, %c0_97] : memref<8x32x16xf32, #tpu.memory_space<vmem>>, vector<8x16x8xf32>
    %106 = vector.shape_cast %105 : vector<8x16x8xf32> to vector<128x8xf32>
    %c0_98 = arith.constant 0 : index
    %c0_99 = arith.constant 0 : index
    %c0_100 = arith.constant 0 : index
    %107 = vector.load %arg8[%c0_98, %c0_99, %c0_100] : memref<5x8x16xbf16, #tpu.memory_space<vmem>>, vector<1x8x16xbf16>
    %108 = vector.shape_cast %107 : vector<1x8x16xbf16> to vector<8x16xbf16>
    %109 = arith.extf %108 : vector<8x16xbf16> to vector<8x16xf32>
    %cst_101 = arith.constant dense<0.000000e+00> : vector<128x16xf32>
    %110 = tpu.matmul %106, %109, %cst_101 {dimension_numbers = #tpu.dot_dimension_numbers<[1], [0], [0], [1], [0, 0, 1, 1], [], []>} : vector<128x8xf32>, vector<8x16xf32>, vector<128x16xf32> -> vector<128x16xf32>
    %c0_102 = arith.constant 0 : index
    %c6_103 = arith.constant 6 : index
    %c0_104 = arith.constant 0 : index
    %111 = vector.load %arg17[%c0_102, %c6_103, %c0_104] : memref<8x32x16xf32, #tpu.memory_space<vmem>>, vector<8x16x8xf32>
    %112 = vector.shape_cast %111 : vector<8x16x8xf32> to vector<128x8xf32>
    %c1_105 = arith.constant 1 : index
    %c0_106 = arith.constant 0 : index
    %c0_107 = arith.constant 0 : index
    %113 = vector.load %arg8[%c1_105, %c0_106, %c0_107] : memref<5x8x16xbf16, #tpu.memory_space<vmem>>, vector<1x8x16xbf16>
    %114 = vector.shape_cast %113 : vector<1x8x16xbf16> to vector<8x16xbf16>
    %115 = arith.extf %114 : vector<8x16xbf16> to vector<8x16xf32>
    %cst_108 = arith.constant dense<0.000000e+00> : vector<128x16xf32>
    %116 = tpu.matmul %112, %115, %cst_108 {dimension_numbers = #tpu.dot_dimension_numbers<[1], [0], [0], [1], [0, 0, 1, 1], [], []>} : vector<128x8xf32>, vector<8x16xf32>, vector<128x16xf32> -> vector<128x16xf32>
    %117 = arith.addf %110, %116 : vector<128x16xf32>
    %c0_109 = arith.constant 0 : index
    %c8_110 = arith.constant 8 : index
    %c0_111 = arith.constant 0 : index
    %118 = vector.load %arg17[%c0_109, %c8_110, %c0_111] : memref<8x32x16xf32, #tpu.memory_space<vmem>>, vector<8x16x8xf32>
    %119 = vector.shape_cast %118 : vector<8x16x8xf32> to vector<128x8xf32>
    %c2_112 = arith.constant 2 : index
    %c0_113 = arith.constant 0 : index
    %c0_114 = arith.constant 0 : index
    %120 = vector.load %arg8[%c2_112, %c0_113, %c0_114] : memref<5x8x16xbf16, #tpu.memory_space<vmem>>, vector<1x8x16xbf16>
    %121 = vector.shape_cast %120 : vector<1x8x16xbf16> to vector<8x16xbf16>
    %122 = arith.extf %121 : vector<8x16xbf16> to vector<8x16xf32>
    %cst_115 = arith.constant dense<0.000000e+00> : vector<128x16xf32>
    %123 = tpu.matmul %119, %122, %cst_115 {dimension_numbers = #tpu.dot_dimension_numbers<[1], [0], [0], [1], [0, 0, 1, 1], [], []>} : vector<128x8xf32>, vector<8x16xf32>, vector<128x16xf32> -> vector<128x16xf32>
    %124 = arith.addf %117, %123 : vector<128x16xf32>
    %c0_116 = arith.constant 0 : index
    %c10_117 = arith.constant 10 : index
    %c0_118 = arith.constant 0 : index
    %125 = vector.load %arg17[%c0_116, %c10_117, %c0_118] : memref<8x32x16xf32, #tpu.memory_space<vmem>>, vector<8x16x8xf32>
    %126 = vector.shape_cast %125 : vector<8x16x8xf32> to vector<128x8xf32>
    %c3_119 = arith.constant 3 : index
    %c0_120 = arith.constant 0 : index
    %c0_121 = arith.constant 0 : index
    %127 = vector.load %arg8[%c3_119, %c0_120, %c0_121] : memref<5x8x16xbf16, #tpu.memory_space<vmem>>, vector<1x8x16xbf16>
    %128 = vector.shape_cast %127 : vector<1x8x16xbf16> to vector<8x16xbf16>
    %129 = arith.extf %128 : vector<8x16xbf16> to vector<8x16xf32>
    %cst_122 = arith.constant dense<0.000000e+00> : vector<128x16xf32>
    %130 = tpu.matmul %126, %129, %cst_122 {dimension_numbers = #tpu.dot_dimension_numbers<[1], [0], [0], [1], [0, 0, 1, 1], [], []>} : vector<128x8xf32>, vector<8x16xf32>, vector<128x16xf32> -> vector<128x16xf32>
    %131 = arith.addf %124, %130 : vector<128x16xf32>
    %c0_123 = arith.constant 0 : index
    %c12 = arith.constant 12 : index
    %c0_124 = arith.constant 0 : index
    %132 = vector.load %arg17[%c0_123, %c12, %c0_124] : memref<8x32x16xf32, #tpu.memory_space<vmem>>, vector<8x16x8xf32>
    %133 = vector.shape_cast %132 : vector<8x16x8xf32> to vector<128x8xf32>
    %c4_125 = arith.constant 4 : index
    %c0_126 = arith.constant 0 : index
    %c0_127 = arith.constant 0 : index
    %134 = vector.load %arg8[%c4_125, %c0_126, %c0_127] : memref<5x8x16xbf16, #tpu.memory_space<vmem>>, vector<1x8x16xbf16>
    %135 = vector.shape_cast %134 : vector<1x8x16xbf16> to vector<8x16xbf16>
    %136 = arith.extf %135 : vector<8x16xbf16> to vector<8x16xf32>
    %cst_128 = arith.constant dense<0.000000e+00> : vector<128x16xf32>
    %137 = tpu.matmul %133, %136, %cst_128 {dimension_numbers = #tpu.dot_dimension_numbers<[1], [0], [0], [1], [0, 0, 1, 1], [], []>} : vector<128x8xf32>, vector<8x16xf32>, vector<128x16xf32> -> vector<128x16xf32>
    %138 = arith.addf %131, %137 : vector<128x16xf32>
    %c0_129 = arith.constant 0 : index
    %c0_130 = arith.constant 0 : index
    %139 = vector.load %arg9[%c0_129, %c0_130] : memref<1x16xf32, #tpu.memory_space<vmem>>, vector<1x16xf32>
    %140 = vector.broadcast %139 : vector<1x16xf32> to vector<128x16xf32>
    %141 = arith.addf %138, %140 : vector<128x16xf32>
    %cst_131 = arith.constant 0.000000e+00 : f32
    %142 = vector.broadcast %cst_131 : f32 to vector<128x16xf32>
    %143 = arith.maximumf %141, %142 : vector<128x16xf32>
    %144 = vector.shape_cast %143 : vector<128x16xf32> to vector<8x16x16xf32>
    %c0_132 = arith.constant 0 : index
    %c8_133 = arith.constant 8 : index
    %c0_134 = arith.constant 0 : index
    %145 = vector.load %arg17[%c0_132, %c8_133, %c0_134] : memref<8x32x16xf32, #tpu.memory_space<vmem>>, vector<8x16x16xf32>
    tpu.vector_store %arg17[%c0_132, %c8_133, %c0_134], %144 {strides = array<i32>} : memref<8x32x16xf32, #tpu.memory_space<vmem>>, vector<8x16x16xf32>,
    %c0_135 = arith.constant 0 : index
    %c4_136 = arith.constant 4 : index
    %c0_137 = arith.constant 0 : index
    %146 = vector.load %arg17[%c0_135, %c4_136, %c0_137] : memref<8x32x16xf32, #tpu.memory_space<vmem>>, vector<8x16x16xf32>
    %147 = vector.shape_cast %146 : vector<8x16x16xf32> to vector<128x16xf32>
    %c0_138 = arith.constant 0 : index
    %c0_139 = arith.constant 0 : index
    %c0_140 = arith.constant 0 : index
    %148 = vector.load %arg10[%c0_138, %c0_139, %c0_140] : memref<5x16x16xbf16, #tpu.memory_space<vmem>>, vector<1x16x16xbf16>
    %149 = vector.shape_cast %148 : vector<1x16x16xbf16> to vector<16x16xbf16>
    %150 = arith.extf %149 : vector<16x16xbf16> to vector<16x16xf32>
    %cst_141 = arith.constant dense<0.000000e+00> : vector<128x16xf32>
    %151 = tpu.matmul %147, %150, %cst_141 {dimension_numbers = #tpu.dot_dimension_numbers<[1], [0], [0], [1], [0, 0, 1, 1], [], []>} : vector<128x16xf32>, vector<16x16xf32>, vector<128x16xf32> -> vector<128x16xf32>
    %c0_142 = arith.constant 0 : index
    %c6_143 = arith.constant 6 : index
    %c0_144 = arith.constant 0 : index
    %152 = vector.load %arg17[%c0_142, %c6_143, %c0_144] : memref<8x32x16xf32, #tpu.memory_space<vmem>>, vector<8x16x16xf32>
    %153 = vector.shape_cast %152 : vector<8x16x16xf32> to vector<128x16xf32>
    %c1_145 = arith.constant 1 : index
    %c0_146 = arith.constant 0 : index
    %c0_147 = arith.constant 0 : index
    %154 = vector.load %arg10[%c1_145, %c0_146, %c0_147] : memref<5x16x16xbf16, #tpu.memory_space<vmem>>, vector<1x16x16xbf16>
    %155 = vector.shape_cast %154 : vector<1x16x16xbf16> to vector<16x16xbf16>
    %156 = arith.extf %155 : vector<16x16xbf16> to vector<16x16xf32>
    %cst_148 = arith.constant dense<0.000000e+00> : vector<128x16xf32>
    %157 = tpu.matmul %153, %156, %cst_148 {dimension_numbers = #tpu.dot_dimension_numbers<[1], [0], [0], [1], [0, 0, 1, 1], [], []>} : vector<128x16xf32>, vector<16x16xf32>, vector<128x16xf32> -> vector<128x16xf32>
    %158 = arith.addf %151, %157 : vector<128x16xf32>
    %c0_149 = arith.constant 0 : index
    %c8_150 = arith.constant 8 : index
    %c0_151 = arith.constant 0 : index
    %159 = vector.load %arg17[%c0_149, %c8_150, %c0_151] : memref<8x32x16xf32, #tpu.memory_space<vmem>>, vector<8x16x16xf32>
    %160 = vector.shape_cast %159 : vector<8x16x16xf32> to vector<128x16xf32>
    %c2_152 = arith.constant 2 : index
    %c0_153 = arith.constant 0 : index
    %c0_154 = arith.constant 0 : index
    %161 = vector.load %arg10[%c2_152, %c0_153, %c0_154] : memref<5x16x16xbf16, #tpu.memory_space<vmem>>, vector<1x16x16xbf16>
    %162 = vector.shape_cast %161 : vector<1x16x16xbf16> to vector<16x16xbf16>
    %163 = arith.extf %162 : vector<16x16xbf16> to vector<16x16xf32>
    %cst_155 = arith.constant dense<0.000000e+00> : vector<128x16xf32>
    %164 = tpu.matmul %160, %163, %cst_155 {dimension_numbers = #tpu.dot_dimension_numbers<[1], [0], [0], [1], [0, 0, 1, 1], [], []>} : vector<128x16xf32>, vector<16x16xf32>, vector<128x16xf32> -> vector<128x16xf32>
    %165 = arith.addf %158, %164 : vector<128x16xf32>
    %c0_156 = arith.constant 0 : index
    %c10_157 = arith.constant 10 : index
    %c0_158 = arith.constant 0 : index
    %166 = vector.load %arg17[%c0_156, %c10_157, %c0_158] : memref<8x32x16xf32, #tpu.memory_space<vmem>>, vector<8x16x16xf32>
    %167 = vector.shape_cast %166 : vector<8x16x16xf32> to vector<128x16xf32>
    %c3_159 = arith.constant 3 : index
    %c0_160 = arith.constant 0 : index
    %c0_161 = arith.constant 0 : index
    %168 = vector.load %arg10[%c3_159, %c0_160, %c0_161] : memref<5x16x16xbf16, #tpu.memory_space<vmem>>, vector<1x16x16xbf16>
    %169 = vector.shape_cast %168 : vector<1x16x16xbf16> to vector<16x16xbf16>
    %170 = arith.extf %169 : vector<16x16xbf16> to vector<16x16xf32>
    %cst_162 = arith.constant dense<0.000000e+00> : vector<128x16xf32>
    %171 = tpu.matmul %167, %170, %cst_162 {dimension_numbers = #tpu.dot_dimension_numbers<[1], [0], [0], [1], [0, 0, 1, 1], [], []>} : vector<128x16xf32>, vector<16x16xf32>, vector<128x16xf32> -> vector<128x16xf32>
    %172 = arith.addf %165, %171 : vector<128x16xf32>
    %c0_163 = arith.constant 0 : index
    %c12_164 = arith.constant 12 : index
    %c0_165 = arith.constant 0 : index
    %173 = vector.load %arg17[%c0_163, %c12_164, %c0_165] : memref<8x32x16xf32, #tpu.memory_space<vmem>>, vector<8x16x16xf32>
    %174 = vector.shape_cast %173 : vector<8x16x16xf32> to vector<128x16xf32>
    %c4_166 = arith.constant 4 : index
    %c0_167 = arith.constant 0 : index
    %c0_168 = arith.constant 0 : index
    %175 = vector.load %arg10[%c4_166, %c0_167, %c0_168] : memref<5x16x16xbf16, #tpu.memory_space<vmem>>, vector<1x16x16xbf16>
    %176 = vector.shape_cast %175 : vector<1x16x16xbf16> to vector<16x16xbf16>
    %177 = arith.extf %176 : vector<16x16xbf16> to vector<16x16xf32>
    %cst_169 = arith.constant dense<0.000000e+00> : vector<128x16xf32>
    %178 = tpu.matmul %174, %177, %cst_169 {dimension_numbers = #tpu.dot_dimension_numbers<[1], [0], [0], [1], [0, 0, 1, 1], [], []>} : vector<128x16xf32>, vector<16x16xf32>, vector<128x16xf32> -> vector<128x16xf32>
    %179 = arith.addf %172, %178 : vector<128x16xf32>
    %c0_170 = arith.constant 0 : index
    %c0_171 = arith.constant 0 : index
    %180 = vector.load %arg11[%c0_170, %c0_171] : memref<1x16xf32, #tpu.memory_space<vmem>>, vector<1x16xf32>
    %181 = vector.broadcast %180 : vector<1x16xf32> to vector<128x16xf32>
    %182 = arith.addf %179, %181 : vector<128x16xf32>
    %cst_172 = arith.constant 0.000000e+00 : f32
    %183 = vector.broadcast %cst_172 : f32 to vector<128x16xf32>
    %184 = arith.maximumf %182, %183 : vector<128x16xf32>
    %185 = arith.addf %184, %102 : vector<128x16xf32>
    %cst_173 = arith.constant 0.000000e+00 : f32
    %186 = vector.broadcast %cst_173 : f32 to vector<128x16xf32>
    %187 = arith.maximumf %185, %186 : vector<128x16xf32>
    %c0_174 = arith.constant 0 : index
    %c0_175 = arith.constant 0 : index
    %188 = vector.load %arg14[%c0_174, %c0_175] : memref<16x128xbf16, #tpu.memory_space<vmem>>, vector<16x128xbf16>
    %189 = arith.extf %188 : vector<16x128xbf16> to vector<16x128xf32>
    %cst_176 = arith.constant dense<0.000000e+00> : vector<128x128xf32>
    %190 = tpu.matmul %187, %189, %cst_176 {dimension_numbers = #tpu.dot_dimension_numbers<[1], [0], [0], [1], [0, 0, 1, 1], [], []>} : vector<128x16xf32>, vector<16x128xf32>, vector<128x128xf32> -> vector<128x128xf32>
    %c0_177 = arith.constant 0 : index
    %c0_178 = arith.constant 0 : index
    %191 = vector.load %arg15[%c0_177, %c0_178] : memref<1x128xf32, #tpu.memory_space<vmem>>, vector<1x128xf32>
    %192 = vector.broadcast %191 : vector<1x128xf32> to vector<128x128xf32>
    %193 = arith.addf %190, %192 : vector<128x128xf32>
    %c0_179 = arith.constant 0 : index
    %c0_180 = arith.constant 0 : index
    %194 = vector.load %arg16[%c0_179, %c0_180] : memref<128x128xf32, #tpu.memory_space<vmem>>, vector<128x128xf32>
    tpu.vector_store %arg16[%c0_179, %c0_180], %193 {strides = array<i32>} : memref<128x128xf32, #tpu.memory_space<vmem>>, vector<128x128xf32>,
    return
  }
  func.func @transform_0(%arg0: i32) -> (i32, i32, i32) {
    %c0_i32 = arith.constant 0 : i32
    %c0_i32_0 = arith.constant 0 : i32
    %c0_i32_1 = arith.constant 0 : i32
    return %arg0, %c0_i32, %c0_i32_0 : i32, i32, i32
  }
  func.func @transform_1(%arg0: i32) -> (i32, i32, i32) {
    %c0_i32 = arith.constant 0 : i32
    %c0_i32_0 = arith.constant 0 : i32
    %c0_i32_1 = arith.constant 0 : i32
    %c0_i32_2 = arith.constant 0 : i32
    return %c0_i32, %c0_i32_0, %c0_i32_1 : i32, i32, i32
  }
  func.func @transform_2(%arg0: i32) -> (i32, i32) {
    %c0_i32 = arith.constant 0 : i32
    %c0_i32_0 = arith.constant 0 : i32
    %c0_i32_1 = arith.constant 0 : i32
    return %c0_i32, %c0_i32_0 : i32, i32
  }
  func.func @transform_3(%arg0: i32) -> (i32, i32, i32) {
    %c0_i32 = arith.constant 0 : i32
    %c0_i32_0 = arith.constant 0 : i32
    %c0_i32_1 = arith.constant 0 : i32
    %c0_i32_2 = arith.constant 0 : i32
    return %c0_i32, %c0_i32_0, %c0_i32_1 : i32, i32, i32
  }
  func.func @transform_4(%arg0: i32) -> (i32, i32) {
    %c0_i32 = arith.constant 0 : i32
    %c0_i32_0 = arith.constant 0 : i32
    %c0_i32_1 = arith.constant 0 : i32
    return %c0_i32, %c0_i32_0 : i32, i32
  }
  func.func @transform_5(%arg0: i32) -> (i32, i32) {
    %c0_i32 = arith.constant 0 : i32
    %c0_i32_0 = arith.constant 0 : i32
    %c0_i32_1 = arith.constant 0 : i32
    return %c0_i32, %c0_i32_0 : i32, i32
  }
  func.func @transform_6(%arg0: i32) -> (i32, i32) {
    %c0_i32 = arith.constant 0 : i32
    %c0_i32_0 = arith.constant 0 : i32
    %c0_i32_1 = arith.constant 0 : i32
    return %c0_i32, %c0_i32_0 : i32, i32
  }
  func.func @transform_7(%arg0: i32) -> (i32, i32, i32) {
    %c0_i32 = arith.constant 0 : i32
    %c0_i32_0 = arith.constant 0 : i32
    %c0_i32_1 = arith.constant 0 : i32
    %c0_i32_2 = arith.constant 0 : i32
    return %c0_i32, %c0_i32_0, %c0_i32_1 : i32, i32, i32
  }
  func.func @transform_8(%arg0: i32) -> (i32, i32) {
    %c0_i32 = arith.constant 0 : i32
    %c0_i32_0 = arith.constant 0 : i32
    %c0_i32_1 = arith.constant 0 : i32
    return %c0_i32, %c0_i32_0 : i32, i32
  }
  func.func @transform_9(%arg0: i32) -> (i32, i32, i32) {
    %c0_i32 = arith.constant 0 : i32
    %c0_i32_0 = arith.constant 0 : i32
    %c0_i32_1 = arith.constant 0 : i32
    %c0_i32_2 = arith.constant 0 : i32
    return %c0_i32, %c0_i32_0, %c0_i32_1 : i32, i32, i32
  }
  func.func @transform_10(%arg0: i32) -> (i32, i32) {
    %c0_i32 = arith.constant 0 : i32
    %c0_i32_0 = arith.constant 0 : i32
    %c0_i32_1 = arith.constant 0 : i32
    return %c0_i32, %c0_i32_0 : i32, i32
  }
  func.func @transform_11(%arg0: i32) -> (i32, i32) {
    %c0_i32 = arith.constant 0 : i32
    %c0_i32_0 = arith.constant 0 : i32
    %c0_i32_1 = arith.constant 0 : i32
    return %c0_i32, %c0_i32_0 : i32, i32
  }
  func.func @transform_12(%arg0: i32) -> (i32, i32) {
    %c0_i32 = arith.constant 0 : i32
    %c0_i32_0 = arith.constant 0 : i32
    %c0_i32_1 = arith.constant 0 : i32
    return %c0_i32, %c0_i32_0 : i32, i32
  }
  func.func @transform_13(%arg0: i32) -> (i32, i32) {
    %c0_i32 = arith.constant 0 : i32
    %c0_i32_0 = arith.constant 0 : i32
    %c0_i32_1 = arith.constant 0 : i32
    return %c0_i32, %c0_i32_0 : i32, i32
  }
  func.func @transform_14(%arg0: i32) -> (i32, i32) {
    %c0_i32 = arith.constant 0 : i32
    %c0_i32_0 = arith.constant 0 : i32
    %c0_i32_1 = arith.constant 0 : i32
    return %c0_i32, %c0_i32_0 : i32, i32
  }
  func.func @transform_15(%arg0: i32) -> (i32, i32) {
    %c0_i32 = arith.constant 0 : i32
    %c0_i32_0 = arith.constant 0 : i32
    return %arg0, %c0_i32 : i32, i32
  }
}

</mosaic_0001>

<llo_original>
// kernel: forward.1
$region0: #{forward.1}
  #allocation0 [shape = 'u32[]', space=smem, size = 0x4, offset = 0x4, fixed_abs, tag = 'smem constant byte address 0x4 - core index']
  #allocation1 [shape = 'u32[144,128]{1,0:T(1,128)}', space=vmem, size = 0x12000, scoped, tag = 'internal scratch']
  #allocation2 [shape = 'f32[8,32,16]{2,1,0:T(8,128)}', space=vmem, size = 0x20000, scoped, tag = 'scratch operand']
  %s0 = inlined_call_operand.vmem [shape: f32[16,16,4], index: 0, kind: input, shape index: {}]
  %s1 = inlined_call_operand.vmem [shape: bf16[5,4,8], index: 1, kind: input, shape index: {}]
  %s2 = inlined_call_operand.vmem [shape: f32[1,8], index: 2, kind: input, shape index: {}]
  %s3 = inlined_call_operand.vmem [shape: bf16[5,8,8], index: 3, kind: input, shape index: {}]
  %s4 = inlined_call_operand.vmem [shape: f32[1,8], index: 4, kind: input, shape index: {}]
  %s5 = inlined_call_operand.vmem [shape: bf16[4,8], index: 5, kind: input, shape index: {}]
  %s6 = inlined_call_operand.vmem [shape: f32[1,8], index: 6, kind: input, shape index: {}]
  %s7 = inlined_call_operand.vmem [shape: bf16[5,8,16], index: 7, kind: input, shape index: {}]
  %s8 = inlined_call_operand.vmem [shape: f32[1,16], index: 8, kind: input, shape index: {}]
  %s9 = inlined_call_operand.vmem [shape: bf16[5,16,16], index: 9, kind: input, shape index: {}]
  %s10 = inlined_call_operand.vmem [shape: f32[1,16], index: 10, kind: input, shape index: {}]
  %s11 = inlined_call_operand.vmem [shape: bf16[8,16], index: 11, kind: input, shape index: {}]
  %s12 = inlined_call_operand.vmem [shape: f32[1,16], index: 12, kind: input, shape index: {}]
  %s13 = inlined_call_operand.vmem [shape: bf16[16,128], index: 13, kind: input, shape index: {}]
  %s14 = inlined_call_operand.vmem [shape: f32[1,128], index: 14, kind: input, shape index: {}]
  %s15 = inlined_call_operand.vmem [shape: f32[256,128], index: 15, kind: output, shape index: {}]
  %s16 = sld [smem:[#allocation0]]
  $region93: #{forward.1} parent=0
    _
  %s18 = ssub.s32 1, %s16
  %s19 = scalar_select 0, %s18, %s16
  loop: start=0, step=1, limit=4
  $region2: #{forward.1} parent=0 // loop_pre_header
    _
  $region3: #{forward.1} parent=0 // loop_header
    %s21 = sphi 0, %s25
    %p22 = scmp.ge.s32.totalorder %s21, 4
    %s31 = sphi 0, %s33
    %s34 = sphi 0, %s31
    %s35 = sphi 0, %s34
    %s51 = sphi 0, %s35
    %s55 = sphi 0, %s55
    %s57 = sphi 0, %s55
    %s58 = sphi 0, %s57
    %s72 = sphi 0, %s58
    %s76 = sphi 0, %s76
    %s78 = sphi 0, %s76
    %s79 = sphi 0, %s78
    %s93 = sphi 0, %s79
    %s97 = sphi 0, %s97
    %s99 = sphi 0, %s97
    %s100 = sphi 0, %s99
    %s114 = sphi 0, %s100
    %s118 = sphi 0, %s118
    %s120 = sphi 0, %s118
    %s121 = sphi 0, %s120
    %s135 = sphi 0, %s121
    %s139 = sphi 0, %s139
    %s141 = sphi 0, %s139
    %s142 = sphi 0, %s141
    %s156 = sphi 0, %s142
    %s160 = sphi 0, %s160
    %s162 = sphi 0, %s160
    %s163 = sphi 0, %s162
    %s177 = sphi 0, %s163
    %s181 = sphi 0, %s181
    %s183 = sphi 0, %s181
    %s184 = sphi 0, %s183
    %s198 = sphi 0, %s184
    %s202 = sphi 0, %s202
    %s204 = sphi 0, %s202
    %s205 = sphi 0, %s204
    %s219 = sphi 0, %s205
    %s223 = sphi 0, %s223
    %s225 = sphi 0, %s223
    %s226 = sphi 0, %s225
    %s240 = sphi 0, %s226
    %s244 = sphi 0, %s244
    %s246 = sphi 0, %s244
    %s247 = sphi 0, %s246
    %s261 = sphi 0, %s247
    %s265 = sphi 0, %s265
    %s267 = sphi 0, %s265
    %s268 = sphi 0, %s267
    %s282 = sphi 0, %s268
    %s286 = sphi 0, %s286
    %s288 = sphi 0, %s286
    %s289 = sphi 0, %s288
    %s303 = sphi 0, %s289
    %s307 = sphi 0, %s307
    %s309 = sphi 0, %s307
    %s310 = sphi 0, %s309
    %s324 = sphi 0, %s310
    %s328 = sphi 0, %s328
    %s330 = sphi 0, %s328
    %s331 = sphi 0, %s330
    %s345 = sphi 0, %s331
    %s351 = sphi 0, %s353
    %s354 = sphi 0, %s351
    %s355 = sphi 0, %s354
    %s371 = sphi 0, %s355
  $region4: #{forward.1} parent=0 // loop_header_branch
    %24 = sbr.rel (%p22) target = $region8
  $region5: #{forward.1} parent=0 // loop_body
    %s26 = ssub.s32 %s21, 1
    %s27 = ssub.s32 %s21, 2
    %s28 = sadd.s32 %s21, 1
    %s29 = ssub.s32 %s21, %s28
    %p30 = scmp.eq.s32.totalorder %s29, 0
    %s32 = sadd.s32 %s31, 1
    %s33 = scalar_select %p30, %s31, %s32
    %p36 = pneg %p30
    %p37 = scmp.eq.s32.totalorder %s21, 1
    %p38 = por %p36, %p37
    %p39 = scmp.ne.s32.totalorder %s31, %s34
    %p40 = scmp.eq.s32.totalorder %s21, 0
    %p41 = por %p39, %p40
    %p42 = scmp.ne.s32.totalorder %s31, %s34
    %p43 = scmp.eq.s32.totalorder %s26, 1
    %p44 = por %p42, %p43
    %p45 = scmp.ne.s32.totalorder %s34, %s35
    %p46 = scmp.eq.s32.totalorder %s26, 0
    %p47 = por %p45, %p46
    %p48 = scmp.ne.s32.totalorder %s34, %s35
    %p49 = scmp.eq.s32.totalorder %s27, 1
    %p50 = por %p48, %p49
    %p52 = scmp.ne.s32.totalorder %s35, %s51
    %p53 = scmp.eq.s32.totalorder %s27, 0
    %p54 = por %p52, %p53
    %s56 = sadd.s32 %s55, 1
    %p59 = scmp.eq.s32.totalorder %s21, 1
    %p60 = scmp.ne.s32.totalorder %s55, %s57
    %p61 = scmp.eq.s32.totalorder %s21, 0
    %p62 = por %p60, %p61
    %p63 = scmp.ne.s32.totalorder %s55, %s57
    %p64 = scmp.eq.s32.totalorder %s26, 1
    %p65 = por %p63, %p64
    %p66 = scmp.ne.s32.totalorder %s57, %s58
    %p67 = scmp.eq.s32.totalorder %s26, 0
    %p68 = por %p66, %p67
    %p69 = scmp.ne.s32.totalorder %s57, %s58
    %p70 = scmp.eq.s32.totalorder %s27, 1
    %p71 = por %p69, %p70
    %p73 = scmp.ne.s32.totalorder %s58, %s72
    %p74 = scmp.eq.s32.totalorder %s27, 0
    %p75 = por %p73, %p74
    %s77 = sadd.s32 %s76, 1
    %p80 = scmp.eq.s32.totalorder %s21, 1
    %p81 = scmp.ne.s32.totalorder %s76, %s78
    %p82 = scmp.eq.s32.totalorder %s21, 0
    %p83 = por %p81, %p82
    %p84 = scmp.ne.s32.totalorder %s76, %s78
    %p85 = scmp.eq.s32.totalorder %s26, 1
    %p86 = por %p84, %p85
    %p87 = scmp.ne.s32.totalorder %s78, %s79
    %p88 = scmp.eq.s32.totalorder %s26, 0
    %p89 = por %p87, %p88
    %p90 = scmp.ne.s32.totalorder %s78, %s79
    %p91 = scmp.eq.s32.totalorder %s27, 1
    %p92 = por %p90, %p91
    %p94 = scmp.ne.s32.totalorder %s79, %s93
    %p95 = scmp.eq.s32.totalorder %s27, 0
    %p96 = por %p94, %p95
    %s98 = sadd.s32 %s97, 1
    %p101 = scmp.eq.s32.totalorder %s21, 1
    %p102 = scmp.ne.s32.totalorder %s97, %s99
    %p103 = scmp.eq.s32.totalorder %s21, 0
    %p104 = por %p102, %p103
    %p105 = scmp.ne.s32.totalorder %s97, %s99
    %p106 = scmp.eq.s32.totalorder %s26, 1
    %p107 = por %p105, %p106
    %p108 = scmp.ne.s32.totalorder %s99, %s100
    %p109 = scmp.eq.s32.totalorder %s26, 0
    %p110 = por %p108, %p109
    %p111 = scmp.ne.s32.totalorder %s99, %s100
    %p112 = scmp.eq.s32.totalorder %s27, 1
    %p113 = por %p111, %p112
    %p115 = scmp.ne.s32.totalorder %s100, %s114
    %p116 = scmp.eq.s32.totalorder %s27, 0
    %p117 = por %p115, %p116
    %s119 = sadd.s32 %s118, 1
    %p122 = scmp.eq.s32.totalorder %s21, 1
    %p123 = scmp.ne.s32.totalorder %s118, %s120
    %p124 = scmp.eq.s32.totalorder %s21, 0
    %p125 = por %p123, %p124
    %p126 = scmp.ne.s32.totalorder %s118, %s120
    %p127 = scmp.eq.s32.totalorder %s26, 1
    %p128 = por %p126, %p127
    %p129 = scmp.ne.s32.totalorder %s120, %s121
    %p130 = scmp.eq.s32.totalorder %s26, 0
    %p131 = por %p129, %p130
    %p132 = scmp.ne.s32.totalorder %s120, %s121
    %p133 = scmp.eq.s32.totalorder %s27, 1
    %p134 = por %p132, %p133
    %p136 = scmp.ne.s32.totalorder %s121, %s135
    %p137 = scmp.eq.s32.totalorder %s27, 0
    %p138 = por %p136, %p137
    %s140 = sadd.s32 %s139, 1
    %p143 = scmp.eq.s32.totalorder %s21, 1
    %p144 = scmp.ne.s32.totalorder %s139, %s141
    %p145 = scmp.eq.s32.totalorder %s21, 0
    %p146 = por %p144, %p145
    %p147 = scmp.ne.s32.totalorder %s139, %s141
    %p148 = scmp.eq.s32.totalorder %s26, 1
    %p149 = por %p147, %p148
    %p150 = scmp.ne.s32.totalorder %s141, %s142
    %p151 = scmp.eq.s32.totalorder %s26, 0
    %p152 = por %p150, %p151
    %p153 = scmp.ne.s32.totalorder %s141, %s142
    %p154 = scmp.eq.s32.totalorder %s27, 1
    %p155 = por %p153, %p154
    %p157 = scmp.ne.s32.totalorder %s142, %s156
    %p158 = scmp.eq.s32.totalorder %s27, 0
    %p159 = por %p157, %p158
    %s161 = sadd.s32 %s160, 1
    %p164 = scmp.eq.s32.totalorder %s21, 1
    %p165 = scmp.ne.s32.totalorder %s160, %s162
    %p166 = scmp.eq.s32.totalorder %s21, 0
    %p167 = por %p165, %p166
    %p168 = scmp.ne.s32.totalorder %s160, %s162
    %p169 = scmp.eq.s32.totalorder %s26, 1
    %p170 = por %p168, %p169
    %p171 = scmp.ne.s32.totalorder %s162, %s163
    %p172 = scmp.eq.s32.totalorder %s26, 0
    %p173 = por %p171, %p172
    %p174 = scmp.ne.s32.totalorder %s162, %s163
    %p175 = scmp.eq.s32.totalorder %s27, 1
    %p176 = por %p174, %p175
    %p178 = scmp.ne.s32.totalorder %s163, %s177
    %p179 = scmp.eq.s32.totalorder %s27, 0
    %p180 = por %p178, %p179
    %s182 = sadd.s32 %s181, 1
    %p185 = scmp.eq.s32.totalorder %s21, 1
    %p186 = scmp.ne.s32.totalorder %s181, %s183
    %p187 = scmp.eq.s32.totalorder %s21, 0
    %p188 = por %p186, %p187
    %p189 = scmp.ne.s32.totalorder %s181, %s183
    %p190 = scmp.eq.s32.totalorder %s26, 1
    %p191 = por %p189, %p190
    %p192 = scmp.ne.s32.totalorder %s183, %s184
    %p193 = scmp.eq.s32.totalorder %s26, 0
    %p194 = por %p192, %p193
    %p195 = scmp.ne.s32.totalorder %s183, %s184
    %p196 = scmp.eq.s32.totalorder %s27, 1
    %p197 = por %p195, %p196
    %p199 = scmp.ne.s32.totalorder %s184, %s198
    %p200 = scmp.eq.s32.totalorder %s27, 0
    %p201 = por %p199, %p200
    %s203 = sadd.s32 %s202, 1
    %p206 = scmp.eq.s32.totalorder %s21, 1
    %p207 = scmp.ne.s32.totalorder %s202, %s204
    %p208 = scmp.eq.s32.totalorder %s21, 0
    %p209 = por %p207, %p208
    %p210 = scmp.ne.s32.totalorder %s202, %s204
    %p211 = scmp.eq.s32.totalorder %s26, 1
    %p212 = por %p210, %p211
    %p213 = scmp.ne.s32.totalorder %s204, %s205
    %p214 = scmp.eq.s32.totalorder %s26, 0
    %p215 = por %p213, %p214
    %p216 = scmp.ne.s32.totalorder %s204, %s205
    %p217 = scmp.eq.s32.totalorder %s27, 1
    %p218 = por %p216, %p217
    %p220 = scmp.ne.s32.totalorder %s205, %s219
    %p221 = scmp.eq.s32.totalorder %s27, 0
    %p222 = por %p220, %p221
    %s224 = sadd.s32 %s223, 1
    %p227 = scmp.eq.s32.totalorder %s21, 1
    %p228 = scmp.ne.s32.totalorder %s223, %s225
    %p229 = scmp.eq.s32.totalorder %s21, 0
    %p230 = por %p228, %p229
    %p231 = scmp.ne.s32.totalorder %s223, %s225
    %p232 = scmp.eq.s32.totalorder %s26, 1
    %p233 = por %p231, %p232
    %p234 = scmp.ne.s32.totalorder %s225, %s226
    %p235 = scmp.eq.s32.totalorder %s26, 0
    %p236 = por %p234, %p235
    %p237 = scmp.ne.s32.totalorder %s225, %s226
    %p238 = scmp.eq.s32.totalorder %s27, 1
    %p239 = por %p237, %p238
    %p241 = scmp.ne.s32.totalorder %s226, %s240
    %p242 = scmp.eq.s32.totalorder %s27, 0
    %p243 = por %p241, %p242
    %s245 = sadd.s32 %s244, 1
    %p248 = scmp.eq.s32.totalorder %s21, 1
    %p249 = scmp.ne.s32.totalorder %s244, %s246
    %p250 = scmp.eq.s32.totalorder %s21, 0
    %p251 = por %p249, %p250
    %p252 = scmp.ne.s32.totalorder %s244, %s246
    %p253 = scmp.eq.s32.totalorder %s26, 1
    %p254 = por %p252, %p253
    %p255 = scmp.ne.s32.totalorder %s246, %s247
    %p256 = scmp.eq.s32.totalorder %s26, 0
    %p257 = por %p255, %p256
    %p258 = scmp.ne.s32.totalorder %s246, %s247
    %p259 = scmp.eq.s32.totalorder %s27, 1
    %p260 = por %p258, %p259
    %p262 = scmp.ne.s32.totalorder %s247, %s261
    %p263 = scmp.eq.s32.totalorder %s27, 0
    %p264 = por %p262, %p263
    %s266 = sadd.s32 %s265, 1
    %p269 = scmp.eq.s32.totalorder %s21, 1
    %p270 = scmp.ne.s32.totalorder %s265, %s267
    %p271 = scmp.eq.s32.totalorder %s21, 0
    %p272 = por %p270, %p271
    %p273 = scmp.ne.s32.totalorder %s265, %s267
    %p274 = scmp.eq.s32.totalorder %s26, 1
    %p275 = por %p273, %p274
    %p276 = scmp.ne.s32.totalorder %s267, %s268
    %p277 = scmp.eq.s32.totalorder %s26, 0
    %p278 = por %p276, %p277
    %p279 = scmp.ne.s32.totalorder %s267, %s268
    %p280 = scmp.eq.s32.totalorder %s27, 1
    %p281 = por %p279, %p280
    %p283 = scmp.ne.s32.totalorder %s268, %s282
    %p284 = scmp.eq.s32.totalorder %s27, 0
    %p285 = por %p283, %p284
    %s287 = sadd.s32 %s286, 1
    %p290 = scmp.eq.s32.totalorder %s21, 1
    %p291 = scmp.ne.s32.totalorder %s286, %s288
    %p292 = scmp.eq.s32.totalorder %s21, 0
    %p293 = por %p291, %p292
    %p294 = scmp.ne.s32.totalorder %s286, %s288
    %p295 = scmp.eq.s32.totalorder %s26, 1
    %p296 = por %p294, %p295
    %p297 = scmp.ne.s32.totalorder %s288, %s289
    %p298 = scmp.eq.s32.totalorder %s26, 0
    %p299 = por %p297, %p298
    %p300 = scmp.ne.s32.totalorder %s288, %s289
    %p301 = scmp.eq.s32.totalorder %s27, 1
    %p302 = por %p300, %p301
    %p304 = scmp.ne.s32.totalorder %s289, %s303
    %p305 = scmp.eq.s32.totalorder %s27, 0
    %p306 = por %p304, %p305
    %s308 = sadd.s32 %s307, 1
    %p311 = scmp.eq.s32.totalorder %s21, 1
    %p312 = scmp.ne.s32.totalorder %s307, %s309
    %p313 = scmp.eq.s32.totalorder %s21, 0
    %p314 = por %p312, %p313
    %p315 = scmp.ne.s32.totalorder %s307, %s309
    %p316 = scmp.eq.s32.totalorder %s26, 1
    %p317 = por %p315, %p316
    %p318 = scmp.ne.s32.totalorder %s309, %s310
    %p319 = scmp.eq.s32.totalorder %s26, 0
    %p320 = por %p318, %p319
    %p321 = scmp.ne.s32.totalorder %s309, %s310
    %p322 = scmp.eq.s32.totalorder %s27, 1
    %p323 = por %p321, %p322
    %p325 = scmp.ne.s32.totalorder %s310, %s324
    %p326 = scmp.eq.s32.totalorder %s27, 0
    %p327 = por %p325, %p326
    %s329 = sadd.s32 %s328, 1
    %p332 = scmp.eq.s32.totalorder %s21, 1
    %p333 = scmp.ne.s32.totalorder %s328, %s330
    %p334 = scmp.eq.s32.totalorder %s21, 0
    %p335 = por %p333, %p334
    %p336 = scmp.ne.s32.totalorder %s328, %s330
    %p337 = scmp.eq.s32.totalorder %s26, 1
    %p338 = por %p336, %p337
    %p339 = scmp.ne.s32.totalorder %s330, %s331
    %p340 = scmp.eq.s32.totalorder %s26, 0
    %p341 = por %p339, %p340
    %p342 = scmp.ne.s32.totalorder %s330, %s331
    %p343 = scmp.eq.s32.totalorder %s27, 1
    %p344 = por %p342, %p343
    %p346 = scmp.ne.s32.totalorder %s331, %s345
    %p347 = scmp.eq.s32.totalorder %s27, 0
    %p348 = por %p346, %p347
    %s349 = ssub.s32 %s21, %s28
    %p350 = scmp.eq.s32.totalorder %s349, 0
    %s352 = sadd.s32 %s351, 1
    %s353 = scalar_select %p350, %s351, %s352
    %p356 = pneg %p350
    %p357 = scmp.eq.s32.totalorder %s21, 1
    %p358 = por %p356, %p357
    %p359 = scmp.ne.s32.totalorder %s351, %s354
    %p360 = scmp.eq.s32.totalorder %s21, 0
    %p361 = por %p359, %p360
    %p362 = scmp.ne.s32.totalorder %s351, %s354
    %p363 = scmp.eq.s32.totalorder %s26, 1
    %p364 = por %p362, %p363
    %p365 = scmp.ne.s32.totalorder %s354, %s355
    %p366 = scmp.eq.s32.totalorder %s26, 0
    %p367 = por %p365, %p366
    %p368 = scmp.ne.s32.totalorder %s354, %s355
    %p369 = scmp.eq.s32.totalorder %s27, 1
    %p370 = por %p368, %p369
    %p372 = scmp.ne.s32.totalorder %s355, %s371
    %p373 = scmp.eq.s32.totalorder %s27, 0
    %p374 = por %p372, %p373
    %p375 = scmp.le.s32.totalorder 1, %s21
    %p376 = scmp.lt.s32.totalorder %s21, 3
    %p377 = pnand %p375, %p376
    %p378 = pneg %p377
    // Predicated region
    $region9: #{forward.1} parent=5 // pred_check
      _
    $region10: #{forward.1} parent=5 // pred_check_branch
      %380 = sbr.rel (%p377) target = $region12
    $region11: #{forward.1} parent=5 // pred_region
      %s381 = ssub.s32 %s21, 1
      // Predicated region
      $region13: #{forward.1} parent=11 // pred_check
        %p382 = pneg %p68
      $region14: #{forward.1} parent=11 // pred_check_branch
        %384 = sbr.rel (%p382) target = $region16
      $region15: #{forward.1} parent=11 // pred_region
        _
      $region16: #{forward.1} parent=11 // pred_fallthru
        _
      // Predicated region
      $region17: #{forward.1} parent=11 // pred_check
        %p385 = pneg %p89
      $region18: #{forward.1} parent=11 // pred_check_branch
        %387 = sbr.rel (%p385) target = $region20
      $region19: #{forward.1} parent=11 // pred_region
        _
      $region20: #{forward.1} parent=11 // pred_fallthru
        _
      // Predicated region
      $region21: #{forward.1} parent=11 // pred_check
        %p388 = pneg %p110
      $region22: #{forward.1} parent=11 // pred_check_branch
        %390 = sbr.rel (%p388) target = $region24
      $region23: #{forward.1} parent=11 // pred_region
        _
      $region24: #{forward.1} parent=11 // pred_fallthru
        _
      // Predicated region
      $region25: #{forward.1} parent=11 // pred_check
        %p391 = pneg %p131
      $region26: #{forward.1} parent=11 // pred_check_branch
        %393 = sbr.rel (%p391) target = $region28
      $region27: #{forward.1} parent=11 // pred_region
        _
      $region28: #{forward.1} parent=11 // pred_fallthru
        _
      // Predicated region
      $region29: #{forward.1} parent=11 // pred_check
        %p394 = pneg %p152
      $region30: #{forward.1} parent=11 // pred_check_branch
        %396 = sbr.rel (%p394) target = $region32
      $region31: #{forward.1} parent=11 // pred_region
        _
      $region32: #{forward.1} parent=11 // pred_fallthru
        _
      // Predicated region
      $region33: #{forward.1} parent=11 // pred_check
        %p397 = pneg %p173
      $region34: #{forward.1} parent=11 // pred_check_branch
        %399 = sbr.rel (%p397) target = $region36
      $region35: #{forward.1} parent=11 // pred_region
        _
      $region36: #{forward.1} parent=11 // pred_fallthru
        _
      // Predicated region
      $region37: #{forward.1} parent=11 // pred_check
        %p400 = pneg %p194
      $region38: #{forward.1} parent=11 // pred_check_branch
        %402 = sbr.rel (%p400) target = $region40
      $region39: #{forward.1} parent=11 // pred_region
        _
      $region40: #{forward.1} parent=11 // pred_fallthru
        _
      // Predicated region
      $region41: #{forward.1} parent=11 // pred_check
        %p403 = pneg %p215
      $region42: #{forward.1} parent=11 // pred_check_branch
        %405 = sbr.rel (%p403) target = $region44
      $region43: #{forward.1} parent=11 // pred_region
        _
      $region44: #{forward.1} parent=11 // pred_fallthru
        _
      // Predicated region
      $region45: #{forward.1} parent=11 // pred_check
        %p406 = pneg %p236
      $region46: #{forward.1} parent=11 // pred_check_branch
        %408 = sbr.rel (%p406) target = $region48
      $region47: #{forward.1} parent=11 // pred_region
        _
      $region48: #{forward.1} parent=11 // pred_fallthru
        _
      // Predicated region
      $region49: #{forward.1} parent=11 // pred_check
        %p409 = pneg %p257
      $region50: #{forward.1} parent=11 // pred_check_branch
        %411 = sbr.rel (%p409) target = $region52
      $region51: #{forward.1} parent=11 // pred_region
        _
      $region52: #{forward.1} parent=11 // pred_fallthru
        _
      // Predicated region
      $region53: #{forward.1} parent=11 // pred_check
        %p412 = pneg %p278
      $region54: #{forward.1} parent=11 // pred_check_branch
        %414 = sbr.rel (%p412) target = $region56
      $region55: #{forward.1} parent=11 // pred_region
        _
      $region56: #{forward.1} parent=11 // pred_fallthru
        _
      // Predicated region
      $region57: #{forward.1} parent=11 // pred_check
        %p415 = pneg %p299
      $region58: #{forward.1} parent=11 // pred_check_branch
        %417 = sbr.rel (%p415) target = $region60
      $region59: #{forward.1} parent=11 // pred_region
        _
      $region60: #{forward.1} parent=11 // pred_fallthru
        _
      // Predicated region
      $region61: #{forward.1} parent=11 // pred_check
        %p418 = pneg %p320
      $region62: #{forward.1} parent=11 // pred_check_branch
        %420 = sbr.rel (%p418) target = $region64
      $region63: #{forward.1} parent=11 // pred_region
        _
      $region64: #{forward.1} parent=11 // pred_fallthru
        _
      // Predicated region
      $region65: #{forward.1} parent=11 // pred_check
        %p421 = pneg %p341
      $region66: #{forward.1} parent=11 // pred_check_branch
        %423 = sbr.rel (%p421) target = $region68
      $region67: #{forward.1} parent=11 // pred_region
        _
      $region68: #{forward.1} parent=11 // pred_fallthru
        _
    $region12: #{forward.1} parent=5 // pred_fallthru
      _
    %p424 = scmp.lt.s32.totalorder %s21, 2
    // Predicated region
    $region69: #{forward.1} parent=5 // pred_check
      %p425 = pneg %p424
    $region70: #{forward.1} parent=5 // pred_check_branch
      %427 = sbr.rel (%p425) target = $region72
    $region71: #{forward.1} parent=5 // pred_region
      // Predicated region
      $region73: #{forward.1} parent=71 // pred_check
        %p428 = pneg %p41
      $region74: #{forward.1} parent=71 // pred_check_branch
        %430 = sbr.rel (%p428) target = $region76
      $region75: #{forward.1} parent=71 // pred_region
        %s431 = smul.u32 8, %s21
        %p432 = scmp.lt.s32.totalorder %s431, 15
        %s433 = scalar_select %p432, %s431, 15
        %s434 = smul.addr %s433, 2
        %s435 = smul.addr %s434, 8
        %s436 = scalar_lea.vmem %s0, %s435
        %s437 = smul.u32 8, %s21
      $region76: #{forward.1} parent=71 // pred_fallthru
        _
    $region72: #{forward.1} parent=5 // pred_fallthru
      _
    %p438 = scmp.le.s32.totalorder 1, %s21
    %p439 = scmp.lt.s32.totalorder %s21, 3
    %p440 = pnand %p438, %p439
    %p441 = pneg %p440
    // Predicated region
    $region77: #{forward.1} parent=5 // pred_check
      _
    $region78: #{forward.1} parent=5 // pred_check_branch
      %443 = sbr.rel (%p440) target = $region80
    $region79: #{forward.1} parent=5 // pred_region
      %s444 = ssub.s32 %s21, 1
      %s445 = smul.u32 8, %s26
      %p446 = scmp.lt.s32.totalorder %s445, 15
      %s447 = scalar_select %p446, %s445, 15
      %s448 = smul.addr %s447, 2
      %s449 = smul.addr %s448, 8
      %s450 = scalar_lea.vmem %s0, %s449
      %p451 = pneg %p47
      %p452 = pneg %p44
      %p453 = pneg %p68
      %p454 = pneg %p65
      %p455 = pneg %p89
      %p456 = pneg %p86
      %p457 = pneg %p110
      %p458 = pneg %p107
      %p459 = pneg %p131
      %p460 = pneg %p128
      %p461 = pneg %p152
      %p462 = pneg %p149
      %p463 = pneg %p173
      %p464 = pneg %p170
      %p465 = pneg %p194
      %p466 = pneg %p191
      %p467 = pneg %p215
      %p468 = pneg %p212
      %p469 = pneg %p236
      %p470 = pneg %p233
      %p471 = pneg %p257
      %p472 = pneg %p254
      %p473 = pneg %p278
      %p474 = pneg %p275
      %p475 = pneg %p299
      %p476 = pneg %p296
      %p477 = pneg %p320
      %p478 = pneg %p317
      %p479 = pneg %p341
      %p480 = pneg %p338
      %p481 = pneg %p367
      %p482 = pneg %p364
      %s483 = smul.u32 16, %s26
      %p484 = scmp.lt.s32.totalorder %s483, 31
      %s485 = scalar_select %p484, %s483, 31
      %s486 = smul.addr %s485, 8
      %s487 = scalar_lea.vmem %s15, %s486
      %s488 = smul.u32 8, %s26
      %p489 = scmp.lt.s32.totalorder %s488, 15
      %s490 = scalar_select %p489, %s488, 15
      %s491 = smul.addr %s490, 2
      %s492 = smul.addr %s491, 8
      %s493 = scalar_lea.vmem %s0, %s492
      %s494 = smul.u32 8, %s26
      %s495 = smul.u32 16, %s26
      %p496 = scmp.lt.s32.totalorder %s495, 31
      %s497 = scalar_select %p496, %s495, 31
      %s498 = smul.addr %s497, 8
      %s499 = scalar_lea.vmem %s15, %s498
      %s500 = smul.u32 16, %s26
      %vm501 = vcmask 130048
      %502 = vst.msk [vmem:[#allocation2] sm:$0xff] %vm501, 0.0
      %503 = vst.msk [vmem:[#allocation2 + $0x20] sm:$0xff] %vm501, 0.0
      %504 = vst.msk [vmem:[#allocation2 + $0x40] sm:$0xff] %vm501, 0.0
      %505 = vst.msk [vmem:[#allocation2 + $0x60] sm:$0xff] %vm501, 0.0
      %506 = vst.msk [vmem:[#allocation2 + $0x80] sm:$0xff] %vm501, 0.0
      %507 = vst.msk [vmem:[#allocation2 + $0xa0] sm:$0xff] %vm501, 0.0
      %508 = vst.msk [vmem:[#allocation2 + $0xc0] sm:$0xff] %vm501, 0.0
      %509 = vst.msk [vmem:[#allocation2 + $0xe0] sm:$0xff] %vm501, 0.0
      %510 = vst.msk [vmem:[#allocation2 + $0x18] sm:$0xff] %vm501, 0.0
      %511 = vst.msk [vmem:[#allocation2 + $0x38] sm:$0xff] %vm501, 0.0
      %512 = vst.msk [vmem:[#allocation2 + $0x58] sm:$0xff] %vm501, 0.0
      %513 = vst.msk [vmem:[#allocation2 + $0x78] sm:$0xff] %vm501, 0.0
      %514 = vst.msk [vmem:[#allocation2 + $0x98] sm:$0xff] %vm501, 0.0
      %515 = vst.msk [vmem:[#allocation2 + $0xb8] sm:$0xff] %vm501, 0.0
      %516 = vst.msk [vmem:[#allocation2 + $0xd8] sm:$0xff] %vm501, 0.0
      %517 = vst.msk [vmem:[#allocation2 + $0xf8] sm:$0xff] %vm501, 0.0
      %v518 = vld [vmem:[%s493] sm:$0xff]
      %v519 = vld [vmem:[%s493 + $0x8] sm:$0xff]
      %v520 = vld [vmem:[%s493 + $0x10] sm:$0xff]
      %v521 = vld [vmem:[%s493 + $0x18] sm:$0xff]
      %v522 = vld [vmem:[%s493 + $0x20] sm:$0xff]
      %v523 = vld [vmem:[%s493 + $0x28] sm:$0xff]
      %v524 = vld [vmem:[%s493 + $0x30] sm:$0xff]
      %v525 = vld [vmem:[%s493 + $0x38] sm:$0xff]
      %v526 = vld [vmem:[%s493 + $0x40] sm:$0xff]
      %v527 = vld [vmem:[%s493 + $0x48] sm:$0xff]
      %v528 = vld [vmem:[%s493 + $0x50] sm:$0xff]
      %v529 = vld [vmem:[%s493 + $0x58] sm:$0xff]
      %v530 = vld [vmem:[%s493 + $0x60] sm:$0xff]
      %v531 = vld [vmem:[%s493 + $0x68] sm:$0xff]
      %v532 = vld [vmem:[%s493 + $0x70] sm:$0xff]
      %v533 = vld [vmem:[%s493 + $0x78] sm:$0xff]
      %v534 = vld [vmem:[%s5] sm:$0x3]
      %v535 = vunpack.c.l.bf16 %v534
      %v536 = vld [vmem:[%s6] sm:$0x1]
      %v538 = vlaneseq
      %v539 = vshrl.u32 %v538, 7
      %v540 = vsub.s32 0, %v539
      %v541 = vrot.slane %v536, %v540
      %vm543 = vcmask 31744
      %v545 = vsel %vm543, %v518, 0
      %v548 = vsel %vm543, %v519, 0
      %v551 = vsel %vm543, %v520, 0
      %v554 = vsel %vm543, %v521, 0
      %v557 = vsel %vm543, %v522, 0
      %v560 = vsel %vm543, %v523, 0
      %v563 = vsel %vm543, %v524, 0
      %v566 = vsel %vm543, %v525, 0
      %v569 = vsel %vm543, %v526, 0
      %v572 = vsel %vm543, %v527, 0
      %v575 = vsel %vm543, %v528, 0
      %v578 = vsel %vm543, %v529, 0
      %v581 = vsel %vm543, %v530, 0
      %v584 = vsel %vm543, %v531, 0
      %v587 = vsel %vm543, %v532, 0
      %v590 = vsel %vm543, %v533, 0
      %vm592 = vcmask 1043456
      %v594 = vsel %vm592, %v535, 0
      %596 = vmatprep.subr.mxu0 0.0
      %597 = vmatpush1.msra.mxu0 %v594
      %598 = vmatprep.subr.mxu0 0.0
      %599 = vmatpush1.msra.mxu0 0.0
      %600 = vmatprep.subr.mxu0 0.0
      %601 = vmatpush1.msra.mxu0 0.0
      %602 = vmatprep.subr.mxu0 0.0
      %603 = vmatpush1.msra.mxu0 0.0
      %604 = vmatprep.subr.mxu0 0.0
      %605 = vmatpush1.msra.mxu0 0.0
      %606 = vmatprep.subr.mxu0 0.0
      %607 = vmatpush1.msra.mxu0 0.0
      %608 = vmatprep.subr.mxu0 0.0
      %609 = vmatpush1.msra.mxu0 0.0
      %610 = vmatprep.subr.mxu0 0.0
      %611 = vmatpush1.msra.mxu0 0.0
      %612 = vmatprep.subr.mxu0 0.0
      %613 = vmatpush1.msra.mxu0 0.0
      %614 = vmatprep.subr.mxu0 0.0
      %615 = vmatpush1.msra.mxu0 0.0
      %616 = vmatprep.subr.mxu0 0.0
      %617 = vmatpush1.msra.mxu0 0.0
      %618 = vmatprep.subr.mxu0 0.0
      %619 = vmatpush1.msra.mxu0 0.0
      %620 = vmatprep.subr.mxu0 0.0
      %621 = vmatpush1.msra.mxu0 0.0
      %622 = vmatprep.subr.mxu0 0.0
      %623 = vmatpush1.msra.mxu0 0.0
      %624 = vmatprep.subr.mxu0 0.0
      %625 = vmatpush1.msra.mxu0 0.0
      %626 = vmatprep.subr.mxu0 0.0
      %627 = vmatpush1.msra.mxu0 0.0
      %628 = vmatprep.subr.mxu0 0.0
      %629 = vmatpush1.msra.mxu0 0.0
      %630 = vmatprep.subr.mxu0 0.0
      %631 = vmatpush1.msra.mxu0 0.0
      %632 = vmatprep.subr.mxu0 0.0
      %633 = vmatpush1.msra.mxu0 0.0
      %634 = vmatprep.subr.mxu0 0.0
      %635 = vmatpush1.msra.mxu0 0.0
      %636 = vmatprep.subr.mxu0 0.0
      %637 = vmatpush1.msra.mxu0 0.0
      %638 = vmatprep.subr.mxu0 0.0
      %639 = vmatpush1.msra.mxu0 0.0
      %640 = vmatprep.subr.mxu0 0.0
      %641 = vmatpush1.msra.mxu0 0.0
      %642 = vmatprep.subr.mxu0 0.0
      %643 = vmatpush1.msra.mxu0 0.0
      %644 = vmatprep.subr.mxu0 0.0
      %645 = vmatpush1.msra.mxu0 0.0
      %646 = vmatprep.subr.mxu0 0.0
      %647 = vmatpush1.msra.mxu0 0.0
      %648 = vmatprep.subr.mxu0 0.0
      %649 = vmatpush1.msra.mxu0 0.0
      %650 = vmatprep.subr.mxu0 0.0
      %651 = vmatpush1.msra.mxu0 0.0
      %652 = vmatprep.subr.mxu0 0.0
      %653 = vmatpush1.msra.mxu0 0.0
      %654 = vmatprep.subr.mxu0 0.0
      %655 = vmatpush1.msra.mxu0 0.0
      %656 = vmatprep.subr.mxu0 0.0
      %657 = vmatpush1.msra.mxu0 0.0
      %658 = vmatprep.subr.mxu0 0.0
      %659 = vmatpush1.msra.mxu0 0.0
      %660 = vmatprep.mubr.f32.mxu0 0.0
      %661 = vmatmul.mubr.f32.gmra.mrb[0].mxu0 %v545
      %v662 = vpop.f32.mrb[0].mxu0
      %v663 = vadd.f32 %v541, %v662
      %v664 = vpop.f32.mrb[0].mxu0
      %665 = vmatprep.mubr.f32.mxu0 0.0
      %666 = vmatmul.mubr.f32.gmra.mrb[0].mxu0 %v548
      %v667 = vpop.f32.mrb[0].mxu0
      %v668 = vadd.f32 %v541, %v667
      %v669 = vpop.f32.mrb[0].mxu0
      %670 = vmatprep.mubr.f32.mxu0 0.0
      %671 = vmatmul.mubr.f32.gmra.mrb[0].mxu0 %v551
      %v672 = vpop.f32.mrb[0].mxu0
      %v673 = vadd.f32 %v541, %v672
      %v674 = vpop.f32.mrb[0].mxu0
      %675 = vmatprep.mubr.f32.mxu0 0.0
      %676 = vmatmul.mubr.f32.gmra.mrb[0].mxu0 %v554
      %v677 = vpop.f32.mrb[0].mxu0
      %v678 = vadd.f32 %v541, %v677
      %v679 = vpop.f32.mrb[0].mxu0
      %680 = vmatprep.mubr.f32.mxu0 0.0
      %681 = vmatmul.mubr.f32.gmra.mrb[0].mxu0 %v557
      %v682 = vpop.f32.mrb[0].mxu0
      %v683 = vadd.f32 %v541, %v682
      %v684 = vpop.f32.mrb[0].mxu0
      %685 = vmatprep.mubr.f32.mxu0 0.0
      %686 = vmatmul.mubr.f32.gmra.mrb[0].mxu0 %v560
      %v687 = vpop.f32.mrb[0].mxu0
      %v688 = vadd.f32 %v541, %v687
      %v689 = vpop.f32.mrb[0].mxu0
      %690 = vmatprep.mubr.f32.mxu0 0.0
      %691 = vmatmul.mubr.f32.gmra.mrb[0].mxu0 %v563
      %v692 = vpop.f32.mrb[0].mxu0
      %v693 = vadd.f32 %v541, %v692
      %v694 = vpop.f32.mrb[0].mxu0
      %695 = vmatprep.mubr.f32.mxu0 0.0
      %696 = vmatmul.mubr.f32.gmra.mrb[0].mxu0 %v566
      %v697 = vpop.f32.mrb[0].mxu0
      %v698 = vadd.f32 %v541, %v697
      %v699 = vpop.f32.mrb[0].mxu0
      %700 = vmatprep.mubr.f32.mxu0 0.0
      %701 = vmatmul.mubr.f32.gmra.mrb[0].mxu0 %v569
      %v702 = vpop.f32.mrb[0].mxu0
      %v703 = vadd.f32 %v541, %v702
      %v704 = vpop.f32.mrb[0].mxu0
      %705 = vmatprep.mubr.f32.mxu0 0.0
      %706 = vmatmul.mubr.f32.gmra.mrb[0].mxu0 %v572
      %v707 = vpop.f32.mrb[0].mxu0
      %v708 = vadd.f32 %v541, %v707
      %v709 = vpop.f32.mrb[0].mxu0
      %710 = vmatprep.mubr.f32.mxu0 0.0
      %711 = vmatmul.mubr.f32.gmra.mrb[0].mxu0 %v575
      %v712 = vpop.f32.mrb[0].mxu0
      %v713 = vadd.f32 %v541, %v712
      %v714 = vpop.f32.mrb[0].mxu0
      %715 = vmatprep.mubr.f32.mxu0 0.0
      %716 = vmatmul.mubr.f32.gmra.mrb[0].mxu0 %v578
      %v717 = vpop.f32.mrb[0].mxu0
      %v718 = vadd.f32 %v541, %v717
      %v719 = vpop.f32.mrb[0].mxu0
      %720 = vmatprep.mubr.f32.mxu0 0.0
      %721 = vmatmul.mubr.f32.gmra.mrb[0].mxu0 %v581
      %v722 = vpop.f32.mrb[0].mxu0
      %v723 = vadd.f32 %v541, %v722
      %v724 = vpop.f32.mrb[0].mxu0
      %725 = vmatprep.mubr.f32.mxu0 0.0
      %726 = vmatmul.mubr.f32.gmra.mrb[0].mxu0 %v584
      %v727 = vpop.f32.mrb[0].mxu0
      %v728 = vadd.f32 %v541, %v727
      %v729 = vpop.f32.mrb[0].mxu0
      %730 = vmatprep.mubr.f32.mxu0 0.0
      %731 = vmatmul.mubr.f32.gmra.mrb[0].mxu0 %v587
      %v732 = vpop.f32.mrb[0].mxu0
      %v733 = vadd.f32 %v541, %v732
      %v734 = vpop.f32.mrb[0].mxu0
      %735 = vmatprep.mubr.f32.mxu0 0.0
      %736 = vmatmul.mubr.f32.gmra.mrb[0].mxu0 %v590
      %v737 = vpop.f32.mrb[0].mxu0
      %v738 = vadd.f32 %v541, %v737
      %v739 = vpop.f32.mrb[0].mxu0
      %740 = vdwg.mxu0
      %741 = vst.msk [vmem:[#allocation2 + $0x8] sm:$0xff] %vm543, %v518
      %742 = vst.msk [vmem:[#allocation2 + $0x10] sm:$0xff] %vm543, %v519
      %743 = vst.msk [vmem:[#allocation2 + $0x28] sm:$0xff] %vm543, %v520
      %744 = vst.msk [vmem:[#allocation2 + $0x30] sm:$0xff] %vm543, %v521
      %745 = vst.msk [vmem:[#allocation2 + $0x48] sm:$0xff] %vm543, %v522
      %746 = vst.msk [vmem:[#allocation2 + $0x50] sm:$0xff] %vm543, %v523
      %747 = vst.msk [vmem:[#allocation2 + $0x68] sm:$0xff] %vm543, %v524
      %748 = vst.msk [vmem:[#allocation2 + $0x70] sm:$0xff] %vm543, %v525
      %749 = vst.msk [vmem:[#allocation2 + $0x88] sm:$0xff] %vm543, %v526
      %750 = vst.msk [vmem:[#allocation2 + $0x90] sm:$0xff] %vm543, %v527
      %751 = vst.msk [vmem:[#allocation2 + $0xa8] sm:$0xff] %vm543, %v528
      %752 = vst.msk [vmem:[#allocation2 + $0xb0] sm:$0xff] %vm543, %v529
      %753 = vst.msk [vmem:[#allocation2 + $0xc8] sm:$0xff] %vm543, %v530
      %754 = vst.msk [vmem:[#allocation2 + $0xd0] sm:$0xff] %vm543, %v531
      %755 = vst.msk [vmem:[#allocation2 + $0xe8] sm:$0xff] %vm543, %v532
      %756 = vst.msk [vmem:[#allocation2 + $0xf0] sm:$0xff] %vm543, %v533
      %v757 = vld [vmem:[#allocation2 + $0x6] sm:$0xff]
      %v758 = vld [vmem:[#allocation2 + $0xe] sm:$0xff]
      %v759 = vld [vmem:[#allocation2 + $0x26] sm:$0xff]
      %v760 = vld [vmem:[#allocation2 + $0x2e] sm:$0xff]
      %v761 = vld [vmem:[#allocation2 + $0x46] sm:$0xff]
      %v762 = vld [vmem:[#allocation2 + $0x4e] sm:$0xff]
      %v763 = vld [vmem:[#allocation2 + $0x66] sm:$0xff]
      %v764 = vld [vmem:[#allocation2 + $0x6e] sm:$0xff]
      %v765 = vld [vmem:[#allocation2 + $0x86] sm:$0xff]
      %v766 = vld [vmem:[#allocation2 + $0x8e] sm:$0xff]
      %v767 = vld [vmem:[#allocation2 + $0xa6] sm:$0xff]
      %v768 = vld [vmem:[#allocation2 + $0xae] sm:$0xff]
      %v769 = vld [vmem:[#allocation2 + $0xc6] sm:$0xff]
      %v770 = vld [vmem:[#allocation2 + $0xce] sm:$0xff]
      %v771 = vld [vmem:[#allocation2 + $0xe6] sm:$0xff]
      %v772 = vld [vmem:[#allocation2 + $0xee] sm:$0xff]
      %v773 = vld [vmem:[%s1] sm:$0x3]
      %v774 = vunpack.c.l.bf16 %v773
      %v775 = vld [vmem:[#allocation2 + $0x7] sm:$0xff]
      %v776 = vld [vmem:[#allocation2 + $0xf] sm:$0xff]
      %v777 = vld [vmem:[#allocation2 + $0x27] sm:$0xff]
      %v778 = vld [vmem:[#allocation2 + $0x2f] sm:$0xff]
      %v779 = vld [vmem:[#allocation2 + $0x47] sm:$0xff]
      %v780 = vld [vmem:[#allocation2 + $0x4f] sm:$0xff]
      %v781 = vld [vmem:[#allocation2 + $0x67] sm:$0xff]
      %v782 = vld [vmem:[#allocation2 + $0x6f] sm:$0xff]
      %v783 = vld [vmem:[#allocation2 + $0x87] sm:$0xff]
      %v784 = vld [vmem:[#allocation2 + $0x8f] sm:$0xff]
      %v785 = vld [vmem:[#allocation2 + $0xa7] sm:$0xff]
      %v786 = vld [vmem:[#allocation2 + $0xaf] sm:$0xff]
      %v787 = vld [vmem:[#allocation2 + $0xc7] sm:$0xff]
      %v788 = vld [vmem:[#allocation2 + $0xcf] sm:$0xff]
      %v789 = vld [vmem:[#allocation2 + $0xe7] sm:$0xff]
      %v790 = vld [vmem:[#allocation2 + $0xef] sm:$0xff]
      %s791 = scalar_lea.vmem %s1, 2
      %v792 = vld [vmem:[%s791] sm:$0x3]
      %v793 = vunpack.c.l.bf16 %v792
      %v795 = vsel %vm543, %v775, 0
      %v798 = vsel %vm543, %v776, 0
      %v801 = vsel %vm543, %v777, 0
      %v804 = vsel %vm543, %v778, 0
      %v807 = vsel %vm543, %v779, 0
      %v810 = vsel %vm543, %v780, 0
      %v813 = vsel %vm543, %v781, 0
      %v816 = vsel %vm543, %v782, 0
      %v819 = vsel %vm543, %v783, 0
      %v822 = vsel %vm543, %v784, 0
      %v825 = vsel %vm543, %v785, 0
      %v828 = vsel %vm543, %v786, 0
      %v831 = vsel %vm543, %v787, 0
      %v834 = vsel %vm543, %v788, 0
      %v837 = vsel %vm543, %v789, 0
      %v840 = vsel %vm543, %v790, 0
      %v843 = vsel %vm592, %v793, 0
      %845 = vmatprep.subr.mxu0 0.0
      %846 = vmatpush1.msra.mxu0 %v843
      %847 = vmatprep.subr.mxu0 0.0
      %848 = vmatpush1.msra.mxu0 0.0
      %849 = vmatprep.subr.mxu0 0.0
      %850 = vmatpush1.msra.mxu0 0.0
      %851 = vmatprep.subr.mxu0 0.0
      %852 = vmatpush1.msra.mxu0 0.0
      %853 = vmatprep.subr.mxu0 0.0
      %854 = vmatpush1.msra.mxu0 0.0
      %855 = vmatprep.subr.mxu0 0.0
      %856 = vmatpush1.msra.mxu0 0.0
      %857 = vmatprep.subr.mxu0 0.0
      %858 = vmatpush1.msra.mxu0 0.0
      %859 = vmatprep.subr.mxu0 0.0
      %860 = vmatpush1.msra.mxu0 0.0
      %861 = vmatprep.subr.mxu0 0.0
      %862 = vmatpush1.msra.mxu0 0.0
      %863 = vmatprep.subr.mxu0 0.0
      %864 = vmatpush1.msra.mxu0 0.0
      %865 = vmatprep.subr.mxu0 0.0
      %866 = vmatpush1.msra.mxu0 0.0
      %867 = vmatprep.subr.mxu0 0.0
      %868 = vmatpush1.msra.mxu0 0.0
      %869 = vmatprep.subr.mxu0 0.0
      %870 = vmatpush1.msra.mxu0 0.0
      %871 = vmatprep.subr.mxu0 0.0
      %872 = vmatpush1.msra.mxu0 0.0
      %873 = vmatprep.subr.mxu0 0.0
      %874 = vmatpush1.msra.mxu0 0.0
      %875 = vmatprep.subr.mxu0 0.0
      %876 = vmatpush1.msra.mxu0 0.0
      %877 = vmatprep.subr.mxu0 0.0
      %878 = vmatpush1.msra.mxu0 0.0
      %879 = vmatprep.subr.mxu0 0.0
      %880 = vmatpush1.msra.mxu0 0.0
      %881 = vmatprep.subr.mxu0 0.0
      %882 = vmatpush1.msra.mxu0 0.0
      %883 = vmatprep.subr.mxu0 0.0
      %884 = vmatpush1.msra.mxu0 0.0
      %885 = vmatprep.subr.mxu0 0.0
      %886 = vmatpush1.msra.mxu0 0.0
      %887 = vmatprep.subr.mxu0 0.0
      %888 = vmatpush1.msra.mxu0 0.0
      %889 = vmatprep.subr.mxu0 0.0
      %890 = vmatpush1.msra.mxu0 0.0
      %891 = vmatprep.subr.mxu0 0.0
      %892 = vmatpush1.msra.mxu0 0.0
      %893 = vmatprep.subr.mxu0 0.0
      %894 = vmatpush1.msra.mxu0 0.0
      %895 = vmatprep.subr.mxu0 0.0
      %896 = vmatpush1.msra.mxu0 0.0
      %897 = vmatprep.subr.mxu0 0.0
      %898 = vmatpush1.msra.mxu0 0.0
      %899 = vmatprep.subr.mxu0 0.0
      %900 = vmatpush1.msra.mxu0 0.0
      %901 = vmatprep.subr.mxu0 0.0
      %902 = vmatpush1.msra.mxu0 0.0
      %903 = vmatprep.subr.mxu0 0.0
      %904 = vmatpush1.msra.mxu0 0.0
      %905 = vmatprep.subr.mxu0 0.0
      %906 = vmatpush1.msra.mxu0 0.0
      %907 = vmatprep.subr.mxu0 0.0
      %908 = vmatpush1.msra.mxu0 0.0
      %909 = vmatprep.mubr.f32.mxu0 0.0
      %910 = vmatmul.mubr.f32.gmra.mrb[0].mxu0 %v795
      %v911 = vpop.f32.mrb[0].mxu0
      %v912 = vadd.f32 0.0, %v911
      %v913 = vpop.f32.mrb[0].mxu0
      %914 = vmatprep.mubr.f32.mxu0 0.0
      %915 = vmatmul.mubr.f32.gmra.mrb[0].mxu0 %v798
      %v916 = vpop.f32.mrb[0].mxu0
      %v917 = vadd.f32 0.0, %v916
      %v918 = vpop.f32.mrb[0].mxu0
      %919 = vmatprep.mubr.f32.mxu0 0.0
      %920 = vmatmul.mubr.f32.gmra.mrb[0].mxu0 %v801
      %v921 = vpop.f32.mrb[0].mxu0
      %v922 = vadd.f32 0.0, %v921
      %v923 = vpop.f32.mrb[0].mxu0
      %924 = vmatprep.mubr.f32.mxu0 0.0
      %925 = vmatmul.mubr.f32.gmra.mrb[0].mxu0 %v804
      %v926 = vpop.f32.mrb[0].mxu0
      %v927 = vadd.f32 0.0, %v926
      %v928 = vpop.f32.mrb[0].mxu0
      %929 = vmatprep.mubr.f32.mxu0 0.0
      %930 = vmatmul.mubr.f32.gmra.mrb[0].mxu0 %v807
      %v931 = vpop.f32.mrb[0].mxu0
      %v932 = vadd.f32 0.0, %v931
      %v933 = vpop.f32.mrb[0].mxu0
      %934 = vmatprep.mubr.f32.mxu0 0.0
      %935 = vmatmul.mubr.f32.gmra.mrb[0].mxu0 %v810
      %v936 = vpop.f32.mrb[0].mxu0
      %v937 = vadd.f32 0.0, %v936
      %v938 = vpop.f32.mrb[0].mxu0
      %939 = vmatprep.mubr.f32.mxu0 0.0
      %940 = vmatmul.mubr.f32.gmra.mrb[0].mxu0 %v813
      %v941 = vpop.f32.mrb[0].mxu0
      %v942 = vadd.f32 0.0, %v941
      %v943 = vpop.f32.mrb[0].mxu0
      %944 = vmatprep.mubr.f32.mxu0 0.0
      %945 = vmatmul.mubr.f32.gmra.mrb[0].mxu0 %v816
      %v946 = vpop.f32.mrb[0].mxu0
      %v947 = vadd.f32 0.0, %v946
      %v948 = vpop.f32.mrb[0].mxu0
      %949 = vmatprep.mubr.f32.mxu0 0.0
      %950 = vmatmul.mubr.f32.gmra.mrb[0].mxu0 %v819
      %v951 = vpop.f32.mrb[0].mxu0
      %v952 = vadd.f32 0.0, %v951
      %v953 = vpop.f32.mrb[0].mxu0
      %954 = vmatprep.mubr.f32.mxu0 0.0
      %955 = vmatmul.mubr.f32.gmra.mrb[0].mxu0 %v822
      %v956 = vpop.f32.mrb[0].mxu0
      %v957 = vadd.f32 0.0, %v956
      %v958 = vpop.f32.mrb[0].mxu0
      %959 = vmatprep.mubr.f32.mxu0 0.0
      %960 = vmatmul.mubr.f32.gmra.mrb[0].mxu0 %v825
      %v961 = vpop.f32.mrb[0].mxu0
      %v962 = vadd.f32 0.0, %v961
      %v963 = vpop.f32.mrb[0].mxu0
      %964 = vmatprep.mubr.f32.mxu0 0.0
      %965 = vmatmul.mubr.f32.gmra.mrb[0].mxu0 %v828
      %v966 = vpop.f32.mrb[0].mxu0
      %v967 = vadd.f32 0.0, %v966
      %v968 = vpop.f32.mrb[0].mxu0
      %969 = vmatprep.mubr.f32.mxu0 0.0
      %970 = vmatmul.mubr.f32.gmra.mrb[0].mxu0 %v831
      %v971 = vpop.f32.mrb[0].mxu0
      %v972 = vadd.f32 0.0, %v971
      %v973 = vpop.f32.mrb[0].mxu0
      %974 = vmatprep.mubr.f32.mxu0 0.0
      %975 = vmatmul.mubr.f32.gmra.mrb[0].mxu0 %v834
      %v976 = vpop.f32.mrb[0].mxu0
      %v977 = vadd.f32 0.0, %v976
      %v978 = vpop.f32.mrb[0].mxu0
      %979 = vmatprep.mubr.f32.mxu0 0.0
      %980 = vmatmul.mubr.f32.gmra.mrb[0].mxu0 %v837
      %v981 = vpop.f32.mrb[0].mxu0
      %v982 = vadd.f32 0.0, %v981
      %v983 = vpop.f32.mrb[0].mxu0
      %984 = vmatprep.mubr.f32.mxu0 0.0
      %985 = vmatmul.mubr.f32.gmra.mrb[0].mxu0 %v840
      %v986 = vpop.f32.mrb[0].mxu0
      %v987 = vadd.f32 0.0, %v986
      %v988 = vpop.f32.mrb[0].mxu0
      %989 = vdwg.mxu0
      %v991 = vsel %vm543, %v757, 0
      %v994 = vsel %vm543, %v758, 0
      %v997 = vsel %vm543, %v759, 0
      %v1000 = vsel %vm543, %v760, 0
      %v1003 = vsel %vm543, %v761, 0
      %v1006 = vsel %vm543, %v762, 0
      %v1009 = vsel %vm543, %v763, 0
      %v1012 = vsel %vm543, %v764, 0
      %v1015 = vsel %vm543, %v765, 0
      %v1018 = vsel %vm543, %v766, 0
      %v1021 = vsel %vm543, %v767, 0
      %v1024 = vsel %vm543, %v768, 0
      %v1027 = vsel %vm543, %v769, 0
      %v1030 = vsel %vm543, %v770, 0
      %v1033 = vsel %vm543, %v771, 0
      %v1036 = vsel %vm543, %v772, 0
      %v1039 = vsel %vm592, %v774, 0
      %1041 = vmatprep.subr.mxu0 0.0
      %1042 = vmatpush1.msra.mxu0 %v1039
      %1043 = vmatprep.subr.mxu0 0.0
      %1044 = vmatpush1.msra.mxu0 0.0
      %1045 = vmatprep.subr.mxu0 0.0
      %1046 = vmatpush1.msra.mxu0 0.0
      %1047 = vmatprep.subr.mxu0 0.0
      %1048 = vmatpush1.msra.mxu0 0.0
      %1049 = vmatprep.subr.mxu0 0.0
      %1050 = vmatpush1.msra.mxu0 0.0
      %1051 = vmatprep.subr.mxu0 0.0
      %1052 = vmatpush1.msra.mxu0 0.0
      %1053 = vmatprep.subr.mxu0 0.0
      %1054 = vmatpush1.msra.mxu0 0.0
      %1055 = vmatprep.subr.mxu0 0.0
      %1056 = vmatpush1.msra.mxu0 0.0
      %1057 = vmatprep.subr.mxu0 0.0
      %1058 = vmatpush1.msra.mxu0 0.0
      %1059 = vmatprep.subr.mxu0 0.0
      %1060 = vmatpush1.msra.mxu0 0.0
      %1061 = vmatprep.subr.mxu0 0.0
      %1062 = vmatpush1.msra.mxu0 0.0
      %1063 = vmatprep.subr.mxu0 0.0
      %1064 = vmatpush1.msra.mxu0 0.0
      %1065 = vmatprep.subr.mxu0 0.0
      %1066 = vmatpush1.msra.mxu0 0.0
      %1067 = vmatprep.subr.mxu0 0.0
      %1068 = vmatpush1.msra.mxu0 0.0
      %1069 = vmatprep.subr.mxu0 0.0
      %1070 = vmatpush1.msra.mxu0 0.0
      %1071 = vmatprep.subr.mxu0 0.0
      %1072 = vmatpush1.msra.mxu0 0.0
      %1073 = vmatprep.subr.mxu0 0.0
      %1074 = vmatpush1.msra.mxu0 0.0
      %1075 = vmatprep.subr.mxu0 0.0
      %1076 = vmatpush1.msra.mxu0 0.0
      %1077 = vmatprep.subr.mxu0 0.0
      %1078 = vmatpush1.msra.mxu0 0.0
      %1079 = vmatprep.subr.mxu0 0.0
      %1080 = vmatpush1.msra.mxu0 0.0
      %1081 = vmatprep.subr.mxu0 0.0
      %1082 = vmatpush1.msra.mxu0 0.0
      %1083 = vmatprep.subr.mxu0 0.0
      %1084 = vmatpush1.msra.mxu0 0.0
      %1085 = vmatprep.subr.mxu0 0.0
      %1086 = vmatpush1.msra.mxu0 0.0
      %1087 = vmatprep.subr.mxu0 0.0
      %1088 = vmatpush1.msra.mxu0 0.0
      %1089 = vmatprep.subr.mxu0 0.0
      %1090 = vmatpush1.msra.mxu0 0.0
      %1091 = vmatprep.subr.mxu0 0.0
      %1092 = vmatpush1.msra.mxu0 0.0
      %1093 = vmatprep.subr.mxu0 0.0
      %1094 = vmatpush1.msra.mxu0 0.0
      %1095 = vmatprep.subr.mxu0 0.0
      %1096 = vmatpush1.msra.mxu0 0.0
      %1097 = vmatprep.subr.mxu0 0.0
      %1098 = vmatpush1.msra.mxu0 0.0
      %1099 = vmatprep.subr.mxu0 0.0
      %1100 = vmatpush1.msra.mxu0 0.0
      %1101 = vmatprep.subr.mxu0 0.0
      %1102 = vmatpush1.msra.mxu0 0.0
      %1103 = vmatprep.subr.mxu0 0.0
      %1104 = vmatpush1.msra.mxu0 0.0
      %1105 = vmatprep.mubr.f32.mxu0 0.0
      %1106 = vmatmul.mubr.f32.gmra.mrb[0].mxu0 %v991
      %v1107 = vpop.f32.mrb[0].mxu0
      %v1108 = vadd.f32 %v912, %v1107
      %v1109 = vpop.f32.mrb[0].mxu0
      %1110 = vmatprep.mubr.f32.mxu0 0.0
      %1111 = vmatmul.mubr.f32.gmra.mrb[0].mxu0 %v994
      %v1112 = vpop.f32.mrb[0].mxu0
      %v1113 = vadd.f32 %v917, %v1112
      %v1114 = vpop.f32.mrb[0].mxu0
      %1115 = vmatprep.mubr.f32.mxu0 0.0
      %1116 = vmatmul.mubr.f32.gmra.mrb[0].mxu0 %v997
      %v1117 = vpop.f32.mrb[0].mxu0
      %v1118 = vadd.f32 %v922, %v1117
      %v1119 = vpop.f32.mrb[0].mxu0
      %1120 = vmatprep.mubr.f32.mxu0 0.0
      %1121 = vmatmul.mubr.f32.gmra.mrb[0].mxu0 %v1000
      %v1122 = vpop.f32.mrb[0].mxu0
      %v1123 = vadd.f32 %v927, %v1122
      %v1124 = vpop.f32.mrb[0].mxu0
      %1125 = vmatprep.mubr.f32.mxu0 0.0
      %1126 = vmatmul.mubr.f32.gmra.mrb[0].mxu0 %v1003
      %v1127 = vpop.f32.mrb[0].mxu0
      %v1128 = vadd.f32 %v932, %v1127
      %v1129 = vpop.f32.mrb[0].mxu0
      %1130 = vmatprep.mubr.f32.mxu0 0.0
      %1131 = vmatmul.mubr.f32.gmra.mrb[0].mxu0 %v1006
      %v1132 = vpop.f32.mrb[0].mxu0
      %v1133 = vadd.f32 %v937, %v1132
      %v1134 = vpop.f32.mrb[0].mxu0
      %1135 = vmatprep.mubr.f32.mxu0 0.0
      %1136 = vmatmul.mubr.f32.gmra.mrb[0].mxu0 %v1009
      %v1137 = vpop.f32.mrb[0].mxu0
      %v1138 = vadd.f32 %v942, %v1137
      %v1139 = vpop.f32.mrb[0].mxu0
      %1140 = vmatprep.mubr.f32.mxu0 0.0
      %1141 = vmatmul.mubr.f32.gmra.mrb[0].mxu0 %v1012
      %v1142 = vpop.f32.mrb[0].mxu0
      %v1143 = vadd.f32 %v947, %v1142
      %v1144 = vpop.f32.mrb[0].mxu0
      %1145 = vmatprep.mubr.f32.mxu0 0.0
      %1146 = vmatmul.mubr.f32.gmra.mrb[0].mxu0 %v1015
      %v1147 = vpop.f32.mrb[0].mxu0
      %v1148 = vadd.f32 %v952, %v1147
      %v1149 = vpop.f32.mrb[0].mxu0
      %1150 = vmatprep.mubr.f32.mxu0 0.0
      %1151 = vmatmul.mubr.f32.gmra.mrb[0].mxu0 %v1018
      %v1152 = vpop.f32.mrb[0].mxu0
      %v1153 = vadd.f32 %v957, %v1152
      %v1154 = vpop.f32.mrb[0].mxu0
      %1155 = vmatprep.mubr.f32.mxu0 0.0
      %1156 = vmatmul.mubr.f32.gmra.mrb[0].mxu0 %v1021
      %v1157 = vpop.f32.mrb[0].mxu0
      %v1158 = vadd.f32 %v962, %v1157
      %v1159 = vpop.f32.mrb[0].mxu0
      %1160 = vmatprep.mubr.f32.mxu0 0.0
      %1161 = vmatmul.mubr.f32.gmra.mrb[0].mxu0 %v1024
      %v1162 = vpop.f32.mrb[0].mxu0
      %v1163 = vadd.f32 %v967, %v1162
      %v1164 = vpop.f32.mrb[0].mxu0
      %1165 = vmatprep.mubr.f32.mxu0 0.0
      %1166 = vmatmul.mubr.f32.gmra.mrb[0].mxu0 %v1027
      %v1167 = vpop.f32.mrb[0].mxu0
      %v1168 = vadd.f32 %v972, %v1167
      %v1169 = vpop.f32.mrb[0].mxu0
      %1170 = vmatprep.mubr.f32.mxu0 0.0
      %1171 = vmatmul.mubr.f32.gmra.mrb[0].mxu0 %v1030
      %v1172 = vpop.f32.mrb[0].mxu0
      %v1173 = vadd.f32 %v977, %v1172
      %v1174 = vpop.f32.mrb[0].mxu0
      %1175 = vmatprep.mubr.f32.mxu0 0.0
      %1176 = vmatmul.mubr.f32.gmra.mrb[0].mxu0 %v1033
      %v1177 = vpop.f32.mrb[0].mxu0
      %v1178 = vadd.f32 %v982, %v1177
      %v1179 = vpop.f32.mrb[0].mxu0
      %1180 = vmatprep.mubr.f32.mxu0 0.0
      %1181 = vmatmul.mubr.f32.gmra.mrb[0].mxu0 %v1036
      %v1182 = vpop.f32.mrb[0].mxu0
      %v1183 = vadd.f32 %v987, %v1182
      %v1184 = vpop.f32.mrb[0].mxu0
      %1185 = vdwg.mxu0
      %v1186 = vld [vmem:[#allocation2 + $0x8] sm:$0xff]
      %v1187 = vld [vmem:[#allocation2 + $0x10] sm:$0xff]
      %v1188 = vld [vmem:[#allocation2 + $0x28] sm:$0xff]
      %v1189 = vld [vmem:[#allocation2 + $0x30] sm:$0xff]
      %v1190 = vld [vmem:[#allocation2 + $0x48] sm:$0xff]
      %v1191 = vld [vmem:[#allocation2 + $0x50] sm:$0xff]
      %v1192 = vld [vmem:[#allocation2 + $0x68] sm:$0xff]
      %v1193 = vld [vmem:[#allocation2 + $0x70] sm:$0xff]
      %v1194 = vld [vmem:[#allocation2 + $0x88] sm:$0xff]
      %v1195 = vld [vmem:[#allocation2 + $0x90] sm:$0xff]
      %v1196 = vld [vmem:[#allocation2 + $0xa8] sm:$0xff]
      %v1197 = vld [vmem:[#allocation2 + $0xb0] sm:$0xff]
      %v1198 = vld [vmem:[#allocation2 + $0xc8] sm:$0xff]
      %v1199 = vld [vmem:[#allocation2 + $0xd0] sm:$0xff]
      %v1200 = vld [vmem:[#allocation2 + $0xe8] sm:$0xff]
      %v1201 = vld [vmem:[#allocation2 + $0xf0] sm:$0xff]
      %s1202 = scalar_lea.vmem %s1, 4
      %v1203 = vld [vmem:[%s1202] sm:$0x3]
      %v1204 = vunpack.c.l.bf16 %v1203
      %v1206 = vsel %vm543, %v1186, 0
      %v1209 = vsel %vm543, %v1187, 0
      %v1212 = vsel %vm543, %v1188, 0
      %v1215 = vsel %vm543, %v1189, 0
      %v1218 = vsel %vm543, %v1190, 0
      %v1221 = vsel %vm543, %v1191, 0
      %v1224 = vsel %vm543, %v1192, 0
      %v1227 = vsel %vm543, %v1193, 0
      %v1230 = vsel %vm543, %v1194, 0
      %v1233 = vsel %vm543, %v1195, 0
      %v1236 = vsel %vm543, %v1196, 0
      %v1239 = vsel %vm543, %v1197, 0
      %v1242 = vsel %vm543, %v1198, 0
      %v1245 = vsel %vm543, %v1199, 0
      %v1248 = vsel %vm543, %v1200, 0
      %v1251 = vsel %vm543, %v1201, 0
      %v1254 = vsel %vm592, %v1204, 0
      %1256 = vmatprep.subr.mxu0 0.0
      %1257 = vmatpush1.msra.mxu0 %v1254
      %1258 = vmatprep.subr.mxu0 0.0
      %1259 = vmatpush1.msra.mxu0 0.0
      %1260 = vmatprep.subr.mxu0 0.0
      %1261 = vmatpush1.msra.mxu0 0.0
      %1262 = vmatprep.subr.mxu0 0.0
      %1263 = vmatpush1.msra.mxu0 0.0
      %1264 = vmatprep.subr.mxu0 0.0
      %1265 = vmatpush1.msra.mxu0 0.0
      %1266 = vmatprep.subr.mxu0 0.0
      %1267 = vmatpush1.msra.mxu0 0.0
      %1268 = vmatprep.subr.mxu0 0.0
      %1269 = vmatpush1.msra.mxu0 0.0
      %1270 = vmatprep.subr.mxu0 0.0
      %1271 = vmatpush1.msra.mxu0 0.0
      %1272 = vmatprep.subr.mxu0 0.0
      %1273 = vmatpush1.msra.mxu0 0.0
      %1274 = vmatprep.subr.mxu0 0.0
      %1275 = vmatpush1.msra.mxu0 0.0
      %1276 = vmatprep.subr.mxu0 0.0
      %1277 = vmatpush1.msra.mxu0 0.0
      %1278 = vmatprep.subr.mxu0 0.0
      %1279 = vmatpush1.msra.mxu0 0.0
      %1280 = vmatprep.subr.mxu0 0.0
      %1281 = vmatpush1.msra.mxu0 0.0
      %1282 = vmatprep.subr.mxu0 0.0
      %1283 = vmatpush1.msra.mxu0 0.0
      %1284 = vmatprep.subr.mxu0 0.0
      %1285 = vmatpush1.msra.mxu0 0.0
      %1286 = vmatprep.subr.mxu0 0.0
      %1287 = vmatpush1.msra.mxu0 0.0
      %1288 = vmatprep.subr.mxu0 0.0
      %1289 = vmatpush1.msra.mxu0 0.0
      %1290 = vmatprep.subr.mxu0 0.0
      %1291 = vmatpush1.msra.mxu0 0.0
      %1292 = vmatprep.subr.mxu0 0.0
      %1293 = vmatpush1.msra.mxu0 0.0
      %1294 = vmatprep.subr.mxu0 0.0
      %1295 = vmatpush1.msra.mxu0 0.0
      %1296 = vmatprep.subr.mxu0 0.0
      %1297 = vmatpush1.msra.mxu0 0.0
      %1298 = vmatprep.subr.mxu0 0.0
      %1299 = vmatpush1.msra.mxu0 0.0
      %1300 = vmatprep.subr.mxu0 0.0
      %1301 = vmatpush1.msra.mxu0 0.0
      %1302 = vmatprep.subr.mxu0 0.0
      %1303 = vmatpush1.msra.mxu0 0.0
      %1304 = vmatprep.subr.mxu0 0.0
      %1305 = vmatpush1.msra.mxu0 0.0
      %1306 = vmatprep.subr.mxu0 0.0
      %1307 = vmatpush1.msra.mxu0 0.0
      %1308 = vmatprep.subr.mxu0 0.0
      %1309 = vmatpush1.msra.mxu0 0.0
      %1310 = vmatprep.subr.mxu0 0.0
      %1311 = vmatpush1.msra.mxu0 0.0
      %1312 = vmatprep.subr.mxu0 0.0
      %1313 = vmatpush1.msra.mxu0 0.0
      %1314 = vmatprep.subr.mxu0 0.0
      %1315 = vmatpush1.msra.mxu0 0.0
      %1316 = vmatprep.subr.mxu0 0.0
      %1317 = vmatpush1.msra.mxu0 0.0
      %1318 = vmatprep.subr.mxu0 0.0
      %1319 = vmatpush1.msra.mxu0 0.0
      %1320 = vmatprep.mubr.f32.mxu0 0.0
      %1321 = vmatmul.mubr.f32.gmra.mrb[0].mxu0 %v1206
      %v1322 = vpop.f32.mrb[0].mxu0
      %v1323 = vadd.f32 0.0, %v1322
      %v1324 = vpop.f32.mrb[0].mxu0
      %1325 = vmatprep.mubr.f32.mxu0 0.0
      %1326 = vmatmul.mubr.f32.gmra.mrb[0].mxu0 %v1209
      %v1327 = vpop.f32.mrb[0].mxu0
      %v1328 = vadd.f32 0.0, %v1327
      %v1329 = vpop.f32.mrb[0].mxu0
      %1330 = vmatprep.mubr.f32.mxu0 0.0
      %1331 = vmatmul.mubr.f32.gmra.mrb[0].mxu0 %v1212
      %v1332 = vpop.f32.mrb[0].mxu0
      %v1333 = vadd.f32 0.0, %v1332
      %v1334 = vpop.f32.mrb[0].mxu0
      %1335 = vmatprep.mubr.f32.mxu0 0.0
      %1336 = vmatmul.mubr.f32.gmra.mrb[0].mxu0 %v1215
      %v1337 = vpop.f32.mrb[0].mxu0
      %v1338 = vadd.f32 0.0, %v1337
      %v1339 = vpop.f32.mrb[0].mxu0
      %1340 = vmatprep.mubr.f32.mxu0 0.0
      %1341 = vmatmul.mubr.f32.gmra.mrb[0].mxu0 %v1218
      %v1342 = vpop.f32.mrb[0].mxu0
      %v1343 = vadd.f32 0.0, %v1342
      %v1344 = vpop.f32.mrb[0].mxu0
      %1345 = vmatprep.mubr.f32.mxu0 0.0
      %1346 = vmatmul.mubr.f32.gmra.mrb[0].mxu0 %v1221
      %v1347 = vpop.f32.mrb[0].mxu0
      %v1348 = vadd.f32 0.0, %v1347
      %v1349 = vpop.f32.mrb[0].mxu0
      %1350 = vmatprep.mubr.f32.mxu0 0.0
      %1351 = vmatmul.mubr.f32.gmra.mrb[0].mxu0 %v1224
      %v1352 = vpop.f32.mrb[0].mxu0
      %v1353 = vadd.f32 0.0, %v1352
      %v1354 = vpop.f32.mrb[0].mxu0
      %1355 = vmatprep.mubr.f32.mxu0 0.0
      %1356 = vmatmul.mubr.f32.gmra.mrb[0].mxu0 %v1227
      %v1357 = vpop.f32.mrb[0].mxu0
      %v1358 = vadd.f32 0.0, %v1357
      %v1359 = vpop.f32.mrb[0].mxu0
      %1360 = vmatprep.mubr.f32.mxu0 0.0
      %1361 = vmatmul.mubr.f32.gmra.mrb[0].mxu0 %v1230
      %v1362 = vpop.f32.mrb[0].mxu0
      %v1363 = vadd.f32 0.0, %v1362
      %v1364 = vpop.f32.mrb[0].mxu0
      %1365 = vmatprep.mubr.f32.mxu0 0.0
      %1366 = vmatmul.mubr.f32.gmra.mrb[0].mxu0 %v1233
      %v1367 = vpop.f32.mrb[0].mxu0
      %v1368 = vadd.f32 0.0, %v1367
      %v1369 = vpop.f32.mrb[0].mxu0
      %1370 = vmatprep.mubr.f32.mxu0 0.0
      %1371 = vmatmul.mubr.f32.gmra.mrb[0].mxu0 %v1236
      %v1372 = vpop.f32.mrb[0].mxu0
      %v1373 = vadd.f32 0.0, %v1372
      %v1374 = vpop.f32.mrb[0].mxu0
      %1375 = vmatprep.mubr.f32.mxu0 0.0
      %1376 = vmatmul.mubr.f32.gmra.mrb[0].mxu0 %v1239
      %v1377 = vpop.f32.mrb[0].mxu0
      %v1378 = vadd.f32 0.0, %v1377
      %v1379 = vpop.f32.mrb[0].mxu0
      %1380 = vmatprep.mubr.f32.mxu0 0.0
      %1381 = vmatmul.mubr.f32.gmra.mrb[0].mxu0 %v1242
      %v1382 = vpop.f32.mrb[0].mxu0
      %v1383 = vadd.f32 0.0, %v1382
      %v1384 = vpop.f32.mrb[0].mxu0
      %1385 = vmatprep.mubr.f32.mxu0 0.0
      %1386 = vmatmul.mubr.f32.gmra.mrb[0].mxu0 %v1245
      %v1387 = vpop.f32.mrb[0].mxu0
      %v1388 = vadd.f32 0.0, %v1387
      %v1389 = vpop.f32.mrb[0].mxu0
      %1390 = vmatprep.mubr.f32.mxu0 0.0
      %1391 = vmatmul.mubr.f32.gmra.mrb[0].mxu0 %v1248
      %v1392 = vpop.f32.mrb[0].mxu0
      %v1393 = vadd.f32 0.0, %v1392
      %v1394 = vpop.f32.mrb[0].mxu0
      %1395 = vmatprep.mubr.f32.mxu0 0.0
      %1396 = vmatmul.mubr.f32.gmra.mrb[0].mxu0 %v1251
      %v1397 = vpop.f32.mrb[0].mxu0
      %v1398 = vadd.f32 0.0, %v1397
      %v1399 = vpop.f32.mrb[0].mxu0
      %1400 = vdwg.mxu0
      %v1401 = vadd.f32 %v1108, %v1323
      %v1402 = vadd.f32 %v1113, %v1328
      %v1403 = vadd.f32 %v1118, %v1333
      %v1404 = vadd.f32 %v1123, %v1338
      %v1405 = vadd.f32 %v1128, %v1343
      %v1406 = vadd.f32 %v1133, %v1348
      %v1407 = vadd.f32 %v1138, %v1353
      %v1408 = vadd.f32 %v1143, %v1358
      %v1409 = vadd.f32 %v1148, %v1363
      %v1410 = vadd.f32 %v1153, %v1368
      %v1411 = vadd.f32 %v1158, %v1373
      %v1412 = vadd.f32 %v1163, %v1378
      %v1413 = vadd.f32 %v1168, %v1383
      %v1414 = vadd.f32 %v1173, %v1388
      %v1415 = vadd.f32 %v1178, %v1393
      %v1416 = vadd.f32 %v1183, %v1398
      %v1417 = vld [vmem:[#allocation2 + $0x9] sm:$0xff]
      %v1418 = vld [vmem:[#allocation2 + $0x11] sm:$0xff]
      %v1419 = vld [vmem:[#allocation2 + $0x29] sm:$0xff]
      %v1420 = vld [vmem:[#allocation2 + $0x31] sm:$0xff]
      %v1421 = vld [vmem:[#allocation2 + $0x49] sm:$0xff]
      %v1422 = vld [vmem:[#allocation2 + $0x51] sm:$0xff]
      %v1423 = vld [vmem:[#allocation2 + $0x69] sm:$0xff]
      %v1424 = vld [vmem:[#allocation2 + $0x71] sm:$0xff]
      %v1425 = vld [vmem:[#allocation2 + $0x89] sm:$0xff]
      %v1426 = vld [vmem:[#allocation2 + $0x91] sm:$0xff]
      %v1427 = vld [vmem:[#allocation2 + $0xa9] sm:$0xff]
      %v1428 = vld [vmem:[#allocation2 + $0xb1] sm:$0xff]
      %v1429 = vld [vmem:[#allocation2 + $0xc9] sm:$0xff]
      %v1430 = vld [vmem:[#allocation2 + $0xd1] sm:$0xff]
      %v1431 = vld [vmem:[#allocation2 + $0xe9] sm:$0xff]
      %v1432 = vld [vmem:[#allocation2 + $0xf1] sm:$0xff]
      %s1433 = scalar_lea.vmem %s1, 6
      %v1434 = vld [vmem:[%s1433] sm:$0x3]
      %v1435 = vunpack.c.l.bf16 %v1434
      %v1437 = vsel %vm543, %v1417, 0
      %v1440 = vsel %vm543, %v1418, 0
      %v1443 = vsel %vm543, %v1419, 0
      %v1446 = vsel %vm543, %v1420, 0
      %v1449 = vsel %vm543, %v1421, 0
      %v1452 = vsel %vm543, %v1422, 0
      %v1455 = vsel %vm543, %v1423, 0
      %v1458 = vsel %vm543, %v1424, 0
      %v1461 = vsel %vm543, %v1425, 0
      %v1464 = vsel %vm543, %v1426, 0
      %v1467 = vsel %vm543, %v1427, 0
      %v1470 = vsel %vm543, %v1428, 0
      %v1473 = vsel %vm543, %v1429, 0
      %v1476 = vsel %vm543, %v1430, 0
      %v1479 = vsel %vm543, %v1431, 0
      %v1482 = vsel %vm543, %v1432, 0
      %v1485 = vsel %vm592, %v1435, 0
      %1487 = vmatprep.subr.mxu0 0.0
      %1488 = vmatpush1.msra.mxu0 %v1485
      %1489 = vmatprep.subr.mxu0 0.0
      %1490 = vmatpush1.msra.mxu0 0.0
      %1491 = vmatprep.subr.mxu0 0.0
      %1492 = vmatpush1.msra.mxu0 0.0
      %1493 = vmatprep.subr.mxu0 0.0
      %1494 = vmatpush1.msra.mxu0 0.0
      %1495 = vmatprep.subr.mxu0 0.0
      %1496 = vmatpush1.msra.mxu0 0.0
      %1497 = vmatprep.subr.mxu0 0.0
      %1498 = vmatpush1.msra.mxu0 0.0
      %1499 = vmatprep.subr.mxu0 0.0
      %1500 = vmatpush1.msra.mxu0 0.0
      %1501 = vmatprep.subr.mxu0 0.0
      %1502 = vmatpush1.msra.mxu0 0.0
      %1503 = vmatprep.subr.mxu0 0.0
      %1504 = vmatpush1.msra.mxu0 0.0
      %1505 = vmatprep.subr.mxu0 0.0
      %1506 = vmatpush1.msra.mxu0 0.0
      %1507 = vmatprep.subr.mxu0 0.0
      %1508 = vmatpush1.msra.mxu0 0.0
      %1509 = vmatprep.subr.mxu0 0.0
      %1510 = vmatpush1.msra.mxu0 0.0
      %1511 = vmatprep.subr.mxu0 0.0
      %1512 = vmatpush1.msra.mxu0 0.0
      %1513 = vmatprep.subr.mxu0 0.0
      %1514 = vmatpush1.msra.mxu0 0.0
      %1515 = vmatprep.subr.mxu0 0.0
      %1516 = vmatpush1.msra.mxu0 0.0
      %1517 = vmatprep.subr.mxu0 0.0
      %1518 = vmatpush1.msra.mxu0 0.0
      %1519 = vmatprep.subr.mxu0 0.0
      %1520 = vmatpush1.msra.mxu0 0.0
      %1521 = vmatprep.subr.mxu0 0.0
      %1522 = vmatpush1.msra.mxu0 0.0
      %1523 = vmatprep.subr.mxu0 0.0
      %1524 = vmatpush1.msra.mxu0 0.0
      %1525 = vmatprep.subr.mxu0 0.0
      %1526 = vmatpush1.msra.mxu0 0.0
      %1527 = vmatprep.subr.mxu0 0.0
      %1528 = vmatpush1.msra.mxu0 0.0
      %1529 = vmatprep.subr.mxu0 0.0
      %1530 = vmatpush1.msra.mxu0 0.0
      %1531 = vmatprep.subr.mxu0 0.0
      %1532 = vmatpush1.msra.mxu0 0.0
      %1533 = vmatprep.subr.mxu0 0.0
      %1534 = vmatpush1.msra.mxu0 0.0
      %1535 = vmatprep.subr.mxu0 0.0
      %1536 = vmatpush1.msra.mxu0 0.0
      %1537 = vmatprep.subr.mxu0 0.0
      %1538 = vmatpush1.msra.mxu0 0.0
      %1539 = vmatprep.subr.mxu0 0.0
      %1540 = vmatpush1.msra.mxu0 0.0
      %1541 = vmatprep.subr.mxu0 0.0
      %1542 = vmatpush1.msra.mxu0 0.0
      %1543 = vmatprep.subr.mxu0 0.0
      %1544 = vmatpush1.msra.mxu0 0.0
      %1545 = vmatprep.subr.mxu0 0.0
      %1546 = vmatpush1.msra.mxu0 0.0
      %1547 = vmatprep.subr.mxu0 0.0
      %1548 = vmatpush1.msra.mxu0 0.0
      %1549 = vmatprep.subr.mxu0 0.0
      %1550 = vmatpush1.msra.mxu0 0.0
      %1551 = vmatprep.mubr.f32.mxu0 0.0
      %1552 = vmatmul.mubr.f32.gmra.mrb[0].mxu0 %v1437
      %v1553 = vpop.f32.mrb[0].mxu0
      %v1554 = vadd.f32 0.0, %v1553
      %v1555 = vpop.f32.mrb[0].mxu0
      %1556 = vmatprep.mubr.f32.mxu0 0.0
      %1557 = vmatmul.mubr.f32.gmra.mrb[0].mxu0 %v1440
      %v1558 = vpop.f32.mrb[0].mxu0
      %v1559 = vadd.f32 0.0, %v1558
      %v1560 = vpop.f32.mrb[0].mxu0
      %1561 = vmatprep.mubr.f32.mxu0 0.0
      %1562 = vmatmul.mubr.f32.gmra.mrb[0].mxu0 %v1443
      %v1563 = vpop.f32.mrb[0].mxu0
      %v1564 = vadd.f32 0.0, %v1563
      %v1565 = vpop.f32.mrb[0].mxu0
      %1566 = vmatprep.mubr.f32.mxu0 0.0
      %1567 = vmatmul.mubr.f32.gmra.mrb[0].mxu0 %v1446
      %v1568 = vpop.f32.mrb[0].mxu0
      %v1569 = vadd.f32 0.0, %v1568
      %v1570 = vpop.f32.mrb[0].mxu0
      %1571 = vmatprep.mubr.f32.mxu0 0.0
      %1572 = vmatmul.mubr.f32.gmra.mrb[0].mxu0 %v1449
      %v1573 = vpop.f32.mrb[0].mxu0
      %v1574 = vadd.f32 0.0, %v1573
      %v1575 = vpop.f32.mrb[0].mxu0
      %1576 = vmatprep.mubr.f32.mxu0 0.0
      %1577 = vmatmul.mubr.f32.gmra.mrb[0].mxu0 %v1452
      %v1578 = vpop.f32.mrb[0].mxu0
      %v1579 = vadd.f32 0.0, %v1578
      %v1580 = vpop.f32.mrb[0].mxu0
      %1581 = vmatprep.mubr.f32.mxu0 0.0
      %1582 = vmatmul.mubr.f32.gmra.mrb[0].mxu0 %v1455
      %v1583 = vpop.f32.mrb[0].mxu0
      %v1584 = vadd.f32 0.0, %v1583
      %v1585 = vpop.f32.mrb[0].mxu0
      %1586 = vmatprep.mubr.f32.mxu0 0.0
      %1587 = vmatmul.mubr.f32.gmra.mrb[0].mxu0 %v1458
      %v1588 = vpop.f32.mrb[0].mxu0
      %v1589 = vadd.f32 0.0, %v1588
      %v1590 = vpop.f32.mrb[0].mxu0
      %1591 = vmatprep.mubr.f32.mxu0 0.0
      %1592 = vmatmul.mubr.f32.gmra.mrb[0].mxu0 %v1461
      %v1593 = vpop.f32.mrb[0].mxu0
      %v1594 = vadd.f32 0.0, %v1593
      %v1595 = vpop.f32.mrb[0].mxu0
      %1596 = vmatprep.mubr.f32.mxu0 0.0
      %1597 = vmatmul.mubr.f32.gmra.mrb[0].mxu0 %v1464
      %v1598 = vpop.f32.mrb[0].mxu0
      %v1599 = vadd.f32 0.0, %v1598
      %v1600 = vpop.f32.mrb[0].mxu0
      %1601 = vmatprep.mubr.f32.mxu0 0.0
      %1602 = vmatmul.mubr.f32.gmra.mrb[0].mxu0 %v1467
      %v1603 = vpop.f32.mrb[0].mxu0
      %v1604 = vadd.f32 0.0, %v1603
      %v1605 = vpop.f32.mrb[0].mxu0
      %1606 = vmatprep.mubr.f32.mxu0 0.0
      %1607 = vmatmul.mubr.f32.gmra.mrb[0].mxu0 %v1470
      %v1608 = vpop.f32.mrb[0].mxu0
      %v1609 = vadd.f32 0.0, %v1608
      %v1610 = vpop.f32.mrb[0].mxu0
      %1611 = vmatprep.mubr.f32.mxu0 0.0
      %1612 = vmatmul.mubr.f32.gmra.mrb[0].mxu0 %v1473
      %v1613 = vpop.f32.mrb[0].mxu0
      %v1614 = vadd.f32 0.0, %v1613
      %v1615 = vpop.f32.mrb[0].mxu0
      %1616 = vmatprep.mubr.f32.mxu0 0.0
      %1617 = vmatmul.mubr.f32.gmra.mrb[0].mxu0 %v1476
      %v1618 = vpop.f32.mrb[0].mxu0
      %v1619 = vadd.f32 0.0, %v1618
      %v1620 = vpop.f32.mrb[0].mxu0
      %1621 = vmatprep.mubr.f32.mxu0 0.0
      %1622 = vmatmul.mubr.f32.gmra.mrb[0].mxu0 %v1479
      %v1623 = vpop.f32.mrb[0].mxu0
      %v1624 = vadd.f32 0.0, %v1623
      %v1625 = vpop.f32.mrb[0].mxu0
      %1626 = vmatprep.mubr.f32.mxu0 0.0
      %1627 = vmatmul.mubr.f32.gmra.mrb[0].mxu0 %v1482
      %v1628 = vpop.f32.mrb[0].mxu0
      %v1629 = vadd.f32 0.0, %v1628
      %v1630 = vpop.f32.mrb[0].mxu0
      %1631 = vdwg.mxu0
      %v1632 = vadd.f32 %v1401, %v1554
      %v1633 = vadd.f32 %v1402, %v1559
      %v1634 = vadd.f32 %v1403, %v1564
      %v1635 = vadd.f32 %v1404, %v1569
      %v1636 = vadd.f32 %v1405, %v1574
      %v1637 = vadd.f32 %v1406, %v1579
      %v1638 = vadd.f32 %v1407, %v1584
      %v1639 = vadd.f32 %v1408, %v1589
      %v1640 = vadd.f32 %v1409, %v1594
      %v1641 = vadd.f32 %v1410, %v1599
      %v1642 = vadd.f32 %v1411, %v1604
      %v1643 = vadd.f32 %v1412, %v1609
      %v1644 = vadd.f32 %v1413, %v1614
      %v1645 = vadd.f32 %v1414, %v1619
      %v1646 = vadd.f32 %v1415, %v1624
      %v1647 = vadd.f32 %v1416, %v1629
      %v1648 = vld [vmem:[#allocation2 + $0xa] sm:$0xff]
      %v1649 = vld [vmem:[#allocation2 + $0x12] sm:$0xff]
      %v1650 = vld [vmem:[#allocation2 + $0x2a] sm:$0xff]
      %v1651 = vld [vmem:[#allocation2 + $0x32] sm:$0xff]
      %v1652 = vld [vmem:[#allocation2 + $0x4a] sm:$0xff]
      %v1653 = vld [vmem:[#allocation2 + $0x52] sm:$0xff]
      %v1654 = vld [vmem:[#allocation2 + $0x6a] sm:$0xff]
      %v1655 = vld [vmem:[#allocation2 + $0x72] sm:$0xff]
      %v1656 = vld [vmem:[#allocation2 + $0x8a] sm:$0xff]
      %v1657 = vld [vmem:[#allocation2 + $0x92] sm:$0xff]
      %v1658 = vld [vmem:[#allocation2 + $0xaa] sm:$0xff]
      %v1659 = vld [vmem:[#allocation2 + $0xb2] sm:$0xff]
      %v1660 = vld [vmem:[#allocation2 + $0xca] sm:$0xff]
      %v1661 = vld [vmem:[#allocation2 + $0xd2] sm:$0xff]
      %v1662 = vld [vmem:[#allocation2 + $0xea] sm:$0xff]
      %v1663 = vld [vmem:[#allocation2 + $0xf2] sm:$0xff]
      %s1664 = scalar_lea.vmem %s1, 8
      %v1665 = vld [vmem:[%s1664] sm:$0x3]
      %v1666 = vunpack.c.l.bf16 %v1665
      %v1668 = vsel %vm543, %v1648, 0
      %v1671 = vsel %vm543, %v1649, 0
      %v1674 = vsel %vm543, %v1650, 0
      %v1677 = vsel %vm543, %v1651, 0
      %v1680 = vsel %vm543, %v1652, 0
      %v1683 = vsel %vm543, %v1653, 0
      %v1686 = vsel %vm543, %v1654, 0
      %v1689 = vsel %vm543, %v1655, 0
      %v1692 = vsel %vm543, %v1656, 0
      %v1695 = vsel %vm543, %v1657, 0
      %v1698 = vsel %vm543, %v1658, 0
      %v1701 = vsel %vm543, %v1659, 0
      %v1704 = vsel %vm543, %v1660, 0
      %v1707 = vsel %vm543, %v1661, 0
      %v1710 = vsel %vm543, %v1662, 0
      %v1713 = vsel %vm543, %v1663, 0
      %v1716 = vsel %vm592, %v1666, 0
      %1718 = vmatprep.subr.mxu0 0.0
      %1719 = vmatpush1.msra.mxu0 %v1716
      %1720 = vmatprep.subr.mxu0 0.0
      %1721 = vmatpush1.msra.mxu0 0.0
      %1722 = vmatprep.subr.mxu0 0.0
      %1723 = vmatpush1.msra.mxu0 0.0
      %1724 = vmatprep.subr.mxu0 0.0
      %1725 = vmatpush1.msra.mxu0 0.0
      %1726 = vmatprep.subr.mxu0 0.0
      %1727 = vmatpush1.msra.mxu0 0.0
      %1728 = vmatprep.subr.mxu0 0.0
      %1729 = vmatpush1.msra.mxu0 0.0
      %1730 = vmatprep.subr.mxu0 0.0
      %1731 = vmatpush1.msra.mxu0 0.0
      %1732 = vmatprep.subr.mxu0 0.0
      %1733 = vmatpush1.msra.mxu0 0.0
      %1734 = vmatprep.subr.mxu0 0.0
      %1735 = vmatpush1.msra.mxu0 0.0
      %1736 = vmatprep.subr.mxu0 0.0
      %1737 = vmatpush1.msra.mxu0 0.0
      %1738 = vmatprep.subr.mxu0 0.0
      %1739 = vmatpush1.msra.mxu0 0.0
      %1740 = vmatprep.subr.mxu0 0.0
      %1741 = vmatpush1.msra.mxu0 0.0
      %1742 = vmatprep.subr.mxu0 0.0
      %1743 = vmatpush1.msra.mxu0 0.0
      %1744 = vmatprep.subr.mxu0 0.0
      %1745 = vmatpush1.msra.mxu0 0.0
      %1746 = vmatprep.subr.mxu0 0.0
      %1747 = vmatpush1.msra.mxu0 0.0
      %1748 = vmatprep.subr.mxu0 0.0
      %1749 = vmatpush1.msra.mxu0 0.0
      %1750 = vmatprep.subr.mxu0 0.0
      %1751 = vmatpush1.msra.mxu0 0.0
      %1752 = vmatprep.subr.mxu0 0.0
      %1753 = vmatpush1.msra.mxu0 0.0
      %1754 = vmatprep.subr.mxu0 0.0
      %1755 = vmatpush1.msra.mxu0 0.0
      %1756 = vmatprep.subr.mxu0 0.0
      %1757 = vmatpush1.msra.mxu0 0.0
      %1758 = vmatprep.subr.mxu0 0.0
      %1759 = vmatpush1.msra.mxu0 0.0
      %1760 = vmatprep.subr.mxu0 0.0
      %1761 = vmatpush1.msra.mxu0 0.0
      %1762 = vmatprep.subr.mxu0 0.0
      %1763 = vmatpush1.msra.mxu0 0.0
      %1764 = vmatprep.subr.mxu0 0.0
      %1765 = vmatpush1.msra.mxu0 0.0
      %1766 = vmatprep.subr.mxu0 0.0
      %1767 = vmatpush1.msra.mxu0 0.0
      %1768 = vmatprep.subr.mxu0 0.0
      %1769 = vmatpush1.msra.mxu0 0.0
      %1770 = vmatprep.subr.mxu0 0.0
      %1771 = vmatpush1.msra.mxu0 0.0
      %1772 = vmatprep.subr.mxu0 0.0
      %1773 = vmatpush1.msra.mxu0 0.0
      %1774 = vmatprep.subr.mxu0 0.0
      %1775 = vmatpush1.msra.mxu0 0.0
      %1776 = vmatprep.subr.mxu0 0.0
      %1777 = vmatpush1.msra.mxu0 0.0
      %1778 = vmatprep.subr.mxu0 0.0
      %1779 = vmatpush1.msra.mxu0 0.0
      %1780 = vmatprep.subr.mxu0 0.0
      %1781 = vmatpush1.msra.mxu0 0.0
      %1782 = vmatprep.mubr.f32.mxu0 0.0
      %1783 = vmatmul.mubr.f32.gmra.mrb[0].mxu0 %v1668
      %v1784 = vpop.f32.mrb[0].mxu0
      %v1785 = vadd.f32 0.0, %v1784
      %v1786 = vpop.f32.mrb[0].mxu0
      %1787 = vmatprep.mubr.f32.mxu0 0.0
      %1788 = vmatmul.mubr.f32.gmra.mrb[0].mxu0 %v1671
      %v1789 = vpop.f32.mrb[0].mxu0
      %v1790 = vadd.f32 0.0, %v1789
      %v1791 = vpop.f32.mrb[0].mxu0
      %1792 = vmatprep.mubr.f32.mxu0 0.0
      %1793 = vmatmul.mubr.f32.gmra.mrb[0].mxu0 %v1674
      %v1794 = vpop.f32.mrb[0].mxu0
      %v1795 = vadd.f32 0.0, %v1794
      %v1796 = vpop.f32.mrb[0].mxu0
      %1797 = vmatprep.mubr.f32.mxu0 0.0
      %1798 = vmatmul.mubr.f32.gmra.mrb[0].mxu0 %v1677
      %v1799 = vpop.f32.mrb[0].mxu0
      %v1800 = vadd.f32 0.0, %v1799
      %v1801 = vpop.f32.mrb[0].mxu0
      %1802 = vmatprep.mubr.f32.mxu0 0.0
      %1803 = vmatmul.mubr.f32.gmra.mrb[0].mxu0 %v1680
      %v1804 = vpop.f32.mrb[0].mxu0
      %v1805 = vadd.f32 0.0, %v1804
      %v1806 = vpop.f32.mrb[0].mxu0
      %1807 = vmatprep.mubr.f32.mxu0 0.0
      %1808 = vmatmul.mubr.f32.gmra.mrb[0].mxu0 %v1683
      %v1809 = vpop.f32.mrb[0].mxu0
      %v1810 = vadd.f32 0.0, %v1809
      %v1811 = vpop.f32.mrb[0].mxu0
      %1812 = vmatprep.mubr.f32.mxu0 0.0
      %1813 = vmatmul.mubr.f32.gmra.mrb[0].mxu0 %v1686
      %v1814 = vpop.f32.mrb[0].mxu0
      %v1815 = vadd.f32 0.0, %v1814
      %v1816 = vpop.f32.mrb[0].mxu0
      %1817 = vmatprep.mubr.f32.mxu0 0.0
      %1818 = vmatmul.mubr.f32.gmra.mrb[0].mxu0 %v1689
      %v1819 = vpop.f32.mrb[0].mxu0
      %v1820 = vadd.f32 0.0, %v1819
      %v1821 = vpop.f32.mrb[0].mxu0
      %1822 = vmatprep.mubr.f32.mxu0 0.0
      %1823 = vmatmul.mubr.f32.gmra.mrb[0].mxu0 %v1692
      %v1824 = vpop.f32.mrb[0].mxu0
      %v1825 = vadd.f32 0.0, %v1824
      %v1826 = vpop.f32.mrb[0].mxu0
      %1827 = vmatprep.mubr.f32.mxu0 0.0
      %1828 = vmatmul.mubr.f32.gmra.mrb[0].mxu0 %v1695
      %v1829 = vpop.f32.mrb[0].mxu0
      %v1830 = vadd.f32 0.0, %v1829
      %v1831 = vpop.f32.mrb[0].mxu0
      %1832 = vmatprep.mubr.f32.mxu0 0.0
      %1833 = vmatmul.mubr.f32.gmra.mrb[0].mxu0 %v1698
      %v1834 = vpop.f32.mrb[0].mxu0
      %v1835 = vadd.f32 0.0, %v1834
      %v1836 = vpop.f32.mrb[0].mxu0
      %1837 = vmatprep.mubr.f32.mxu0 0.0
      %1838 = vmatmul.mubr.f32.gmra.mrb[0].mxu0 %v1701
      %v1839 = vpop.f32.mrb[0].mxu0
      %v1840 = vadd.f32 0.0, %v1839
      %v1841 = vpop.f32.mrb[0].mxu0
      %1842 = vmatprep.mubr.f32.mxu0 0.0
      %1843 = vmatmul.mubr.f32.gmra.mrb[0].mxu0 %v1704
      %v1844 = vpop.f32.mrb[0].mxu0
      %v1845 = vadd.f32 0.0, %v1844
      %v1846 = vpop.f32.mrb[0].mxu0
      %1847 = vmatprep.mubr.f32.mxu0 0.0
      %1848 = vmatmul.mubr.f32.gmra.mrb[0].mxu0 %v1707
      %v1849 = vpop.f32.mrb[0].mxu0
      %v1850 = vadd.f32 0.0, %v1849
      %v1851 = vpop.f32.mrb[0].mxu0
      %1852 = vmatprep.mubr.f32.mxu0 0.0
      %1853 = vmatmul.mubr.f32.gmra.mrb[0].mxu0 %v1710
      %v1854 = vpop.f32.mrb[0].mxu0
      %v1855 = vadd.f32 0.0, %v1854
      %v1856 = vpop.f32.mrb[0].mxu0
      %1857 = vmatprep.mubr.f32.mxu0 0.0
      %1858 = vmatmul.mubr.f32.gmra.mrb[0].mxu0 %v1713
      %v1859 = vpop.f32.mrb[0].mxu0
      %v1860 = vadd.f32 0.0, %v1859
      %v1861 = vpop.f32.mrb[0].mxu0
      %1862 = vdwg.mxu0
      %v1863 = vadd.f32 %v1632, %v1785
      %v1864 = vadd.f32 %v1633, %v1790
      %v1865 = vadd.f32 %v1634, %v1795
      %v1866 = vadd.f32 %v1635, %v1800
      %v1867 = vadd.f32 %v1636, %v1805
      %v1868 = vadd.f32 %v1637, %v1810
      %v1869 = vadd.f32 %v1638, %v1815
      %v1870 = vadd.f32 %v1639, %v1820
      %v1871 = vadd.f32 %v1640, %v1825
      %v1872 = vadd.f32 %v1641, %v1830
      %v1873 = vadd.f32 %v1642, %v1835
      %v1874 = vadd.f32 %v1643, %v1840
      %v1875 = vadd.f32 %v1644, %v1845
      %v1876 = vadd.f32 %v1645, %v1850
      %v1877 = vadd.f32 %v1646, %v1855
      %v1878 = vadd.f32 %v1647, %v1860
      %v1879 = vld [vmem:[%s2] sm:$0x1]
      %v1881 = vlaneseq
      %v1882 = vshrl.u32 %v1881, 7
      %v1883 = vsub.s32 0, %v1882
      %v1884 = vrot.slane %v1879, %v1883
      %v1886 = vadd.f32 %v1863, %v1884
      %v1887 = vadd.f32 %v1864, %v1884
      %v1888 = vadd.f32 %v1865, %v1884
      %v1889 = vadd.f32 %v1866, %v1884
      %v1890 = vadd.f32 %v1867, %v1884
      %v1891 = vadd.f32 %v1868, %v1884
      %v1892 = vadd.f32 %v1869, %v1884
      %v1893 = vadd.f32 %v1870, %v1884
      %v1894 = vadd.f32 %v1871, %v1884
      %v1895 = vadd.f32 %v1872, %v1884
      %v1896 = vadd.f32 %v1873, %v1884
      %v1897 = vadd.f32 %v1874, %v1884
      %v1898 = vadd.f32 %v1875, %v1884
      %v1899 = vadd.f32 %v1876, %v1884
      %v1900 = vadd.f32 %v1877, %v1884
      %v1901 = vadd.f32 %v1878, %v1884
      %v1902 = vmax.f32 %v1886, 0.0
      %v1903 = vmax.f32 %v1887, 0.0
      %v1904 = vmax.f32 %v1888, 0.0
      %v1905 = vmax.f32 %v1889, 0.0
      %v1906 = vmax.f32 %v1890, 0.0
      %v1907 = vmax.f32 %v1891, 0.0
      %v1908 = vmax.f32 %v1892, 0.0
      %v1909 = vmax.f32 %v1893, 0.0
      %v1910 = vmax.f32 %v1894, 0.0
      %v1911 = vmax.f32 %v1895, 0.0
      %v1912 = vmax.f32 %v1896, 0.0
      %v1913 = vmax.f32 %v1897, 0.0
      %v1914 = vmax.f32 %v1898, 0.0
      %v1915 = vmax.f32 %v1899, 0.0
      %v1916 = vmax.f32 %v1900, 0.0
      %v1917 = vmax.f32 %v1901, 0.0
      %vm1918 = vcmask 64512
      %1919 = vst.msk [vmem:[#allocation2 + $0x8] sm:$0xff] %vm1918, %v1902
      %1920 = vst.msk [vmem:[#allocation2 + $0x10] sm:$0xff] %vm1918, %v1903
      %1921 = vst.msk [vmem:[#allocation2 + $0x28] sm:$0xff] %vm1918, %v1904
      %1922 = vst.msk [vmem:[#allocation2 + $0x30] sm:$0xff] %vm1918, %v1905
      %1923 = vst.msk [vmem:[#allocation2 + $0x48] sm:$0xff] %vm1918, %v1906
      %1924 = vst.msk [vmem:[#allocation2 + $0x50] sm:$0xff] %vm1918, %v1907
      %1925 = vst.msk [vmem:[#allocation2 + $0x68] sm:$0xff] %vm1918, %v1908
      %1926 = vst.msk [vmem:[#allocation2 + $0x70] sm:$0xff] %vm1918, %v1909
      %1927 = vst.msk [vmem:[#allocation2 + $0x88] sm:$0xff] %vm1918, %v1910
      %1928 = vst.msk [vmem:[#allocation2 + $0x90] sm:$0xff] %vm1918, %v1911
      %1929 = vst.msk [vmem:[#allocation2 + $0xa8] sm:$0xff] %vm1918, %v1912
      %1930 = vst.msk [vmem:[#allocation2 + $0xb0] sm:$0xff] %vm1918, %v1913
      %1931 = vst.msk [vmem:[#allocation2 + $0xc8] sm:$0xff] %vm1918, %v1914
      %1932 = vst.msk [vmem:[#allocation2 + $0xd0] sm:$0xff] %vm1918, %v1915
      %1933 = vst.msk [vmem:[#allocation2 + $0xe8] sm:$0xff] %vm1918, %v1916
      %1934 = vst.msk [vmem:[#allocation2 + $0xf0] sm:$0xff] %vm1918, %v1917
      %v1935 = vld [vmem:[#allocation2 + $0x6] sm:$0xff]
      %v1936 = vld [vmem:[#allocation2 + $0xe] sm:$0xff]
      %v1937 = vld [vmem:[#allocation2 + $0x26] sm:$0xff]
      %v1938 = vld [vmem:[#allocation2 + $0x2e] sm:$0xff]
      %v1939 = vld [vmem:[#allocation2 + $0x46] sm:$0xff]
      %v1940 = vld [vmem:[#allocation2 + $0x4e] sm:$0xff]
      %v1941 = vld [vmem:[#allocation2 + $0x66] sm:$0xff]
      %v1942 = vld [vmem:[#allocation2 + $0x6e] sm:$0xff]
      %v1943 = vld [vmem:[#allocation2 + $0x86] sm:$0xff]
      %v1944 = vld [vmem:[#allocation2 + $0x8e] sm:$0xff]
      %v1945 = vld [vmem:[#allocation2 + $0xa6] sm:$0xff]
      %v1946 = vld [vmem:[#allocation2 + $0xae] sm:$0xff]
      %v1947 = vld [vmem:[#allocation2 + $0xc6] sm:$0xff]
      %v1948 = vld [vmem:[#allocation2 + $0xce] sm:$0xff]
      %v1949 = vld [vmem:[#allocation2 + $0xe6] sm:$0xff]
      %v1950 = vld [vmem:[#allocation2 + $0xee] sm:$0xff]
      %v1951 = vld [vmem:[%s3] sm:$0xf]
      %v1952 = vunpack.c.l.bf16 %v1951
      %v1953 = vld [vmem:[#allocation2 + $0x7] sm:$0xff]
      %v1954 = vld [vmem:[#allocation2 + $0xf] sm:$0xff]
      %v1955 = vld [vmem:[#allocation2 + $0x27] sm:$0xff]
      %v1956 = vld [vmem:[#allocation2 + $0x2f] sm:$0xff]
      %v1957 = vld [vmem:[#allocation2 + $0x47] sm:$0xff]
      %v1958 = vld [vmem:[#allocation2 + $0x4f] sm:$0xff]
      %v1959 = vld [vmem:[#allocation2 + $0x67] sm:$0xff]
      %v1960 = vld [vmem:[#allocation2 + $0x6f] sm:$0xff]
      %v1961 = vld [vmem:[#allocation2 + $0x87] sm:$0xff]
      %v1962 = vld [vmem:[#allocation2 + $0x8f] sm:$0xff]
      %v1963 = vld [vmem:[#allocation2 + $0xa7] sm:$0xff]
      %v1964 = vld [vmem:[#allocation2 + $0xaf] sm:$0xff]
      %v1965 = vld [vmem:[#allocation2 + $0xc7] sm:$0xff]
      %v1966 = vld [vmem:[#allocation2 + $0xcf] sm:$0xff]
      %v1967 = vld [vmem:[#allocation2 + $0xe7] sm:$0xff]
      %v1968 = vld [vmem:[#allocation2 + $0xef] sm:$0xff]
      %s1969 = scalar_lea.vmem %s3, 4
      %v1970 = vld [vmem:[%s1969] sm:$0xf]
      %v1971 = vunpack.c.l.bf16 %v1970
      %v1973 = vsel %vm1918, %v1953, 0
      %v1976 = vsel %vm1918, %v1954, 0
      %v1979 = vsel %vm1918, %v1955, 0
      %v1982 = vsel %vm1918, %v1956, 0
      %v1985 = vsel %vm1918, %v1957, 0
      %v1988 = vsel %vm1918, %v1958, 0
      %v1991 = vsel %vm1918, %v1959, 0
      %v1994 = vsel %vm1918, %v1960, 0
      %v1997 = vsel %vm1918, %v1961, 0
      %v2000 = vsel %vm1918, %v1962, 0
      %v2003 = vsel %vm1918, %v1963, 0
      %v2006 = vsel %vm1918, %v1964, 0
      %v2009 = vsel %vm1918, %v1965, 0
      %v2012 = vsel %vm1918, %v1966, 0
      %v2015 = vsel %vm1918, %v1967, 0
      %v2018 = vsel %vm1918, %v1968, 0
      %2020 = vmatprep.subr.mxu0 0.0
      %2021 = vmatpush1.msra.mxu0 %v1971
      %2022 = vmatprep.subr.mxu0 0.0
      %2023 = vmatpush1.msra.mxu0 0.0
      %2024 = vmatprep.subr.mxu0 0.0
      %2025 = vmatpush1.msra.mxu0 0.0
      %2026 = vmatprep.subr.mxu0 0.0
      %2027 = vmatpush1.msra.mxu0 0.0
      %2028 = vmatprep.subr.mxu0 0.0
      %2029 = vmatpush1.msra.mxu0 0.0
      %2030 = vmatprep.subr.mxu0 0.0
      %2031 = vmatpush1.msra.mxu0 0.0
      %2032 = vmatprep.subr.mxu0 0.0
      %2033 = vmatpush1.msra.mxu0 0.0
      %2034 = vmatprep.subr.mxu0 0.0
      %2035 = vmatpush1.msra.mxu0 0.0
      %2036 = vmatprep.subr.mxu0 0.0
      %2037 = vmatpush1.msra.mxu0 0.0
      %2038 = vmatprep.subr.mxu0 0.0
      %2039 = vmatpush1.msra.mxu0 0.0
      %2040 = vmatprep.subr.mxu0 0.0
      %2041 = vmatpush1.msra.mxu0 0.0
      %2042 = vmatprep.subr.mxu0 0.0
      %2043 = vmatpush1.msra.mxu0 0.0
      %2044 = vmatprep.subr.mxu0 0.0
      %2045 = vmatpush1.msra.mxu0 0.0
      %2046 = vmatprep.subr.mxu0 0.0
      %2047 = vmatpush1.msra.mxu0 0.0
      %2048 = vmatprep.subr.mxu0 0.0
      %2049 = vmatpush1.msra.mxu0 0.0
      %2050 = vmatprep.subr.mxu0 0.0
      %2051 = vmatpush1.msra.mxu0 0.0
      %2052 = vmatprep.subr.mxu0 0.0
      %2053 = vmatpush1.msra.mxu0 0.0
      %2054 = vmatprep.subr.mxu0 0.0
      %2055 = vmatpush1.msra.mxu0 0.0
      %2056 = vmatprep.subr.mxu0 0.0
      %2057 = vmatpush1.msra.mxu0 0.0
      %2058 = vmatprep.subr.mxu0 0.0
      %2059 = vmatpush1.msra.mxu0 0.0
      %2060 = vmatprep.subr.mxu0 0.0
      %2061 = vmatpush1.msra.mxu0 0.0
      %2062 = vmatprep.subr.mxu0 0.0
      %2063 = vmatpush1.msra.mxu0 0.0
      %2064 = vmatprep.subr.mxu0 0.0
      %2065 = vmatpush1.msra.mxu0 0.0
      %2066 = vmatprep.subr.mxu0 0.0
      %2067 = vmatpush1.msra.mxu0 0.0
      %2068 = vmatprep.subr.mxu0 0.0
      %2069 = vmatpush1.msra.mxu0 0.0
      %2070 = vmatprep.subr.mxu0 0.0
      %2071 = vmatpush1.msra.mxu0 0.0
      %2072 = vmatprep.subr.mxu0 0.0
      %2073 = vmatpush1.msra.mxu0 0.0
      %2074 = vmatprep.subr.mxu0 0.0
      %2075 = vmatpush1.msra.mxu0 0.0
      %2076 = vmatprep.subr.mxu0 0.0
      %2077 = vmatpush1.msra.mxu0 0.0
      %2078 = vmatprep.subr.mxu0 0.0
      %2079 = vmatpush1.msra.mxu0 0.0
      %2080 = vmatprep.subr.mxu0 0.0
      %2081 = vmatpush1.msra.mxu0 0.0
      %2082 = vmatprep.subr.mxu0 0.0
      %2083 = vmatpush1.msra.mxu0 0.0
      %2084 = vmatprep.mubr.f32.mxu0 0.0
      %2085 = vmatmul.mubr.f32.gmra.mrb[0].mxu0 %v1973
      %v2086 = vpop.f32.mrb[0].mxu0
      %v2087 = vadd.f32 0.0, %v2086
      %v2088 = vpop.f32.mrb[0].mxu0
      %2089 = vmatprep.mubr.f32.mxu0 0.0
      %2090 = vmatmul.mubr.f32.gmra.mrb[0].mxu0 %v1976
      %v2091 = vpop.f32.mrb[0].mxu0
      %v2092 = vadd.f32 0.0, %v2091
      %v2093 = vpop.f32.mrb[0].mxu0
      %2094 = vmatprep.mubr.f32.mxu0 0.0
      %2095 = vmatmul.mubr.f32.gmra.mrb[0].mxu0 %v1979
      %v2096 = vpop.f32.mrb[0].mxu0
      %v2097 = vadd.f32 0.0, %v2096
      %v2098 = vpop.f32.mrb[0].mxu0
      %2099 = vmatprep.mubr.f32.mxu0 0.0
      %2100 = vmatmul.mubr.f32.gmra.mrb[0].mxu0 %v1982
      %v2101 = vpop.f32.mrb[0].mxu0
      %v2102 = vadd.f32 0.0, %v2101
      %v2103 = vpop.f32.mrb[0].mxu0
      %2104 = vmatprep.mubr.f32.mxu0 0.0
      %2105 = vmatmul.mubr.f32.gmra.mrb[0].mxu0 %v1985
      %v2106 = vpop.f32.mrb[0].mxu0
      %v2107 = vadd.f32 0.0, %v2106
      %v2108 = vpop.f32.mrb[0].mxu0
      %2109 = vmatprep.mubr.f32.mxu0 0.0
      %2110 = vmatmul.mubr.f32.gmra.mrb[0].mxu0 %v1988
      %v2111 = vpop.f32.mrb[0].mxu0
      %v2112 = vadd.f32 0.0, %v2111
      %v2113 = vpop.f32.mrb[0].mxu0
      %2114 = vmatprep.mubr.f32.mxu0 0.0
      %2115 = vmatmul.mubr.f32.gmra.mrb[0].mxu0 %v1991
      %v2116 = vpop.f32.mrb[0].mxu0
      %v2117 = vadd.f32 0.0, %v2116
      %v2118 = vpop.f32.mrb[0].mxu0
      %2119 = vmatprep.mubr.f32.mxu0 0.0
      %2120 = vmatmul.mubr.f32.gmra.mrb[0].mxu0 %v1994
      %v2121 = vpop.f32.mrb[0].mxu0
      %v2122 = vadd.f32 0.0, %v2121
      %v2123 = vpop.f32.mrb[0].mxu0
      %2124 = vmatprep.mubr.f32.mxu0 0.0
      %2125 = vmatmul.mubr.f32.gmra.mrb[0].mxu0 %v1997
      %v2126 = vpop.f32.mrb[0].mxu0
      %v2127 = vadd.f32 0.0, %v2126
      %v2128 = vpop.f32.mrb[0].mxu0
      %2129 = vmatprep.mubr.f32.mxu0 0.0
      %2130 = vmatmul.mubr.f32.gmra.mrb[0].mxu0 %v2000
      %v2131 = vpop.f32.mrb[0].mxu0
      %v2132 = vadd.f32 0.0, %v2131
      %v2133 = vpop.f32.mrb[0].mxu0
      %2134 = vmatprep.mubr.f32.mxu0 0.0
      %2135 = vmatmul.mubr.f32.gmra.mrb[0].mxu0 %v2003
      %v2136 = vpop.f32.mrb[0].mxu0
      %v2137 = vadd.f32 0.0, %v2136
      %v2138 = vpop.f32.mrb[0].mxu0
      %2139 = vmatprep.mubr.f32.mxu0 0.0
      %2140 = vmatmul.mubr.f32.gmra.mrb[0].mxu0 %v2006
      %v2141 = vpop.f32.mrb[0].mxu0
      %v2142 = vadd.f32 0.0, %v2141
      %v2143 = vpop.f32.mrb[0].mxu0
      %2144 = vmatprep.mubr.f32.mxu0 0.0
      %2145 = vmatmul.mubr.f32.gmra.mrb[0].mxu0 %v2009
      %v2146 = vpop.f32.mrb[0].mxu0
      %v2147 = vadd.f32 0.0, %v2146
      %v2148 = vpop.f32.mrb[0].mxu0
      %2149 = vmatprep.mubr.f32.mxu0 0.0
      %2150 = vmatmul.mubr.f32.gmra.mrb[0].mxu0 %v2012
      %v2151 = vpop.f32.mrb[0].mxu0
      %v2152 = vadd.f32 0.0, %v2151
      %v2153 = vpop.f32.mrb[0].mxu0
      %2154 = vmatprep.mubr.f32.mxu0 0.0
      %2155 = vmatmul.mubr.f32.gmra.mrb[0].mxu0 %v2015
      %v2156 = vpop.f32.mrb[0].mxu0
      %v2157 = vadd.f32 0.0, %v2156
      %v2158 = vpop.f32.mrb[0].mxu0
      %2159 = vmatprep.mubr.f32.mxu0 0.0
      %2160 = vmatmul.mubr.f32.gmra.mrb[0].mxu0 %v2018
      %v2161 = vpop.f32.mrb[0].mxu0
      %v2162 = vadd.f32 0.0, %v2161
      %v2163 = vpop.f32.mrb[0].mxu0
      %2164 = vdwg.mxu0
      %v2166 = vsel %vm1918, %v1935, 0
      %v2169 = vsel %vm1918, %v1936, 0
      %v2172 = vsel %vm1918, %v1937, 0
      %v2175 = vsel %vm1918, %v1938, 0
      %v2178 = vsel %vm1918, %v1939, 0
      %v2181 = vsel %vm1918, %v1940, 0
      %v2184 = vsel %vm1918, %v1941, 0
      %v2187 = vsel %vm1918, %v1942, 0
      %v2190 = vsel %vm1918, %v1943, 0
      %v2193 = vsel %vm1918, %v1944, 0
      %v2196 = vsel %vm1918, %v1945, 0
      %v2199 = vsel %vm1918, %v1946, 0
      %v2202 = vsel %vm1918, %v1947, 0
      %v2205 = vsel %vm1918, %v1948, 0
      %v2208 = vsel %vm1918, %v1949, 0
      %v2211 = vsel %vm1918, %v1950, 0
      %2213 = vmatprep.subr.mxu0 0.0
      %2214 = vmatpush1.msra.mxu0 %v1952
      %2215 = vmatprep.subr.mxu0 0.0
      %2216 = vmatpush1.msra.mxu0 0.0
      %2217 = vmatprep.subr.mxu0 0.0
      %2218 = vmatpush1.msra.mxu0 0.0
      %2219 = vmatprep.subr.mxu0 0.0
      %2220 = vmatpush1.msra.mxu0 0.0
      %2221 = vmatprep.subr.mxu0 0.0
      %2222 = vmatpush1.msra.mxu0 0.0
      %2223 = vmatprep.subr.mxu0 0.0
      %2224 = vmatpush1.msra.mxu0 0.0
      %2225 = vmatprep.subr.mxu0 0.0
      %2226 = vmatpush1.msra.mxu0 0.0
      %2227 = vmatprep.subr.mxu0 0.0
      %2228 = vmatpush1.msra.mxu0 0.0
      %2229 = vmatprep.subr.mxu0 0.0
      %2230 = vmatpush1.msra.mxu0 0.0
      %2231 = vmatprep.subr.mxu0 0.0
      %2232 = vmatpush1.msra.mxu0 0.0
      %2233 = vmatprep.subr.mxu0 0.0
      %2234 = vmatpush1.msra.mxu0 0.0
      %2235 = vmatprep.subr.mxu0 0.0
      %2236 = vmatpush1.msra.mxu0 0.0
      %2237 = vmatprep.subr.mxu0 0.0
      %2238 = vmatpush1.msra.mxu0 0.0
      %2239 = vmatprep.subr.mxu0 0.0
      %2240 = vmatpush1.msra.mxu0 0.0
      %2241 = vmatprep.subr.mxu0 0.0
      %2242 = vmatpush1.msra.mxu0 0.0
      %2243 = vmatprep.subr.mxu0 0.0
      %2244 = vmatpush1.msra.mxu0 0.0
      %2245 = vmatprep.subr.mxu0 0.0
      %2246 = vmatpush1.msra.mxu0 0.0
      %2247 = vmatprep.subr.mxu0 0.0
      %2248 = vmatpush1.msra.mxu0 0.0
      %2249 = vmatprep.subr.mxu0 0.0
      %2250 = vmatpush1.msra.mxu0 0.0
      %2251 = vmatprep.subr.mxu0 0.0
      %2252 = vmatpush1.msra.mxu0 0.0
      %2253 = vmatprep.subr.mxu0 0.0
      %2254 = vmatpush1.msra.mxu0 0.0
      %2255 = vmatprep.subr.mxu0 0.0
      %2256 = vmatpush1.msra.mxu0 0.0
      %2257 = vmatprep.subr.mxu0 0.0
      %2258 = vmatpush1.msra.mxu0 0.0
      %2259 = vmatprep.subr.mxu0 0.0
      %2260 = vmatpush1.msra.mxu0 0.0
      %2261 = vmatprep.subr.mxu0 0.0
      %2262 = vmatpush1.msra.mxu0 0.0
      %2263 = vmatprep.subr.mxu0 0.0
      %2264 = vmatpush1.msra.mxu0 0.0
      %2265 = vmatprep.subr.mxu0 0.0
      %2266 = vmatpush1.msra.mxu0 0.0
      %2267 = vmatprep.subr.mxu0 0.0
      %2268 = vmatpush1.msra.mxu0 0.0
      %2269 = vmatprep.subr.mxu0 0.0
      %2270 = vmatpush1.msra.mxu0 0.0
      %2271 = vmatprep.subr.mxu0 0.0
      %2272 = vmatpush1.msra.mxu0 0.0
      %2273 = vmatprep.subr.mxu0 0.0
      %2274 = vmatpush1.msra.mxu0 0.0
      %2275 = vmatprep.subr.mxu0 0.0
      %2276 = vmatpush1.msra.mxu0 0.0
      %2277 = vmatprep.mubr.f32.mxu0 0.0
      %2278 = vmatmul.mubr.f32.gmra.mrb[0].mxu0 %v2166
      %v2279 = vpop.f32.mrb[0].mxu0
      %v2280 = vadd.f32 %v2087, %v2279
      %v2281 = vpop.f32.mrb[0].mxu0
      %2282 = vmatprep.mubr.f32.mxu0 0.0
      %2283 = vmatmul.mubr.f32.gmra.mrb[0].mxu0 %v2169
      %v2284 = vpop.f32.mrb[0].mxu0
      %v2285 = vadd.f32 %v2092, %v2284
      %v2286 = vpop.f32.mrb[0].mxu0
      %2287 = vmatprep.mubr.f32.mxu0 0.0
      %2288 = vmatmul.mubr.f32.gmra.mrb[0].mxu0 %v2172
      %v2289 = vpop.f32.mrb[0].mxu0
      %v2290 = vadd.f32 %v2097, %v2289
      %v2291 = vpop.f32.mrb[0].mxu0
      %2292 = vmatprep.mubr.f32.mxu0 0.0
      %2293 = vmatmul.mubr.f32.gmra.mrb[0].mxu0 %v2175
      %v2294 = vpop.f32.mrb[0].mxu0
      %v2295 = vadd.f32 %v2102, %v2294
      %v2296 = vpop.f32.mrb[0].mxu0
      %2297 = vmatprep.mubr.f32.mxu0 0.0
      %2298 = vmatmul.mubr.f32.gmra.mrb[0].mxu0 %v2178
      %v2299 = vpop.f32.mrb[0].mxu0
      %v2300 = vadd.f32 %v2107, %v2299
      %v2301 = vpop.f32.mrb[0].mxu0
      %2302 = vmatprep.mubr.f32.mxu0 0.0
      %2303 = vmatmul.mubr.f32.gmra.mrb[0].mxu0 %v2181
      %v2304 = vpop.f32.mrb[0].mxu0
      %v2305 = vadd.f32 %v2112, %v2304
      %v2306 = vpop.f32.mrb[0].mxu0
      %2307 = vmatprep.mubr.f32.mxu0 0.0
      %2308 = vmatmul.mubr.f32.gmra.mrb[0].mxu0 %v2184
      %v2309 = vpop.f32.mrb[0].mxu0
      %v2310 = vadd.f32 %v2117, %v2309
      %v2311 = vpop.f32.mrb[0].mxu0
      %2312 = vmatprep.mubr.f32.mxu0 0.0
      %2313 = vmatmul.mubr.f32.gmra.mrb[0].mxu0 %v2187
      %v2314 = vpop.f32.mrb[0].mxu0
      %v2315 = vadd.f32 %v2122, %v2314
      %v2316 = vpop.f32.mrb[0].mxu0
      %2317 = vmatprep.mubr.f32.mxu0 0.0
      %2318 = vmatmul.mubr.f32.gmra.mrb[0].mxu0 %v2190
      %v2319 = vpop.f32.mrb[0].mxu0
      %v2320 = vadd.f32 %v2127, %v2319
      %v2321 = vpop.f32.mrb[0].mxu0
      %2322 = vmatprep.mubr.f32.mxu0 0.0
      %2323 = vmatmul.mubr.f32.gmra.mrb[0].mxu0 %v2193
      %v2324 = vpop.f32.mrb[0].mxu0
      %v2325 = vadd.f32 %v2132, %v2324
      %v2326 = vpop.f32.mrb[0].mxu0
      %2327 = vmatprep.mubr.f32.mxu0 0.0
      %2328 = vmatmul.mubr.f32.gmra.mrb[0].mxu0 %v2196
      %v2329 = vpop.f32.mrb[0].mxu0
      %v2330 = vadd.f32 %v2137, %v2329
      %v2331 = vpop.f32.mrb[0].mxu0
      %2332 = vmatprep.mubr.f32.mxu0 0.0
      %2333 = vmatmul.mubr.f32.gmra.mrb[0].mxu0 %v2199
      %v2334 = vpop.f32.mrb[0].mxu0
      %v2335 = vadd.f32 %v2142, %v2334
      %v2336 = vpop.f32.mrb[0].mxu0
      %2337 = vmatprep.mubr.f32.mxu0 0.0
      %2338 = vmatmul.mubr.f32.gmra.mrb[0].mxu0 %v2202
      %v2339 = vpop.f32.mrb[0].mxu0
      %v2340 = vadd.f32 %v2147, %v2339
      %v2341 = vpop.f32.mrb[0].mxu0
      %2342 = vmatprep.mubr.f32.mxu0 0.0
      %2343 = vmatmul.mubr.f32.gmra.mrb[0].mxu0 %v2205
      %v2344 = vpop.f32.mrb[0].mxu0
      %v2345 = vadd.f32 %v2152, %v2344
      %v2346 = vpop.f32.mrb[0].mxu0
      %2347 = vmatprep.mubr.f32.mxu0 0.0
      %2348 = vmatmul.mubr.f32.gmra.mrb[0].mxu0 %v2208
      %v2349 = vpop.f32.mrb[0].mxu0
      %v2350 = vadd.f32 %v2157, %v2349
      %v2351 = vpop.f32.mrb[0].mxu0
      %2352 = vmatprep.mubr.f32.mxu0 0.0
      %2353 = vmatmul.mubr.f32.gmra.mrb[0].mxu0 %v2211
      %v2354 = vpop.f32.mrb[0].mxu0
      %v2355 = vadd.f32 %v2162, %v2354
      %v2356 = vpop.f32.mrb[0].mxu0
      %2357 = vdwg.mxu0
      %v2358 = vld [vmem:[#allocation2 + $0x8] sm:$0xff]
      %v2359 = vld [vmem:[#allocation2 + $0x10] sm:$0xff]
      %v2360 = vld [vmem:[#allocation2 + $0x28] sm:$0xff]
      %v2361 = vld [vmem:[#allocation2 + $0x30] sm:$0xff]
      %v2362 = vld [vmem:[#allocation2 + $0x48] sm:$0xff]
      %v2363 = vld [vmem:[#allocation2 + $0x50] sm:$0xff]
      %v2364 = vld [vmem:[#allocation2 + $0x68] sm:$0xff]
      %v2365 = vld [vmem:[#allocation2 + $0x70] sm:$0xff]
      %v2366 = vld [vmem:[#allocation2 + $0x88] sm:$0xff]
      %v2367 = vld [vmem:[#allocation2 + $0x90] sm:$0xff]
      %v2368 = vld [vmem:[#allocation2 + $0xa8] sm:$0xff]
      %v2369 = vld [vmem:[#allocation2 + $0xb0] sm:$0xff]
      %v2370 = vld [vmem:[#allocation2 + $0xc8] sm:$0xff]
      %v2371 = vld [vmem:[#allocation2 + $0xd0] sm:$0xff]
      %v2372 = vld [vmem:[#allocation2 + $0xe8] sm:$0xff]
      %v2373 = vld [vmem:[#allocation2 + $0xf0] sm:$0xff]
      %s2374 = scalar_lea.vmem %s3, 8
      %v2375 = vld [vmem:[%s2374] sm:$0xf]
      %v2376 = vunpack.c.l.bf16 %v2375
      %v2378 = vsel %vm1918, %v2358, 0
      %v2381 = vsel %vm1918, %v2359, 0
      %v2384 = vsel %vm1918, %v2360, 0
      %v2387 = vsel %vm1918, %v2361, 0
      %v2390 = vsel %vm1918, %v2362, 0
      %v2393 = vsel %vm1918, %v2363, 0
      %v2396 = vsel %vm1918, %v2364, 0
      %v2399 = vsel %vm1918, %v2365, 0
      %v2402 = vsel %vm1918, %v2366, 0
      %v2405 = vsel %vm1918, %v2367, 0
      %v2408 = vsel %vm1918, %v2368, 0
      %v2411 = vsel %vm1918, %v2369, 0
      %v2414 = vsel %vm1918, %v2370, 0
      %v2417 = vsel %vm1918, %v2371, 0
      %v2420 = vsel %vm1918, %v2372, 0
      %v2423 = vsel %vm1918, %v2373, 0
      %2425 = vmatprep.subr.mxu0 0.0
      %2426 = vmatpush1.msra.mxu0 %v2376
      %2427 = vmatprep.subr.mxu0 0.0
      %2428 = vmatpush1.msra.mxu0 0.0
      %2429 = vmatprep.subr.mxu0 0.0
      %2430 = vmatpush1.msra.mxu0 0.0
      %2431 = vmatprep.subr.mxu0 0.0
      %2432 = vmatpush1.msra.mxu0 0.0
      %2433 = vmatprep.subr.mxu0 0.0
      %2434 = vmatpush1.msra.mxu0 0.0
      %2435 = vmatprep.subr.mxu0 0.0
      %2436 = vmatpush1.msra.mxu0 0.0
      %2437 = vmatprep.subr.mxu0 0.0
      %2438 = vmatpush1.msra.mxu0 0.0
      %2439 = vmatprep.subr.mxu0 0.0
      %2440 = vmatpush1.msra.mxu0 0.0
      %2441 = vmatprep.subr.mxu0 0.0
      %2442 = vmatpush1.msra.mxu0 0.0
      %2443 = vmatprep.subr.mxu0 0.0
      %2444 = vmatpush1.msra.mxu0 0.0
      %2445 = vmatprep.subr.mxu0 0.0
      %2446 = vmatpush1.msra.mxu0 0.0
      %2447 = vmatprep.subr.mxu0 0.0
      %2448 = vmatpush1.msra.mxu0 0.0
      %2449 = vmatprep.subr.mxu0 0.0
      %2450 = vmatpush1.msra.mxu0 0.0
      %2451 = vmatprep.subr.mxu0 0.0
      %2452 = vmatpush1.msra.mxu0 0.0
      %2453 = vmatprep.subr.mxu0 0.0
      %2454 = vmatpush1.msra.mxu0 0.0
      %2455 = vmatprep.subr.mxu0 0.0
      %2456 = vmatpush1.msra.mxu0 0.0
      %2457 = vmatprep.subr.mxu0 0.0
      %2458 = vmatpush1.msra.mxu0 0.0
      %2459 = vmatprep.subr.mxu0 0.0
      %2460 = vmatpush1.msra.mxu0 0.0
      %2461 = vmatprep.subr.mxu0 0.0
      %2462 = vmatpush1.msra.mxu0 0.0
      %2463 = vmatprep.subr.mxu0 0.0
      %2464 = vmatpush1.msra.mxu0 0.0
      %2465 = vmatprep.subr.mxu0 0.0
      %2466 = vmatpush1.msra.mxu0 0.0
      %2467 = vmatprep.subr.mxu0 0.0
      %2468 = vmatpush1.msra.mxu0 0.0
      %2469 = vmatprep.subr.mxu0 0.0
      %2470 = vmatpush1.msra.mxu0 0.0
      %2471 = vmatprep.subr.mxu0 0.0
      %2472 = vmatpush1.msra.mxu0 0.0
      %2473 = vmatprep.subr.mxu0 0.0
      %2474 = vmatpush1.msra.mxu0 0.0
      %2475 = vmatprep.subr.mxu0 0.0
      %2476 = vmatpush1.msra.mxu0 0.0
      %2477 = vmatprep.subr.mxu0 0.0
      %2478 = vmatpush1.msra.mxu0 0.0
      %2479 = vmatprep.subr.mxu0 0.0
      %2480 = vmatpush1.msra.mxu0 0.0
      %2481 = vmatprep.subr.mxu0 0.0
      %2482 = vmatpush1.msra.mxu0 0.0
      %2483 = vmatprep.subr.mxu0 0.0
      %2484 = vmatpush1.msra.mxu0 0.0
      %2485 = vmatprep.subr.mxu0 0.0
      %2486 = vmatpush1.msra.mxu0 0.0
      %2487 = vmatprep.subr.mxu0 0.0
      %2488 = vmatpush1.msra.mxu0 0.0
      %2489 = vmatprep.mubr.f32.mxu0 0.0
      %2490 = vmatmul.mubr.f32.gmra.mrb[0].mxu0 %v2378
      %v2491 = vpop.f32.mrb[0].mxu0
      %v2492 = vadd.f32 0.0, %v2491
      %v2493 = vpop.f32.mrb[0].mxu0
      %2494 = vmatprep.mubr.f32.mxu0 0.0
      %2495 = vmatmul.mubr.f32.gmra.mrb[0].mxu0 %v2381
      %v2496 = vpop.f32.mrb[0].mxu0
      %v2497 = vadd.f32 0.0, %v2496
      %v2498 = vpop.f32.mrb[0].mxu0
      %2499 = vmatprep.mubr.f32.mxu0 0.0
      %2500 = vmatmul.mubr.f32.gmra.mrb[0].mxu0 %v2384
      %v2501 = vpop.f32.mrb[0].mxu0
      %v2502 = vadd.f32 0.0, %v2501
      %v2503 = vpop.f32.mrb[0].mxu0
      %2504 = vmatprep.mubr.f32.mxu0 0.0
      %2505 = vmatmul.mubr.f32.gmra.mrb[0].mxu0 %v2387
      %v2506 = vpop.f32.mrb[0].mxu0
      %v2507 = vadd.f32 0.0, %v2506
      %v2508 = vpop.f32.mrb[0].mxu0
      %2509 = vmatprep.mubr.f32.mxu0 0.0
      %2510 = vmatmul.mubr.f32.gmra.mrb[0].mxu0 %v2390
      %v2511 = vpop.f32.mrb[0].mxu0
      %v2512 = vadd.f32 0.0, %v2511
      %v2513 = vpop.f32.mrb[0].mxu0
      %2514 = vmatprep.mubr.f32.mxu0 0.0
      %2515 = vmatmul.mubr.f32.gmra.mrb[0].mxu0 %v2393
      %v2516 = vpop.f32.mrb[0].mxu0
      %v2517 = vadd.f32 0.0, %v2516
      %v2518 = vpop.f32.mrb[0].mxu0
      %2519 = vmatprep.mubr.f32.mxu0 0.0
      %2520 = vmatmul.mubr.f32.gmra.mrb[0].mxu0 %v2396
      %v2521 = vpop.f32.mrb[0].mxu0
      %v2522 = vadd.f32 0.0, %v2521
      %v2523 = vpop.f32.mrb[0].mxu0
      %2524 = vmatprep.mubr.f32.mxu0 0.0
      %2525 = vmatmul.mubr.f32.gmra.mrb[0].mxu0 %v2399
      %v2526 = vpop.f32.mrb[0].mxu0
      %v2527 = vadd.f32 0.0, %v2526
      %v2528 = vpop.f32.mrb[0].mxu0
      %2529 = vmatprep.mubr.f32.mxu0 0.0
      %2530 = vmatmul.mubr.f32.gmra.mrb[0].mxu0 %v2402
      %v2531 = vpop.f32.mrb[0].mxu0
      %v2532 = vadd.f32 0.0, %v2531
      %v2533 = vpop.f32.mrb[0].mxu0
      %2534 = vmatprep.mubr.f32.mxu0 0.0
      %2535 = vmatmul.mubr.f32.gmra.mrb[0].mxu0 %v2405
      %v2536 = vpop.f32.mrb[0].mxu0
      %v2537 = vadd.f32 0.0, %v2536
      %v2538 = vpop.f32.mrb[0].mxu0
      %2539 = vmatprep.mubr.f32.mxu0 0.0
      %2540 = vmatmul.mubr.f32.gmra.mrb[0].mxu0 %v2408
      %v2541 = vpop.f32.mrb[0].mxu0
      %v2542 = vadd.f32 0.0, %v2541
      %v2543 = vpop.f32.mrb[0].mxu0
      %2544 = vmatprep.mubr.f32.mxu0 0.0
      %2545 = vmatmul.mubr.f32.gmra.mrb[0].mxu0 %v2411
      %v2546 = vpop.f32.mrb[0].mxu0
      %v2547 = vadd.f32 0.0, %v2546
      %v2548 = vpop.f32.mrb[0].mxu0
      %2549 = vmatprep.mubr.f32.mxu0 0.0
      %2550 = vmatmul.mubr.f32.gmra.mrb[0].mxu0 %v2414
      %v2551 = vpop.f32.mrb[0].mxu0
      %v2552 = vadd.f32 0.0, %v2551
      %v2553 = vpop.f32.mrb[0].mxu0
      %2554 = vmatprep.mubr.f32.mxu0 0.0
      %2555 = vmatmul.mubr.f32.gmra.mrb[0].mxu0 %v2417
      %v2556 = vpop.f32.mrb[0].mxu0
      %v2557 = vadd.f32 0.0, %v2556
      %v2558 = vpop.f32.mrb[0].mxu0
      %2559 = vmatprep.mubr.f32.mxu0 0.0
      %2560 = vmatmul.mubr.f32.gmra.mrb[0].mxu0 %v2420
      %v2561 = vpop.f32.mrb[0].mxu0
      %v2562 = vadd.f32 0.0, %v2561
      %v2563 = vpop.f32.mrb[0].mxu0
      %2564 = vmatprep.mubr.f32.mxu0 0.0
      %2565 = vmatmul.mubr.f32.gmra.mrb[0].mxu0 %v2423
      %v2566 = vpop.f32.mrb[0].mxu0
      %v2567 = vadd.f32 0.0, %v2566
      %v2568 = vpop.f32.mrb[0].mxu0
      %2569 = vdwg.mxu0
      %v2570 = vadd.f32 %v2280, %v2492
      %v2571 = vadd.f32 %v2285, %v2497
      %v2572 = vadd.f32 %v2290, %v2502
      %v2573 = vadd.f32 %v2295, %v2507
      %v2574 = vadd.f32 %v2300, %v2512
      %v2575 = vadd.f32 %v2305, %v2517
      %v2576 = vadd.f32 %v2310, %v2522
      %v2577 = vadd.f32 %v2315, %v2527
      %v2578 = vadd.f32 %v2320, %v2532
      %v2579 = vadd.f32 %v2325, %v2537
      %v2580 = vadd.f32 %v2330, %v2542
      %v2581 = vadd.f32 %v2335, %v2547
      %v2582 = vadd.f32 %v2340, %v2552
      %v2583 = vadd.f32 %v2345, %v2557
      %v2584 = vadd.f32 %v2350, %v2562
      %v2585 = vadd.f32 %v2355, %v2567
      %v2586 = vld [vmem:[#allocation2 + $0x9] sm:$0xff]
      %v2587 = vld [vmem:[#allocation2 + $0x11] sm:$0xff]
      %v2588 = vld [vmem:[#allocation2 + $0x29] sm:$0xff]
      %v2589 = vld [vmem:[#allocation2 + $0x31] sm:$0xff]
      %v2590 = vld [vmem:[#allocation2 + $0x49] sm:$0xff]
      %v2591 = vld [vmem:[#allocation2 + $0x51] sm:$0xff]
      %v2592 = vld [vmem:[#allocation2 + $0x69] sm:$0xff]
      %v2593 = vld [vmem:[#allocation2 + $0x71] sm:$0xff]
      %v2594 = vld [vmem:[#allocation2 + $0x89] sm:$0xff]
      %v2595 = vld [vmem:[#allocation2 + $0x91] sm:$0xff]
      %v2596 = vld [vmem:[#allocation2 + $0xa9] sm:$0xff]
      %v2597 = vld [vmem:[#allocation2 + $0xb1] sm:$0xff]
      %v2598 = vld [vmem:[#allocation2 + $0xc9] sm:$0xff]
      %v2599 = vld [vmem:[#allocation2 + $0xd1] sm:$0xff]
      %v2600 = vld [vmem:[#allocation2 + $0xe9] sm:$0xff]
      %v2601 = vld [vmem:[#allocation2 + $0xf1] sm:$0xff]
      %s2602 = scalar_lea.vmem %s3, 12
      %v2603 = vld [vmem:[%s2602] sm:$0xf]
      %v2604 = vunpack.c.l.bf16 %v2603
      %v2606 = vsel %vm1918, %v2586, 0
      %v2609 = vsel %vm1918, %v2587, 0
      %v2612 = vsel %vm1918, %v2588, 0
      %v2615 = vsel %vm1918, %v2589, 0
      %v2618 = vsel %vm1918, %v2590, 0
      %v2621 = vsel %vm1918, %v2591, 0
      %v2624 = vsel %vm1918, %v2592, 0
      %v2627 = vsel %vm1918, %v2593, 0
      %v2630 = vsel %vm1918, %v2594, 0
      %v2633 = vsel %vm1918, %v2595, 0
      %v2636 = vsel %vm1918, %v2596, 0
      %v2639 = vsel %vm1918, %v2597, 0
      %v2642 = vsel %vm1918, %v2598, 0
      %v2645 = vsel %vm1918, %v2599, 0
      %v2648 = vsel %vm1918, %v2600, 0
      %v2651 = vsel %vm1918, %v2601, 0
      %2653 = vmatprep.subr.mxu0 0.0
      %2654 = vmatpush1.msra.mxu0 %v2604
      %2655 = vmatprep.subr.mxu0 0.0
      %2656 = vmatpush1.msra.mxu0 0.0
      %2657 = vmatprep.subr.mxu0 0.0
      %2658 = vmatpush1.msra.mxu0 0.0
      %2659 = vmatprep.subr.mxu0 0.0
      %2660 = vmatpush1.msra.mxu0 0.0
      %2661 = vmatprep.subr.mxu0 0.0
      %2662 = vmatpush1.msra.mxu0 0.0
      %2663 = vmatprep.subr.mxu0 0.0
      %2664 = vmatpush1.msra.mxu0 0.0
      %2665 = vmatprep.subr.mxu0 0.0
      %2666 = vmatpush1.msra.mxu0 0.0
      %2667 = vmatprep.subr.mxu0 0.0
      %2668 = vmatpush1.msra.mxu0 0.0
      %2669 = vmatprep.subr.mxu0 0.0
      %2670 = vmatpush1.msra.mxu0 0.0
      %2671 = vmatprep.subr.mxu0 0.0
      %2672 = vmatpush1.msra.mxu0 0.0
      %2673 = vmatprep.subr.mxu0 0.0
      %2674 = vmatpush1.msra.mxu0 0.0
      %2675 = vmatprep.subr.mxu0 0.0
      %2676 = vmatpush1.msra.mxu0 0.0
      %2677 = vmatprep.subr.mxu0 0.0
      %2678 = vmatpush1.msra.mxu0 0.0
      %2679 = vmatprep.subr.mxu0 0.0
      %2680 = vmatpush1.msra.mxu0 0.0
      %2681 = vmatprep.subr.mxu0 0.0
      %2682 = vmatpush1.msra.mxu0 0.0
      %2683 = vmatprep.subr.mxu0 0.0
      %2684 = vmatpush1.msra.mxu0 0.0
      %2685 = vmatprep.subr.mxu0 0.0
      %2686 = vmatpush1.msra.mxu0 0.0
      %2687 = vmatprep.subr.mxu0 0.0
      %2688 = vmatpush1.msra.mxu0 0.0
      %2689 = vmatprep.subr.mxu0 0.0
      %2690 = vmatpush1.msra.mxu0 0.0
      %2691 = vmatprep.subr.mxu0 0.0
      %2692 = vmatpush1.msra.mxu0 0.0
      %2693 = vmatprep.subr.mxu0 0.0
      %2694 = vmatpush1.msra.mxu0 0.0
      %2695 = vmatprep.subr.mxu0 0.0
      %2696 = vmatpush1.msra.mxu0 0.0
      %2697 = vmatprep.subr.mxu0 0.0
      %2698 = vmatpush1.msra.mxu0 0.0
      %2699 = vmatprep.subr.mxu0 0.0
      %2700 = vmatpush1.msra.mxu0 0.0
      %2701 = vmatprep.subr.mxu0 0.0
      %2702 = vmatpush1.msra.mxu0 0.0
      %2703 = vmatprep.subr.mxu0 0.0
      %2704 = vmatpush1.msra.mxu0 0.0
      %2705 = vmatprep.subr.mxu0 0.0
      %2706 = vmatpush1.msra.mxu0 0.0
      %2707 = vmatprep.subr.mxu0 0.0
      %2708 = vmatpush1.msra.mxu0 0.0
      %2709 = vmatprep.subr.mxu0 0.0
      %2710 = vmatpush1.msra.mxu0 0.0
      %2711 = vmatprep.subr.mxu0 0.0
      %2712 = vmatpush1.msra.mxu0 0.0
      %2713 = vmatprep.subr.mxu0 0.0
      %2714 = vmatpush1.msra.mxu0 0.0
      %2715 = vmatprep.subr.mxu0 0.0
      %2716 = vmatpush1.msra.mxu0 0.0
      %2717 = vmatprep.mubr.f32.mxu0 0.0
      %2718 = vmatmul.mubr.f32.gmra.mrb[0].mxu0 %v2606
      %v2719 = vpop.f32.mrb[0].mxu0
      %v2720 = vadd.f32 0.0, %v2719
      %v2721 = vpop.f32.mrb[0].mxu0
      %2722 = vmatprep.mubr.f32.mxu0 0.0
      %2723 = vmatmul.mubr.f32.gmra.mrb[0].mxu0 %v2609
      %v2724 = vpop.f32.mrb[0].mxu0
      %v2725 = vadd.f32 0.0, %v2724
      %v2726 = vpop.f32.mrb[0].mxu0
      %2727 = vmatprep.mubr.f32.mxu0 0.0
      %2728 = vmatmul.mubr.f32.gmra.mrb[0].mxu0 %v2612
      %v2729 = vpop.f32.mrb[0].mxu0
      %v2730 = vadd.f32 0.0, %v2729
      %v2731 = vpop.f32.mrb[0].mxu0
      %2732 = vmatprep.mubr.f32.mxu0 0.0
      %2733 = vmatmul.mubr.f32.gmra.mrb[0].mxu0 %v2615
      %v2734 = vpop.f32.mrb[0].mxu0
      %v2735 = vadd.f32 0.0, %v2734
      %v2736 = vpop.f32.mrb[0].mxu0
      %2737 = vmatprep.mubr.f32.mxu0 0.0
      %2738 = vmatmul.mubr.f32.gmra.mrb[0].mxu0 %v2618
      %v2739 = vpop.f32.mrb[0].mxu0
      %v2740 = vadd.f32 0.0, %v2739
      %v2741 = vpop.f32.mrb[0].mxu0
      %2742 = vmatprep.mubr.f32.mxu0 0.0
      %2743 = vmatmul.mubr.f32.gmra.mrb[0].mxu0 %v2621
      %v2744 = vpop.f32.mrb[0].mxu0
      %v2745 = vadd.f32 0.0, %v2744
      %v2746 = vpop.f32.mrb[0].mxu0
      %2747 = vmatprep.mubr.f32.mxu0 0.0
      %2748 = vmatmul.mubr.f32.gmra.mrb[0].mxu0 %v2624
      %v2749 = vpop.f32.mrb[0].mxu0
      %v2750 = vadd.f32 0.0, %v2749
      %v2751 = vpop.f32.mrb[0].mxu0
      %2752 = vmatprep.mubr.f32.mxu0 0.0
      %2753 = vmatmul.mubr.f32.gmra.mrb[0].mxu0 %v2627
      %v2754 = vpop.f32.mrb[0].mxu0
      %v2755 = vadd.f32 0.0, %v2754
      %v2756 = vpop.f32.mrb[0].mxu0
      %2757 = vmatprep.mubr.f32.mxu0 0.0
      %2758 = vmatmul.mubr.f32.gmra.mrb[0].mxu0 %v2630
      %v2759 = vpop.f32.mrb[0].mxu0
      %v2760 = vadd.f32 0.0, %v2759
      %v2761 = vpop.f32.mrb[0].mxu0
      %2762 = vmatprep.mubr.f32.mxu0 0.0
      %2763 = vmatmul.mubr.f32.gmra.mrb[0].mxu0 %v2633
      %v2764 = vpop.f32.mrb[0].mxu0
      %v2765 = vadd.f32 0.0, %v2764
      %v2766 = vpop.f32.mrb[0].mxu0
      %2767 = vmatprep.mubr.f32.mxu0 0.0
      %2768 = vmatmul.mubr.f32.gmra.mrb[0].mxu0 %v2636
      %v2769 = vpop.f32.mrb[0].mxu0
      %v2770 = vadd.f32 0.0, %v2769
      %v2771 = vpop.f32.mrb[0].mxu0
      %2772 = vmatprep.mubr.f32.mxu0 0.0
      %2773 = vmatmul.mubr.f32.gmra.mrb[0].mxu0 %v2639
      %v2774 = vpop.f32.mrb[0].mxu0
      %v2775 = vadd.f32 0.0, %v2774
      %v2776 = vpop.f32.mrb[0].mxu0
      %2777 = vmatprep.mubr.f32.mxu0 0.0
      %2778 = vmatmul.mubr.f32.gmra.mrb[0].mxu0 %v2642
      %v2779 = vpop.f32.mrb[0].mxu0
      %v2780 = vadd.f32 0.0, %v2779
      %v2781 = vpop.f32.mrb[0].mxu0
      %2782 = vmatprep.mubr.f32.mxu0 0.0
      %2783 = vmatmul.mubr.f32.gmra.mrb[0].mxu0 %v2645
      %v2784 = vpop.f32.mrb[0].mxu0
      %v2785 = vadd.f32 0.0, %v2784
      %v2786 = vpop.f32.mrb[0].mxu0
      %2787 = vmatprep.mubr.f32.mxu0 0.0
      %2788 = vmatmul.mubr.f32.gmra.mrb[0].mxu0 %v2648
      %v2789 = vpop.f32.mrb[0].mxu0
      %v2790 = vadd.f32 0.0, %v2789
      %v2791 = vpop.f32.mrb[0].mxu0
      %2792 = vmatprep.mubr.f32.mxu0 0.0
      %2793 = vmatmul.mubr.f32.gmra.mrb[0].mxu0 %v2651
      %v2794 = vpop.f32.mrb[0].mxu0
      %v2795 = vadd.f32 0.0, %v2794
      %v2796 = vpop.f32.mrb[0].mxu0
      %2797 = vdwg.mxu0
      %v2798 = vadd.f32 %v2570, %v2720
      %v2799 = vadd.f32 %v2571, %v2725
      %v2800 = vadd.f32 %v2572, %v2730
      %v2801 = vadd.f32 %v2573, %v2735
      %v2802 = vadd.f32 %v2574, %v2740
      %v2803 = vadd.f32 %v2575, %v2745
      %v2804 = vadd.f32 %v2576, %v2750
      %v2805 = vadd.f32 %v2577, %v2755
      %v2806 = vadd.f32 %v2578, %v2760
      %v2807 = vadd.f32 %v2579, %v2765
      %v2808 = vadd.f32 %v2580, %v2770
      %v2809 = vadd.f32 %v2581, %v2775
      %v2810 = vadd.f32 %v2582, %v2780
      %v2811 = vadd.f32 %v2583, %v2785
      %v2812 = vadd.f32 %v2584, %v2790
      %v2813 = vadd.f32 %v2585, %v2795
      %v2814 = vld [vmem:[#allocation2 + $0xa] sm:$0xff]
      %v2815 = vld [vmem:[#allocation2 + $0x12] sm:$0xff]
      %v2816 = vld [vmem:[#allocation2 + $0x2a] sm:$0xff]
      %v2817 = vld [vmem:[#allocation2 + $0x32] sm:$0xff]
      %v2818 = vld [vmem:[#allocation2 + $0x4a] sm:$0xff]
      %v2819 = vld [vmem:[#allocation2 + $0x52] sm:$0xff]
      %v2820 = vld [vmem:[#allocation2 + $0x6a] sm:$0xff]
      %v2821 = vld [vmem:[#allocation2 + $0x72] sm:$0xff]
      %v2822 = vld [vmem:[#allocation2 + $0x8a] sm:$0xff]
      %v2823 = vld [vmem:[#allocation2 + $0x92] sm:$0xff]
      %v2824 = vld [vmem:[#allocation2 + $0xaa] sm:$0xff]
      %v2825 = vld [vmem:[#allocation2 + $0xb2] sm:$0xff]
      %v2826 = vld [vmem:[#allocation2 + $0xca] sm:$0xff]
      %v2827 = vld [vmem:[#allocation2 + $0xd2] sm:$0xff]
      %v2828 = vld [vmem:[#allocation2 + $0xea] sm:$0xff]
      %v2829 = vld [vmem:[#allocation2 + $0xf2] sm:$0xff]
      %s2830 = scalar_lea.vmem %s3, 16
      %v2831 = vld [vmem:[%s2830] sm:$0xf]
      %v2832 = vunpack.c.l.bf16 %v2831
      %v2834 = vsel %vm1918, %v2814, 0
      %v2837 = vsel %vm1918, %v2815, 0
      %v2840 = vsel %vm1918, %v2816, 0
      %v2843 = vsel %vm1918, %v2817, 0
      %v2846 = vsel %vm1918, %v2818, 0
      %v2849 = vsel %vm1918, %v2819, 0
      %v2852 = vsel %vm1918, %v2820, 0
      %v2855 = vsel %vm1918, %v2821, 0
      %v2858 = vsel %vm1918, %v2822, 0
      %v2861 = vsel %vm1918, %v2823, 0
      %v2864 = vsel %vm1918, %v2824, 0
      %v2867 = vsel %vm1918, %v2825, 0
      %v2870 = vsel %vm1918, %v2826, 0
      %v2873 = vsel %vm1918, %v2827, 0
      %v2876 = vsel %vm1918, %v2828, 0
      %v2879 = vsel %vm1918, %v2829, 0
      %2881 = vmatprep.subr.mxu0 0.0
      %2882 = vmatpush1.msra.mxu0 %v2832
      %2883 = vmatprep.subr.mxu0 0.0
      %2884 = vmatpush1.msra.mxu0 0.0
      %2885 = vmatprep.subr.mxu0 0.0
      %2886 = vmatpush1.msra.mxu0 0.0
      %2887 = vmatprep.subr.mxu0 0.0
      %2888 = vmatpush1.msra.mxu0 0.0
      %2889 = vmatprep.subr.mxu0 0.0
      %2890 = vmatpush1.msra.mxu0 0.0
      %2891 = vmatprep.subr.mxu0 0.0
      %2892 = vmatpush1.msra.mxu0 0.0
      %2893 = vmatprep.subr.mxu0 0.0
      %2894 = vmatpush1.msra.mxu0 0.0
      %2895 = vmatprep.subr.mxu0 0.0
      %2896 = vmatpush1.msra.mxu0 0.0
      %2897 = vmatprep.subr.mxu0 0.0
      %2898 = vmatpush1.msra.mxu0 0.0
      %2899 = vmatprep.subr.mxu0 0.0
      %2900 = vmatpush1.msra.mxu0 0.0
      %2901 = vmatprep.subr.mxu0 0.0
      %2902 = vmatpush1.msra.mxu0 0.0
      %2903 = vmatprep.subr.mxu0 0.0
      %2904 = vmatpush1.msra.mxu0 0.0
      %2905 = vmatprep.subr.mxu0 0.0
      %2906 = vmatpush1.msra.mxu0 0.0
      %2907 = vmatprep.subr.mxu0 0.0
      %2908 = vmatpush1.msra.mxu0 0.0
      %2909 = vmatprep.subr.mxu0 0.0
      %2910 = vmatpush1.msra.mxu0 0.0
      %2911 = vmatprep.subr.mxu0 0.0
      %2912 = vmatpush1.msra.mxu0 0.0
      %2913 = vmatprep.subr.mxu0 0.0
      %2914 = vmatpush1.msra.mxu0 0.0
      %2915 = vmatprep.subr.mxu0 0.0
      %2916 = vmatpush1.msra.mxu0 0.0
      %2917 = vmatprep.subr.mxu0 0.0
      %2918 = vmatpush1.msra.mxu0 0.0
      %2919 = vmatprep.subr.mxu0 0.0
      %2920 = vmatpush1.msra.mxu0 0.0
      %2921 = vmatprep.subr.mxu0 0.0
      %2922 = vmatpush1.msra.mxu0 0.0
      %2923 = vmatprep.subr.mxu0 0.0
      %2924 = vmatpush1.msra.mxu0 0.0
      %2925 = vmatprep.subr.mxu0 0.0
      %2926 = vmatpush1.msra.mxu0 0.0
      %2927 = vmatprep.subr.mxu0 0.0
      %2928 = vmatpush1.msra.mxu0 0.0
      %2929 = vmatprep.subr.mxu0 0.0
      %2930 = vmatpush1.msra.mxu0 0.0
      %2931 = vmatprep.subr.mxu0 0.0
      %2932 = vmatpush1.msra.mxu0 0.0
      %2933 = vmatprep.subr.mxu0 0.0
      %2934 = vmatpush1.msra.mxu0 0.0
      %2935 = vmatprep.subr.mxu0 0.0
      %2936 = vmatpush1.msra.mxu0 0.0
      %2937 = vmatprep.subr.mxu0 0.0
      %2938 = vmatpush1.msra.mxu0 0.0
      %2939 = vmatprep.subr.mxu0 0.0
      %2940 = vmatpush1.msra.mxu0 0.0
      %2941 = vmatprep.subr.mxu0 0.0
      %2942 = vmatpush1.msra.mxu0 0.0
      %2943 = vmatprep.subr.mxu0 0.0
      %2944 = vmatpush1.msra.mxu0 0.0
      %2945 = vmatprep.mubr.f32.mxu0 0.0
      %2946 = vmatmul.mubr.f32.gmra.mrb[0].mxu0 %v2834
      %v2947 = vpop.f32.mrb[0].mxu0
      %v2948 = vadd.f32 0.0, %v2947
      %v2949 = vpop.f32.mrb[0].mxu0
      %2950 = vmatprep.mubr.f32.mxu0 0.0
      %2951 = vmatmul.mubr.f32.gmra.mrb[0].mxu0 %v2837
      %v2952 = vpop.f32.mrb[0].mxu0
      %v2953 = vadd.f32 0.0, %v2952
      %v2954 = vpop.f32.mrb[0].mxu0
      %2955 = vmatprep.mubr.f32.mxu0 0.0
      %2956 = vmatmul.mubr.f32.gmra.mrb[0].mxu0 %v2840
      %v2957 = vpop.f32.mrb[0].mxu0
      %v2958 = vadd.f32 0.0, %v2957
      %v2959 = vpop.f32.mrb[0].mxu0
      %2960 = vmatprep.mubr.f32.mxu0 0.0
      %2961 = vmatmul.mubr.f32.gmra.mrb[0].mxu0 %v2843
      %v2962 = vpop.f32.mrb[0].mxu0
      %v2963 = vadd.f32 0.0, %v2962
      %v2964 = vpop.f32.mrb[0].mxu0
      %2965 = vmatprep.mubr.f32.mxu0 0.0
      %2966 = vmatmul.mubr.f32.gmra.mrb[0].mxu0 %v2846
      %v2967 = vpop.f32.mrb[0].mxu0
      %v2968 = vadd.f32 0.0, %v2967
      %v2969 = vpop.f32.mrb[0].mxu0
      %2970 = vmatprep.mubr.f32.mxu0 0.0
      %2971 = vmatmul.mubr.f32.gmra.mrb[0].mxu0 %v2849
      %v2972 = vpop.f32.mrb[0].mxu0
      %v2973 = vadd.f32 0.0, %v2972
      %v2974 = vpop.f32.mrb[0].mxu0
      %2975 = vmatprep.mubr.f32.mxu0 0.0
      %2976 = vmatmul.mubr.f32.gmra.mrb[0].mxu0 %v2852
      %v2977 = vpop.f32.mrb[0].mxu0
      %v2978 = vadd.f32 0.0, %v2977
      %v2979 = vpop.f32.mrb[0].mxu0
      %2980 = vmatprep.mubr.f32.mxu0 0.0
      %2981 = vmatmul.mubr.f32.gmra.mrb[0].mxu0 %v2855
      %v2982 = vpop.f32.mrb[0].mxu0
      %v2983 = vadd.f32 0.0, %v2982
      %v2984 = vpop.f32.mrb[0].mxu0
      %2985 = vmatprep.mubr.f32.mxu0 0.0
      %2986 = vmatmul.mubr.f32.gmra.mrb[0].mxu0 %v2858
      %v2987 = vpop.f32.mrb[0].mxu0
      %v2988 = vadd.f32 0.0, %v2987
      %v2989 = vpop.f32.mrb[0].mxu0
      %2990 = vmatprep.mubr.f32.mxu0 0.0
      %2991 = vmatmul.mubr.f32.gmra.mrb[0].mxu0 %v2861
      %v2992 = vpop.f32.mrb[0].mxu0
      %v2993 = vadd.f32 0.0, %v2992
      %v2994 = vpop.f32.mrb[0].mxu0
      %2995 = vmatprep.mubr.f32.mxu0 0.0
      %2996 = vmatmul.mubr.f32.gmra.mrb[0].mxu0 %v2864
      %v2997 = vpop.f32.mrb[0].mxu0
      %v2998 = vadd.f32 0.0, %v2997
      %v2999 = vpop.f32.mrb[0].mxu0
      %3000 = vmatprep.mubr.f32.mxu0 0.0
      %3001 = vmatmul.mubr.f32.gmra.mrb[0].mxu0 %v2867
      %v3002 = vpop.f32.mrb[0].mxu0
      %v3003 = vadd.f32 0.0, %v3002
      %v3004 = vpop.f32.mrb[0].mxu0
      %3005 = vmatprep.mubr.f32.mxu0 0.0
      %3006 = vmatmul.mubr.f32.gmra.mrb[0].mxu0 %v2870
      %v3007 = vpop.f32.mrb[0].mxu0
      %v3008 = vadd.f32 0.0, %v3007
      %v3009 = vpop.f32.mrb[0].mxu0
      %3010 = vmatprep.mubr.f32.mxu0 0.0
      %3011 = vmatmul.mubr.f32.gmra.mrb[0].mxu0 %v2873
      %v3012 = vpop.f32.mrb[0].mxu0
      %v3013 = vadd.f32 0.0, %v3012
      %v3014 = vpop.f32.mrb[0].mxu0
      %3015 = vmatprep.mubr.f32.mxu0 0.0
      %3016 = vmatmul.mubr.f32.gmra.mrb[0].mxu0 %v2876
      %v3017 = vpop.f32.mrb[0].mxu0
      %v3018 = vadd.f32 0.0, %v3017
      %v3019 = vpop.f32.mrb[0].mxu0
      %3020 = vmatprep.mubr.f32.mxu0 0.0
      %3021 = vmatmul.mubr.f32.gmra.mrb[0].mxu0 %v2879
      %v3022 = vpop.f32.mrb[0].mxu0
      %v3023 = vadd.f32 0.0, %v3022
      %v3024 = vpop.f32.mrb[0].mxu0
      %3025 = vdwg.mxu0
      %v3026 = vadd.f32 %v2798, %v2948
      %v3027 = vadd.f32 %v2799, %v2953
      %v3028 = vadd.f32 %v2800, %v2958
      %v3029 = vadd.f32 %v2801, %v2963
      %v3030 = vadd.f32 %v2802, %v2968
      %v3031 = vadd.f32 %v2803, %v2973
      %v3032 = vadd.f32 %v2804, %v2978
      %v3033 = vadd.f32 %v2805, %v2983
      %v3034 = vadd.f32 %v2806, %v2988
      %v3035 = vadd.f32 %v2807, %v2993
      %v3036 = vadd.f32 %v2808, %v2998
      %v3037 = vadd.f32 %v2809, %v3003
      %v3038 = vadd.f32 %v2810, %v3008
      %v3039 = vadd.f32 %v2811, %v3013
      %v3040 = vadd.f32 %v2812, %v3018
      %v3041 = vadd.f32 %v2813, %v3023
      %v3042 = vld [vmem:[%s4] sm:$0x1]
      %v3044 = vlaneseq
      %v3045 = vshrl.u32 %v3044, 7
      %v3046 = vsub.s32 0, %v3045
      %v3047 = vrot.slane %v3042, %v3046
      %v3049 = vadd.f32 %v3026, %v3047
      %v3050 = vadd.f32 %v3027, %v3047
      %v3051 = vadd.f32 %v3028, %v3047
      %v3052 = vadd.f32 %v3029, %v3047
      %v3053 = vadd.f32 %v3030, %v3047
      %v3054 = vadd.f32 %v3031, %v3047
      %v3055 = vadd.f32 %v3032, %v3047
      %v3056 = vadd.f32 %v3033, %v3047
      %v3057 = vadd.f32 %v3034, %v3047
      %v3058 = vadd.f32 %v3035, %v3047
      %v3059 = vadd.f32 %v3036, %v3047
      %v3060 = vadd.f32 %v3037, %v3047
      %v3061 = vadd.f32 %v3038, %v3047
      %v3062 = vadd.f32 %v3039, %v3047
      %v3063 = vadd.f32 %v3040, %v3047
      %v3064 = vadd.f32 %v3041, %v3047
      %v3065 = vmax.f32 %v3049, 0.0
      %v3066 = vmax.f32 %v3050, 0.0
      %v3067 = vmax.f32 %v3051, 0.0
      %v3068 = vmax.f32 %v3052, 0.0
      %v3069 = vmax.f32 %v3053, 0.0
      %v3070 = vmax.f32 %v3054, 0.0
      %v3071 = vmax.f32 %v3055, 0.0
      %v3072 = vmax.f32 %v3056, 0.0
      %v3073 = vmax.f32 %v3057, 0.0
      %v3074 = vmax.f32 %v3058, 0.0
      %v3075 = vmax.f32 %v3059, 0.0
      %v3076 = vmax.f32 %v3060, 0.0
      %v3077 = vmax.f32 %v3061, 0.0
      %v3078 = vmax.f32 %v3062, 0.0
      %v3079 = vmax.f32 %v3063, 0.0
      %v3080 = vmax.f32 %v3064, 0.0
      %v3081 = vadd.f32 %v3065, %v663
      %v3082 = vadd.f32 %v3066, %v668
      %v3083 = vadd.f32 %v3067, %v673
      %v3084 = vadd.f32 %v3068, %v678
      %v3085 = vadd.f32 %v3069, %v683
      %v3086 = vadd.f32 %v3070, %v688
      %v3087 = vadd.f32 %v3071, %v693
      %v3088 = vadd.f32 %v3072, %v698
      %v3089 = vadd.f32 %v3073, %v703
      %v3090 = vadd.f32 %v3074, %v708
      %v3091 = vadd.f32 %v3075, %v713
      %v3092 = vadd.f32 %v3076, %v718
      %v3093 = vadd.f32 %v3077, %v723
      %v3094 = vadd.f32 %v3078, %v728
      %v3095 = vadd.f32 %v3079, %v733
      %v3096 = vadd.f32 %v3080, %v738
      %v3097 = vmax.f32 %v3081, 0.0
      %v3098 = vmax.f32 %v3082, 0.0
      %v3099 = vmax.f32 %v3083, 0.0
      %v3100 = vmax.f32 %v3084, 0.0
      %v3101 = vmax.f32 %v3085, 0.0
      %v3102 = vmax.f32 %v3086, 0.0
      %v3103 = vmax.f32 %v3087, 0.0
      %v3104 = vmax.f32 %v3088, 0.0
      %v3105 = vmax.f32 %v3089, 0.0
      %v3106 = vmax.f32 %v3090, 0.0
      %v3107 = vmax.f32 %v3091, 0.0
      %v3108 = vmax.f32 %v3092, 0.0
      %v3109 = vmax.f32 %v3093, 0.0
      %v3110 = vmax.f32 %v3094, 0.0
      %v3111 = vmax.f32 %v3095, 0.0
      %v3112 = vmax.f32 %v3096, 0.0
      %v3113 = vld [vmem:[%s11] sm:$0xf]
      %v3114 = vunpack.c.l.bf16 %v3113
      %v3115 = vld [vmem:[%s12] sm:$0x1]
      %v3117 = vlaneseq
      %v3118 = vshrl.u32 %v3117, 7
      %v3119 = vsub.s32 0, %v3118
      %v3120 = vrot.slane %v3115, %v3119
      %v3123 = vsel %vm1918, %v3097, 0
      %v3126 = vsel %vm1918, %v3098, 0
      %v3129 = vsel %vm1918, %v3099, 0
      %v3132 = vsel %vm1918, %v3100, 0
      %v3135 = vsel %vm1918, %v3101, 0
      %v3138 = vsel %vm1918, %v3102, 0
      %v3141 = vsel %vm1918, %v3103, 0
      %v3144 = vsel %vm1918, %v3104, 0
      %v3147 = vsel %vm1918, %v3105, 0
      %v3150 = vsel %vm1918, %v3106, 0
      %v3153 = vsel %vm1918, %v3107, 0
      %v3156 = vsel %vm1918, %v3108, 0
      %v3159 = vsel %vm1918, %v3109, 0
      %v3162 = vsel %vm1918, %v3110, 0
      %v3165 = vsel %vm1918, %v3111, 0
      %v3168 = vsel %vm1918, %v3112, 0
      %3170 = vmatprep.subr.mxu0 0.0
      %3171 = vmatpush1.msra.mxu0 %v3114
      %3172 = vmatprep.subr.mxu0 0.0
      %3173 = vmatpush1.msra.mxu0 0.0
      %3174 = vmatprep.subr.mxu0 0.0
      %3175 = vmatpush1.msra.mxu0 0.0
      %3176 = vmatprep.subr.mxu0 0.0
      %3177 = vmatpush1.msra.mxu0 0.0
      %3178 = vmatprep.subr.mxu0 0.0
      %3179 = vmatpush1.msra.mxu0 0.0
      %3180 = vmatprep.subr.mxu0 0.0
      %3181 = vmatpush1.msra.mxu0 0.0
      %3182 = vmatprep.subr.mxu0 0.0
      %3183 = vmatpush1.msra.mxu0 0.0
      %3184 = vmatprep.subr.mxu0 0.0
      %3185 = vmatpush1.msra.mxu0 0.0
      %3186 = vmatprep.subr.mxu0 0.0
      %3187 = vmatpush1.msra.mxu0 0.0
      %3188 = vmatprep.subr.mxu0 0.0
      %3189 = vmatpush1.msra.mxu0 0.0
      %3190 = vmatprep.subr.mxu0 0.0
      %3191 = vmatpush1.msra.mxu0 0.0
      %3192 = vmatprep.subr.mxu0 0.0
      %3193 = vmatpush1.msra.mxu0 0.0
      %3194 = vmatprep.subr.mxu0 0.0
      %3195 = vmatpush1.msra.mxu0 0.0
      %3196 = vmatprep.subr.mxu0 0.0
      %3197 = vmatpush1.msra.mxu0 0.0
      %3198 = vmatprep.subr.mxu0 0.0
      %3199 = vmatpush1.msra.mxu0 0.0
      %3200 = vmatprep.subr.mxu0 0.0
      %3201 = vmatpush1.msra.mxu0 0.0
      %3202 = vmatprep.subr.mxu0 0.0
      %3203 = vmatpush1.msra.mxu0 0.0
      %3204 = vmatprep.subr.mxu0 0.0
      %3205 = vmatpush1.msra.mxu0 0.0
      %3206 = vmatprep.subr.mxu0 0.0
      %3207 = vmatpush1.msra.mxu0 0.0
      %3208 = vmatprep.subr.mxu0 0.0
      %3209 = vmatpush1.msra.mxu0 0.0
      %3210 = vmatprep.subr.mxu0 0.0
      %3211 = vmatpush1.msra.mxu0 0.0
      %3212 = vmatprep.subr.mxu0 0.0
      %3213 = vmatpush1.msra.mxu0 0.0
      %3214 = vmatprep.subr.mxu0 0.0
      %3215 = vmatpush1.msra.mxu0 0.0
      %3216 = vmatprep.subr.mxu0 0.0
      %3217 = vmatpush1.msra.mxu0 0.0
      %3218 = vmatprep.subr.mxu0 0.0
      %3219 = vmatpush1.msra.mxu0 0.0
      %3220 = vmatprep.subr.mxu0 0.0
      %3221 = vmatpush1.msra.mxu0 0.0
      %3222 = vmatprep.subr.mxu0 0.0
      %3223 = vmatpush1.msra.mxu0 0.0
      %3224 = vmatprep.subr.mxu0 0.0
      %3225 = vmatpush1.msra.mxu0 0.0
      %3226 = vmatprep.subr.mxu0 0.0
      %3227 = vmatpush1.msra.mxu0 0.0
      %3228 = vmatprep.subr.mxu0 0.0
      %3229 = vmatpush1.msra.mxu0 0.0
      %3230 = vmatprep.subr.mxu0 0.0
      %3231 = vmatpush1.msra.mxu0 0.0
      %3232 = vmatprep.subr.mxu0 0.0
      %3233 = vmatpush1.msra.mxu0 0.0
      %3234 = vmatprep.mubr.f32.mxu0 0.0
      %3235 = vmatmul.mubr.f32.gmra.mrb[0].mxu0 %v3123
      %v3236 = vpop.f32.mrb[0].mxu0
      %v3237 = vadd.f32 %v3120, %v3236
      %v3238 = vpop.f32.mrb[0].mxu0
      %3239 = vmatprep.mubr.f32.mxu0 0.0
      %3240 = vmatmul.mubr.f32.gmra.mrb[0].mxu0 %v3126
      %v3241 = vpop.f32.mrb[0].mxu0
      %v3242 = vadd.f32 %v3120, %v3241
      %v3243 = vpop.f32.mrb[0].mxu0
      %3244 = vmatprep.mubr.f32.mxu0 0.0
      %3245 = vmatmul.mubr.f32.gmra.mrb[0].mxu0 %v3129
      %v3246 = vpop.f32.mrb[0].mxu0
      %v3247 = vadd.f32 %v3120, %v3246
      %v3248 = vpop.f32.mrb[0].mxu0
      %3249 = vmatprep.mubr.f32.mxu0 0.0
      %3250 = vmatmul.mubr.f32.gmra.mrb[0].mxu0 %v3132
      %v3251 = vpop.f32.mrb[0].mxu0
      %v3252 = vadd.f32 %v3120, %v3251
      %v3253 = vpop.f32.mrb[0].mxu0
      %3254 = vmatprep.mubr.f32.mxu0 0.0
      %3255 = vmatmul.mubr.f32.gmra.mrb[0].mxu0 %v3135
      %v3256 = vpop.f32.mrb[0].mxu0
      %v3257 = vadd.f32 %v3120, %v3256
      %v3258 = vpop.f32.mrb[0].mxu0
      %3259 = vmatprep.mubr.f32.mxu0 0.0
      %3260 = vmatmul.mubr.f32.gmra.mrb[0].mxu0 %v3138
      %v3261 = vpop.f32.mrb[0].mxu0
      %v3262 = vadd.f32 %v3120, %v3261
      %v3263 = vpop.f32.mrb[0].mxu0
      %3264 = vmatprep.mubr.f32.mxu0 0.0
      %3265 = vmatmul.mubr.f32.gmra.mrb[0].mxu0 %v3141
      %v3266 = vpop.f32.mrb[0].mxu0
      %v3267 = vadd.f32 %v3120, %v3266
      %v3268 = vpop.f32.mrb[0].mxu0
      %3269 = vmatprep.mubr.f32.mxu0 0.0
      %3270 = vmatmul.mubr.f32.gmra.mrb[0].mxu0 %v3144
      %v3271 = vpop.f32.mrb[0].mxu0
      %v3272 = vadd.f32 %v3120, %v3271
      %v3273 = vpop.f32.mrb[0].mxu0
      %3274 = vmatprep.mubr.f32.mxu0 0.0
      %3275 = vmatmul.mubr.f32.gmra.mrb[0].mxu0 %v3147
      %v3276 = vpop.f32.mrb[0].mxu0
      %v3277 = vadd.f32 %v3120, %v3276
      %v3278 = vpop.f32.mrb[0].mxu0
      %3279 = vmatprep.mubr.f32.mxu0 0.0
      %3280 = vmatmul.mubr.f32.gmra.mrb[0].mxu0 %v3150
      %v3281 = vpop.f32.mrb[0].mxu0
      %v3282 = vadd.f32 %v3120, %v3281
      %v3283 = vpop.f32.mrb[0].mxu0
      %3284 = vmatprep.mubr.f32.mxu0 0.0
      %3285 = vmatmul.mubr.f32.gmra.mrb[0].mxu0 %v3153
      %v3286 = vpop.f32.mrb[0].mxu0
      %v3287 = vadd.f32 %v3120, %v3286
      %v3288 = vpop.f32.mrb[0].mxu0
      %3289 = vmatprep.mubr.f32.mxu0 0.0
      %3290 = vmatmul.mubr.f32.gmra.mrb[0].mxu0 %v3156
      %v3291 = vpop.f32.mrb[0].mxu0
      %v3292 = vadd.f32 %v3120, %v3291
      %v3293 = vpop.f32.mrb[0].mxu0
      %3294 = vmatprep.mubr.f32.mxu0 0.0
      %3295 = vmatmul.mubr.f32.gmra.mrb[0].mxu0 %v3159
      %v3296 = vpop.f32.mrb[0].mxu0
      %v3297 = vadd.f32 %v3120, %v3296
      %v3298 = vpop.f32.mrb[0].mxu0
      %3299 = vmatprep.mubr.f32.mxu0 0.0
      %3300 = vmatmul.mubr.f32.gmra.mrb[0].mxu0 %v3162
      %v3301 = vpop.f32.mrb[0].mxu0
      %v3302 = vadd.f32 %v3120, %v3301
      %v3303 = vpop.f32.mrb[0].mxu0
      %3304 = vmatprep.mubr.f32.mxu0 0.0
      %3305 = vmatmul.mubr.f32.gmra.mrb[0].mxu0 %v3165
      %v3306 = vpop.f32.mrb[0].mxu0
      %v3307 = vadd.f32 %v3120, %v3306
      %v3308 = vpop.f32.mrb[0].mxu0
      %3309 = vmatprep.mubr.f32.mxu0 0.0
      %3310 = vmatmul.mubr.f32.gmra.mrb[0].mxu0 %v3168
      %v3311 = vpop.f32.mrb[0].mxu0
      %v3312 = vadd.f32 %v3120, %v3311
      %v3313 = vpop.f32.mrb[0].mxu0
      %3314 = vdwg.mxu0
      %3315 = vst.msk [vmem:[#allocation2 + $0x8] sm:$0xff] %vm1918, %v3097
      %3316 = vst.msk [vmem:[#allocation2 + $0x10] sm:$0xff] %vm1918, %v3098
      %3317 = vst.msk [vmem:[#allocation2 + $0x28] sm:$0xff] %vm1918, %v3099
      %3318 = vst.msk [vmem:[#allocation2 + $0x30] sm:$0xff] %vm1918, %v3100
      %3319 = vst.msk [vmem:[#allocation2 + $0x48] sm:$0xff] %vm1918, %v3101
      %3320 = vst.msk [vmem:[#allocation2 + $0x50] sm:$0xff] %vm1918, %v3102
      %3321 = vst.msk [vmem:[#allocation2 + $0x68] sm:$0xff] %vm1918, %v3103
      %3322 = vst.msk [vmem:[#allocation2 + $0x70] sm:$0xff] %vm1918, %v3104
      %3323 = vst.msk [vmem:[#allocation2 + $0x88] sm:$0xff] %vm1918, %v3105
      %3324 = vst.msk [vmem:[#allocation2 + $0x90] sm:$0xff] %vm1918, %v3106
      %3325 = vst.msk [vmem:[#allocation2 + $0xa8] sm:$0xff] %vm1918, %v3107
      %3326 = vst.msk [vmem:[#allocation2 + $0xb0] sm:$0xff] %vm1918, %v3108
      %3327 = vst.msk [vmem:[#allocation2 + $0xc8] sm:$0xff] %vm1918, %v3109
      %3328 = vst.msk [vmem:[#allocation2 + $0xd0] sm:$0xff] %vm1918, %v3110
      %3329 = vst.msk [vmem:[#allocation2 + $0xe8] sm:$0xff] %vm1918, %v3111
      %3330 = vst.msk [vmem:[#allocation2 + $0xf0] sm:$0xff] %vm1918, %v3112
      %v3331 = vld [vmem:[#allocation2 + $0x4] sm:$0xff]
      %v3332 = vld [vmem:[#allocation2 + $0xc] sm:$0xff]
      %v3333 = vld [vmem:[#allocation2 + $0x24] sm:$0xff]
      %v3334 = vld [vmem:[#allocation2 + $0x2c] sm:$0xff]
      %v3335 = vld [vmem:[#allocation2 + $0x44] sm:$0xff]
      %v3336 = vld [vmem:[#allocation2 + $0x4c] sm:$0xff]
      %v3337 = vld [vmem:[#allocation2 + $0x64] sm:$0xff]
      %v3338 = vld [vmem:[#allocation2 + $0x6c] sm:$0xff]
      %v3339 = vld [vmem:[#allocation2 + $0x84] sm:$0xff]
      %v3340 = vld [vmem:[#allocation2 + $0x8c] sm:$0xff]
      %v3341 = vld [vmem:[#allocation2 + $0xa4] sm:$0xff]
      %v3342 = vld [vmem:[#allocation2 + $0xac] sm:$0xff]
      %v3343 = vld [vmem:[#allocation2 + $0xc4] sm:$0xff]
      %v3344 = vld [vmem:[#allocation2 + $0xcc] sm:$0xff]
      %v3345 = vld [vmem:[#allocation2 + $0xe4] sm:$0xff]
      %v3346 = vld [vmem:[#allocation2 + $0xec] sm:$0xff]
      %v3347 = vld [vmem:[%s7] sm:$0xf]
      %v3348 = vunpack.c.l.bf16 %v3347
      %v3349 = vld [vmem:[#allocation2 + $0x6] sm:$0xff]
      %v3350 = vld [vmem:[#allocation2 + $0xe] sm:$0xff]
      %v3351 = vld [vmem:[#allocation2 + $0x26] sm:$0xff]
      %v3352 = vld [vmem:[#allocation2 + $0x2e] sm:$0xff]
      %v3353 = vld [vmem:[#allocation2 + $0x46] sm:$0xff]
      %v3354 = vld [vmem:[#allocation2 + $0x4e] sm:$0xff]
      %v3355 = vld [vmem:[#allocation2 + $0x66] sm:$0xff]
      %v3356 = vld [vmem:[#allocation2 + $0x6e] sm:$0xff]
      %v3357 = vld [vmem:[#allocation2 + $0x86] sm:$0xff]
      %v3358 = vld [vmem:[#allocation2 + $0x8e] sm:$0xff]
      %v3359 = vld [vmem:[#allocation2 + $0xa6] sm:$0xff]
      %v3360 = vld [vmem:[#allocation2 + $0xae] sm:$0xff]
      %v3361 = vld [vmem:[#allocation2 + $0xc6] sm:$0xff]
      %v3362 = vld [vmem:[#allocation2 + $0xce] sm:$0xff]
      %v3363 = vld [vmem:[#allocation2 + $0xe6] sm:$0xff]
      %v3364 = vld [vmem:[#allocation2 + $0xee] sm:$0xff]
      %s3365 = scalar_lea.vmem %s7, 4
      %v3366 = vld [vmem:[%s3365] sm:$0xf]
      %v3367 = vunpack.c.l.bf16 %v3366
      %v3369 = vsel %vm1918, %v3349, 0
      %v3372 = vsel %vm1918, %v3350, 0
      %v3375 = vsel %vm1918, %v3351, 0
      %v3378 = vsel %vm1918, %v3352, 0
      %v3381 = vsel %vm1918, %v3353, 0
      %v3384 = vsel %vm1918, %v3354, 0
      %v3387 = vsel %vm1918, %v3355, 0
      %v3390 = vsel %vm1918, %v3356, 0
      %v3393 = vsel %vm1918, %v3357, 0
      %v3396 = vsel %vm1918, %v3358, 0
      %v3399 = vsel %vm1918, %v3359, 0
      %v3402 = vsel %vm1918, %v3360, 0
      %v3405 = vsel %vm1918, %v3361, 0
      %v3408 = vsel %vm1918, %v3362, 0
      %v3411 = vsel %vm1918, %v3363, 0
      %v3414 = vsel %vm1918, %v3364, 0
      %3416 = vmatprep.subr.mxu0 0.0
      %3417 = vmatpush1.msra.mxu0 %v3367
      %3418 = vmatprep.subr.mxu0 0.0
      %3419 = vmatpush1.msra.mxu0 0.0
      %3420 = vmatprep.subr.mxu0 0.0
      %3421 = vmatpush1.msra.mxu0 0.0
      %3422 = vmatprep.subr.mxu0 0.0
      %3423 = vmatpush1.msra.mxu0 0.0
      %3424 = vmatprep.subr.mxu0 0.0
      %3425 = vmatpush1.msra.mxu0 0.0
      %3426 = vmatprep.subr.mxu0 0.0
      %3427 = vmatpush1.msra.mxu0 0.0
      %3428 = vmatprep.subr.mxu0 0.0
      %3429 = vmatpush1.msra.mxu0 0.0
      %3430 = vmatprep.subr.mxu0 0.0
      %3431 = vmatpush1.msra.mxu0 0.0
      %3432 = vmatprep.subr.mxu0 0.0
      %3433 = vmatpush1.msra.mxu0 0.0
      %3434 = vmatprep.subr.mxu0 0.0
      %3435 = vmatpush1.msra.mxu0 0.0
      %3436 = vmatprep.subr.mxu0 0.0
      %3437 = vmatpush1.msra.mxu0 0.0
      %3438 = vmatprep.subr.mxu0 0.0
      %3439 = vmatpush1.msra.mxu0 0.0
      %3440 = vmatprep.subr.mxu0 0.0
      %3441 = vmatpush1.msra.mxu0 0.0
      %3442 = vmatprep.subr.mxu0 0.0
      %3443 = vmatpush1.msra.mxu0 0.0
      %3444 = vmatprep.subr.mxu0 0.0
      %3445 = vmatpush1.msra.mxu0 0.0
      %3446 = vmatprep.subr.mxu0 0.0
      %3447 = vmatpush1.msra.mxu0 0.0
      %3448 = vmatprep.subr.mxu0 0.0
      %3449 = vmatpush1.msra.mxu0 0.0
      %3450 = vmatprep.subr.mxu0 0.0
      %3451 = vmatpush1.msra.mxu0 0.0
      %3452 = vmatprep.subr.mxu0 0.0
      %3453 = vmatpush1.msra.mxu0 0.0
      %3454 = vmatprep.subr.mxu0 0.0
      %3455 = vmatpush1.msra.mxu0 0.0
      %3456 = vmatprep.subr.mxu0 0.0
      %3457 = vmatpush1.msra.mxu0 0.0
      %3458 = vmatprep.subr.mxu0 0.0
      %3459 = vmatpush1.msra.mxu0 0.0
      %3460 = vmatprep.subr.mxu0 0.0
      %3461 = vmatpush1.msra.mxu0 0.0
      %3462 = vmatprep.subr.mxu0 0.0
      %3463 = vmatpush1.msra.mxu0 0.0
      %3464 = vmatprep.subr.mxu0 0.0
      %3465 = vmatpush1.msra.mxu0 0.0
      %3466 = vmatprep.subr.mxu0 0.0
      %3467 = vmatpush1.msra.mxu0 0.0
      %3468 = vmatprep.subr.mxu0 0.0
      %3469 = vmatpush1.msra.mxu0 0.0
      %3470 = vmatprep.subr.mxu0 0.0
      %3471 = vmatpush1.msra.mxu0 0.0
      %3472 = vmatprep.subr.mxu0 0.0
      %3473 = vmatpush1.msra.mxu0 0.0
      %3474 = vmatprep.subr.mxu0 0.0
      %3475 = vmatpush1.msra.mxu0 0.0
      %3476 = vmatprep.subr.mxu0 0.0
      %3477 = vmatpush1.msra.mxu0 0.0
      %3478 = vmatprep.subr.mxu0 0.0
      %3479 = vmatpush1.msra.mxu0 0.0
      %3480 = vmatprep.mubr.f32.mxu0 0.0
      %3481 = vmatmul.mubr.f32.gmra.mrb[0].mxu0 %v3369
      %v3482 = vpop.f32.mrb[0].mxu0
      %v3483 = vadd.f32 0.0, %v3482
      %v3484 = vpop.f32.mrb[0].mxu0
      %3485 = vmatprep.mubr.f32.mxu0 0.0
      %3486 = vmatmul.mubr.f32.gmra.mrb[0].mxu0 %v3372
      %v3487 = vpop.f32.mrb[0].mxu0
      %v3488 = vadd.f32 0.0, %v3487
      %v3489 = vpop.f32.mrb[0].mxu0
      %3490 = vmatprep.mubr.f32.mxu0 0.0
      %3491 = vmatmul.mubr.f32.gmra.mrb[0].mxu0 %v3375
      %v3492 = vpop.f32.mrb[0].mxu0
      %v3493 = vadd.f32 0.0, %v3492
      %v3494 = vpop.f32.mrb[0].mxu0
      %3495 = vmatprep.mubr.f32.mxu0 0.0
      %3496 = vmatmul.mubr.f32.gmra.mrb[0].mxu0 %v3378
      %v3497 = vpop.f32.mrb[0].mxu0
      %v3498 = vadd.f32 0.0, %v3497
      %v3499 = vpop.f32.mrb[0].mxu0
      %3500 = vmatprep.mubr.f32.mxu0 0.0
      %3501 = vmatmul.mubr.f32.gmra.mrb[0].mxu0 %v3381
      %v3502 = vpop.f32.mrb[0].mxu0
      %v3503 = vadd.f32 0.0, %v3502
      %v3504 = vpop.f32.mrb[0].mxu0
      %3505 = vmatprep.mubr.f32.mxu0 0.0
      %3506 = vmatmul.mubr.f32.gmra.mrb[0].mxu0 %v3384
      %v3507 = vpop.f32.mrb[0].mxu0
      %v3508 = vadd.f32 0.0, %v3507
      %v3509 = vpop.f32.mrb[0].mxu0
      %3510 = vmatprep.mubr.f32.mxu0 0.0
      %3511 = vmatmul.mubr.f32.gmra.mrb[0].mxu0 %v3387
      %v3512 = vpop.f32.mrb[0].mxu0
      %v3513 = vadd.f32 0.0, %v3512
      %v3514 = vpop.f32.mrb[0].mxu0
      %3515 = vmatprep.mubr.f32.mxu0 0.0
      %3516 = vmatmul.mubr.f32.gmra.mrb[0].mxu0 %v3390
      %v3517 = vpop.f32.mrb[0].mxu0
      %v3518 = vadd.f32 0.0, %v3517
      %v3519 = vpop.f32.mrb[0].mxu0
      %3520 = vmatprep.mubr.f32.mxu0 0.0
      %3521 = vmatmul.mubr.f32.gmra.mrb[0].mxu0 %v3393
      %v3522 = vpop.f32.mrb[0].mxu0
      %v3523 = vadd.f32 0.0, %v3522
      %v3524 = vpop.f32.mrb[0].mxu0
      %3525 = vmatprep.mubr.f32.mxu0 0.0
      %3526 = vmatmul.mubr.f32.gmra.mrb[0].mxu0 %v3396
      %v3527 = vpop.f32.mrb[0].mxu0
      %v3528 = vadd.f32 0.0, %v3527
      %v3529 = vpop.f32.mrb[0].mxu0
      %3530 = vmatprep.mubr.f32.mxu0 0.0
      %3531 = vmatmul.mubr.f32.gmra.mrb[0].mxu0 %v3399
      %v3532 = vpop.f32.mrb[0].mxu0
      %v3533 = vadd.f32 0.0, %v3532
      %v3534 = vpop.f32.mrb[0].mxu0
      %3535 = vmatprep.mubr.f32.mxu0 0.0
      %3536 = vmatmul.mubr.f32.gmra.mrb[0].mxu0 %v3402
      %v3537 = vpop.f32.mrb[0].mxu0
      %v3538 = vadd.f32 0.0, %v3537
      %v3539 = vpop.f32.mrb[0].mxu0
      %3540 = vmatprep.mubr.f32.mxu0 0.0
      %3541 = vmatmul.mubr.f32.gmra.mrb[0].mxu0 %v3405
      %v3542 = vpop.f32.mrb[0].mxu0
      %v3543 = vadd.f32 0.0, %v3542
      %v3544 = vpop.f32.mrb[0].mxu0
      %3545 = vmatprep.mubr.f32.mxu0 0.0
      %3546 = vmatmul.mubr.f32.gmra.mrb[0].mxu0 %v3408
      %v3547 = vpop.f32.mrb[0].mxu0
      %v3548 = vadd.f32 0.0, %v3547
      %v3549 = vpop.f32.mrb[0].mxu0
      %3550 = vmatprep.mubr.f32.mxu0 0.0
      %3551 = vmatmul.mubr.f32.gmra.mrb[0].mxu0 %v3411
      %v3552 = vpop.f32.mrb[0].mxu0
      %v3553 = vadd.f32 0.0, %v3552
      %v3554 = vpop.f32.mrb[0].mxu0
      %3555 = vmatprep.mubr.f32.mxu0 0.0
      %3556 = vmatmul.mubr.f32.gmra.mrb[0].mxu0 %v3414
      %v3557 = vpop.f32.mrb[0].mxu0
      %v3558 = vadd.f32 0.0, %v3557
      %v3559 = vpop.f32.mrb[0].mxu0
      %3560 = vdwg.mxu0
      %v3562 = vsel %vm1918, %v3331, 0
      %v3565 = vsel %vm1918, %v3332, 0
      %v3568 = vsel %vm1918, %v3333, 0
      %v3571 = vsel %vm1918, %v3334, 0
      %v3574 = vsel %vm1918, %v3335, 0
      %v3577 = vsel %vm1918, %v3336, 0
      %v3580 = vsel %vm1918, %v3337, 0
      %v3583 = vsel %vm1918, %v3338, 0
      %v3586 = vsel %vm1918, %v3339, 0
      %v3589 = vsel %vm1918, %v3340, 0
      %v3592 = vsel %vm1918, %v3341, 0
      %v3595 = vsel %vm1918, %v3342, 0
      %v3598 = vsel %vm1918, %v3343, 0
      %v3601 = vsel %vm1918, %v3344, 0
      %v3604 = vsel %vm1918, %v3345, 0
      %v3607 = vsel %vm1918, %v3346, 0
      %3609 = vmatprep.subr.mxu0 0.0
      %3610 = vmatpush1.msra.mxu0 %v3348
      %3611 = vmatprep.subr.mxu0 0.0
      %3612 = vmatpush1.msra.mxu0 0.0
      %3613 = vmatprep.subr.mxu0 0.0
      %3614 = vmatpush1.msra.mxu0 0.0
      %3615 = vmatprep.subr.mxu0 0.0
      %3616 = vmatpush1.msra.mxu0 0.0
      %3617 = vmatprep.subr.mxu0 0.0
      %3618 = vmatpush1.msra.mxu0 0.0
      %3619 = vmatprep.subr.mxu0 0.0
      %3620 = vmatpush1.msra.mxu0 0.0
      %3621 = vmatprep.subr.mxu0 0.0
      %3622 = vmatpush1.msra.mxu0 0.0
      %3623 = vmatprep.subr.mxu0 0.0
      %3624 = vmatpush1.msra.mxu0 0.0
      %3625 = vmatprep.subr.mxu0 0.0
      %3626 = vmatpush1.msra.mxu0 0.0
      %3627 = vmatprep.subr.mxu0 0.0
      %3628 = vmatpush1.msra.mxu0 0.0
      %3629 = vmatprep.subr.mxu0 0.0
      %3630 = vmatpush1.msra.mxu0 0.0
      %3631 = vmatprep.subr.mxu0 0.0
      %3632 = vmatpush1.msra.mxu0 0.0
      %3633 = vmatprep.subr.mxu0 0.0
      %3634 = vmatpush1.msra.mxu0 0.0
      %3635 = vmatprep.subr.mxu0 0.0
      %3636 = vmatpush1.msra.mxu0 0.0
      %3637 = vmatprep.subr.mxu0 0.0
      %3638 = vmatpush1.msra.mxu0 0.0
      %3639 = vmatprep.subr.mxu0 0.0
      %3640 = vmatpush1.msra.mxu0 0.0
      %3641 = vmatprep.subr.mxu0 0.0
      %3642 = vmatpush1.msra.mxu0 0.0
      %3643 = vmatprep.subr.mxu0 0.0
      %3644 = vmatpush1.msra.mxu0 0.0
      %3645 = vmatprep.subr.mxu0 0.0
      %3646 = vmatpush1.msra.mxu0 0.0
      %3647 = vmatprep.subr.mxu0 0.0
      %3648 = vmatpush1.msra.mxu0 0.0
      %3649 = vmatprep.subr.mxu0 0.0
      %3650 = vmatpush1.msra.mxu0 0.0
      %3651 = vmatprep.subr.mxu0 0.0
      %3652 = vmatpush1.msra.mxu0 0.0
      %3653 = vmatprep.subr.mxu0 0.0
      %3654 = vmatpush1.msra.mxu0 0.0
      %3655 = vmatprep.subr.mxu0 0.0
      %3656 = vmatpush1.msra.mxu0 0.0
      %3657 = vmatprep.subr.mxu0 0.0
      %3658 = vmatpush1.msra.mxu0 0.0
      %3659 = vmatprep.subr.mxu0 0.0
      %3660 = vmatpush1.msra.mxu0 0.0
      %3661 = vmatprep.subr.mxu0 0.0
      %3662 = vmatpush1.msra.mxu0 0.0
      %3663 = vmatprep.subr.mxu0 0.0
      %3664 = vmatpush1.msra.mxu0 0.0
      %3665 = vmatprep.subr.mxu0 0.0
      %3666 = vmatpush1.msra.mxu0 0.0
      %3667 = vmatprep.subr.mxu0 0.0
      %3668 = vmatpush1.msra.mxu0 0.0
      %3669 = vmatprep.subr.mxu0 0.0
      %3670 = vmatpush1.msra.mxu0 0.0
      %3671 = vmatprep.subr.mxu0 0.0
      %3672 = vmatpush1.msra.mxu0 0.0
      %3673 = vmatprep.mubr.f32.mxu0 0.0
      %3674 = vmatmul.mubr.f32.gmra.mrb[0].mxu0 %v3562
      %v3675 = vpop.f32.mrb[0].mxu0
      %v3676 = vadd.f32 %v3483, %v3675
      %v3677 = vpop.f32.mrb[0].mxu0
      %3678 = vmatprep.mubr.f32.mxu0 0.0
      %3679 = vmatmul.mubr.f32.gmra.mrb[0].mxu0 %v3565
      %v3680 = vpop.f32.mrb[0].mxu0
      %v3681 = vadd.f32 %v3488, %v3680
      %v3682 = vpop.f32.mrb[0].mxu0
      %3683 = vmatprep.mubr.f32.mxu0 0.0
      %3684 = vmatmul.mubr.f32.gmra.mrb[0].mxu0 %v3568
      %v3685 = vpop.f32.mrb[0].mxu0
      %v3686 = vadd.f32 %v3493, %v3685
      %v3687 = vpop.f32.mrb[0].mxu0
      %3688 = vmatprep.mubr.f32.mxu0 0.0
      %3689 = vmatmul.mubr.f32.gmra.mrb[0].mxu0 %v3571
      %v3690 = vpop.f32.mrb[0].mxu0
      %v3691 = vadd.f32 %v3498, %v3690
      %v3692 = vpop.f32.mrb[0].mxu0
      %3693 = vmatprep.mubr.f32.mxu0 0.0
      %3694 = vmatmul.mubr.f32.gmra.mrb[0].mxu0 %v3574
      %v3695 = vpop.f32.mrb[0].mxu0
      %v3696 = vadd.f32 %v3503, %v3695
      %v3697 = vpop.f32.mrb[0].mxu0
      %3698 = vmatprep.mubr.f32.mxu0 0.0
      %3699 = vmatmul.mubr.f32.gmra.mrb[0].mxu0 %v3577
      %v3700 = vpop.f32.mrb[0].mxu0
      %v3701 = vadd.f32 %v3508, %v3700
      %v3702 = vpop.f32.mrb[0].mxu0
      %3703 = vmatprep.mubr.f32.mxu0 0.0
      %3704 = vmatmul.mubr.f32.gmra.mrb[0].mxu0 %v3580
      %v3705 = vpop.f32.mrb[0].mxu0
      %v3706 = vadd.f32 %v3513, %v3705
      %v3707 = vpop.f32.mrb[0].mxu0
      %3708 = vmatprep.mubr.f32.mxu0 0.0
      %3709 = vmatmul.mubr.f32.gmra.mrb[0].mxu0 %v3583
      %v3710 = vpop.f32.mrb[0].mxu0
      %v3711 = vadd.f32 %v3518, %v3710
      %v3712 = vpop.f32.mrb[0].mxu0
      %3713 = vmatprep.mubr.f32.mxu0 0.0
      %3714 = vmatmul.mubr.f32.gmra.mrb[0].mxu0 %v3586
      %v3715 = vpop.f32.mrb[0].mxu0
      %v3716 = vadd.f32 %v3523, %v3715
      %v3717 = vpop.f32.mrb[0].mxu0
      %3718 = vmatprep.mubr.f32.mxu0 0.0
      %3719 = vmatmul.mubr.f32.gmra.mrb[0].mxu0 %v3589
      %v3720 = vpop.f32.mrb[0].mxu0
      %v3721 = vadd.f32 %v3528, %v3720
      %v3722 = vpop.f32.mrb[0].mxu0
      %3723 = vmatprep.mubr.f32.mxu0 0.0
      %3724 = vmatmul.mubr.f32.gmra.mrb[0].mxu0 %v3592
      %v3725 = vpop.f32.mrb[0].mxu0
      %v3726 = vadd.f32 %v3533, %v3725
      %v3727 = vpop.f32.mrb[0].mxu0
      %3728 = vmatprep.mubr.f32.mxu0 0.0
      %3729 = vmatmul.mubr.f32.gmra.mrb[0].mxu0 %v3595
      %v3730 = vpop.f32.mrb[0].mxu0
      %v3731 = vadd.f32 %v3538, %v3730
      %v3732 = vpop.f32.mrb[0].mxu0
      %3733 = vmatprep.mubr.f32.mxu0 0.0
      %3734 = vmatmul.mubr.f32.gmra.mrb[0].mxu0 %v3598
      %v3735 = vpop.f32.mrb[0].mxu0
      %v3736 = vadd.f32 %v3543, %v3735
      %v3737 = vpop.f32.mrb[0].mxu0
      %3738 = vmatprep.mubr.f32.mxu0 0.0
      %3739 = vmatmul.mubr.f32.gmra.mrb[0].mxu0 %v3601
      %v3740 = vpop.f32.mrb[0].mxu0
      %v3741 = vadd.f32 %v3548, %v3740
      %v3742 = vpop.f32.mrb[0].mxu0
      %3743 = vmatprep.mubr.f32.mxu0 0.0
      %3744 = vmatmul.mubr.f32.gmra.mrb[0].mxu0 %v3604
      %v3745 = vpop.f32.mrb[0].mxu0
      %v3746 = vadd.f32 %v3553, %v3745
      %v3747 = vpop.f32.mrb[0].mxu0
      %3748 = vmatprep.mubr.f32.mxu0 0.0
      %3749 = vmatmul.mubr.f32.gmra.mrb[0].mxu0 %v3607
      %v3750 = vpop.f32.mrb[0].mxu0
      %v3751 = vadd.f32 %v3558, %v3750
      %v3752 = vpop.f32.mrb[0].mxu0
      %3753 = vdwg.mxu0
      %v3754 = vld [vmem:[#allocation2 + $0x8] sm:$0xff]
      %v3755 = vld [vmem:[#allocation2 + $0x10] sm:$0xff]
      %v3756 = vld [vmem:[#allocation2 + $0x28] sm:$0xff]
      %v3757 = vld [vmem:[#allocation2 + $0x30] sm:$0xff]
      %v3758 = vld [vmem:[#allocation2 + $0x48] sm:$0xff]
      %v3759 = vld [vmem:[#allocation2 + $0x50] sm:$0xff]
      %v3760 = vld [vmem:[#allocation2 + $0x68] sm:$0xff]
      %v3761 = vld [vmem:[#allocation2 + $0x70] sm:$0xff]
      %v3762 = vld [vmem:[#allocation2 + $0x88] sm:$0xff]
      %v3763 = vld [vmem:[#allocation2 + $0x90] sm:$0xff]
      %v3764 = vld [vmem:[#allocation2 + $0xa8] sm:$0xff]
      %v3765 = vld [vmem:[#allocation2 + $0xb0] sm:$0xff]
      %v3766 = vld [vmem:[#allocation2 + $0xc8] sm:$0xff]
      %v3767 = vld [vmem:[#allocation2 + $0xd0] sm:$0xff]
      %v3768 = vld [vmem:[#allocation2 + $0xe8] sm:$0xff]
      %v3769 = vld [vmem:[#allocation2 + $0xf0] sm:$0xff]
      %s3770 = scalar_lea.vmem %s7, 8
      %v3771 = vld [vmem:[%s3770] sm:$0xf]
      %v3772 = vunpack.c.l.bf16 %v3771
      %v3774 = vsel %vm1918, %v3754, 0
      %v3777 = vsel %vm1918, %v3755, 0
      %v3780 = vsel %vm1918, %v3756, 0
      %v3783 = vsel %vm1918, %v3757, 0
      %v3786 = vsel %vm1918, %v3758, 0
      %v3789 = vsel %vm1918, %v3759, 0
      %v3792 = vsel %vm1918, %v3760, 0
      %v3795 = vsel %vm1918, %v3761, 0
      %v3798 = vsel %vm1918, %v3762, 0
      %v3801 = vsel %vm1918, %v3763, 0
      %v3804 = vsel %vm1918, %v3764, 0
      %v3807 = vsel %vm1918, %v3765, 0
      %v3810 = vsel %vm1918, %v3766, 0
      %v3813 = vsel %vm1918, %v3767, 0
      %v3816 = vsel %vm1918, %v3768, 0
      %v3819 = vsel %vm1918, %v3769, 0
      %3821 = vmatprep.subr.mxu0 0.0
      %3822 = vmatpush1.msra.mxu0 %v3772
      %3823 = vmatprep.subr.mxu0 0.0
      %3824 = vmatpush1.msra.mxu0 0.0
      %3825 = vmatprep.subr.mxu0 0.0
      %3826 = vmatpush1.msra.mxu0 0.0
      %3827 = vmatprep.subr.mxu0 0.0
      %3828 = vmatpush1.msra.mxu0 0.0
      %3829 = vmatprep.subr.mxu0 0.0
      %3830 = vmatpush1.msra.mxu0 0.0
      %3831 = vmatprep.subr.mxu0 0.0
      %3832 = vmatpush1.msra.mxu0 0.0
      %3833 = vmatprep.subr.mxu0 0.0
      %3834 = vmatpush1.msra.mxu0 0.0
      %3835 = vmatprep.subr.mxu0 0.0
      %3836 = vmatpush1.msra.mxu0 0.0
      %3837 = vmatprep.subr.mxu0 0.0
      %3838 = vmatpush1.msra.mxu0 0.0
      %3839 = vmatprep.subr.mxu0 0.0
      %3840 = vmatpush1.msra.mxu0 0.0
      %3841 = vmatprep.subr.mxu0 0.0
      %3842 = vmatpush1.msra.mxu0 0.0
      %3843 = vmatprep.subr.mxu0 0.0
      %3844 = vmatpush1.msra.mxu0 0.0
      %3845 = vmatprep.subr.mxu0 0.0
      %3846 = vmatpush1.msra.mxu0 0.0
      %3847 = vmatprep.subr.mxu0 0.0
      %3848 = vmatpush1.msra.mxu0 0.0
      %3849 = vmatprep.subr.mxu0 0.0
      %3850 = vmatpush1.msra.mxu0 0.0
      %3851 = vmatprep.subr.mxu0 0.0
      %3852 = vmatpush1.msra.mxu0 0.0
      %3853 = vmatprep.subr.mxu0 0.0
      %3854 = vmatpush1.msra.mxu0 0.0
      %3855 = vmatprep.subr.mxu0 0.0
      %3856 = vmatpush1.msra.mxu0 0.0
      %3857 = vmatprep.subr.mxu0 0.0
      %3858 = vmatpush1.msra.mxu0 0.0
      %3859 = vmatprep.subr.mxu0 0.0
      %3860 = vmatpush1.msra.mxu0 0.0
      %3861 = vmatprep.subr.mxu0 0.0
      %3862 = vmatpush1.msra.mxu0 0.0
      %3863 = vmatprep.subr.mxu0 0.0
      %3864 = vmatpush1.msra.mxu0 0.0
      %3865 = vmatprep.subr.mxu0 0.0
      %3866 = vmatpush1.msra.mxu0 0.0
      %3867 = vmatprep.subr.mxu0 0.0
      %3868 = vmatpush1.msra.mxu0 0.0
      %3869 = vmatprep.subr.mxu0 0.0
      %3870 = vmatpush1.msra.mxu0 0.0
      %3871 = vmatprep.subr.mxu0 0.0
      %3872 = vmatpush1.msra.mxu0 0.0
      %3873 = vmatprep.subr.mxu0 0.0
      %3874 = vmatpush1.msra.mxu0 0.0
      %3875 = vmatprep.subr.mxu0 0.0
      %3876 = vmatpush1.msra.mxu0 0.0
      %3877 = vmatprep.subr.mxu0 0.0
      %3878 = vmatpush1.msra.mxu0 0.0
      %3879 = vmatprep.subr.mxu0 0.0
      %3880 = vmatpush1.msra.mxu0 0.0
      %3881 = vmatprep.subr.mxu0 0.0
      %3882 = vmatpush1.msra.mxu0 0.0
      %3883 = vmatprep.subr.mxu0 0.0
      %3884 = vmatpush1.msra.mxu0 0.0
      %3885 = vmatprep.mubr.f32.mxu0 0.0
      %3886 = vmatmul.mubr.f32.gmra.mrb[0].mxu0 %v3774
      %v3887 = vpop.f32.mrb[0].mxu0
      %v3888 = vadd.f32 0.0, %v3887
      %v3889 = vpop.f32.mrb[0].mxu0
      %3890 = vmatprep.mubr.f32.mxu0 0.0
      %3891 = vmatmul.mubr.f32.gmra.mrb[0].mxu0 %v3777
      %v3892 = vpop.f32.mrb[0].mxu0
      %v3893 = vadd.f32 0.0, %v3892
      %v3894 = vpop.f32.mrb[0].mxu0
      %3895 = vmatprep.mubr.f32.mxu0 0.0
      %3896 = vmatmul.mubr.f32.gmra.mrb[0].mxu0 %v3780
      %v3897 = vpop.f32.mrb[0].mxu0
      %v3898 = vadd.f32 0.0, %v3897
      %v3899 = vpop.f32.mrb[0].mxu0
      %3900 = vmatprep.mubr.f32.mxu0 0.0
      %3901 = vmatmul.mubr.f32.gmra.mrb[0].mxu0 %v3783
      %v3902 = vpop.f32.mrb[0].mxu0
      %v3903 = vadd.f32 0.0, %v3902
      %v3904 = vpop.f32.mrb[0].mxu0
      %3905 = vmatprep.mubr.f32.mxu0 0.0
      %3906 = vmatmul.mubr.f32.gmra.mrb[0].mxu0 %v3786
      %v3907 = vpop.f32.mrb[0].mxu0
      %v3908 = vadd.f32 0.0, %v3907
      %v3909 = vpop.f32.mrb[0].mxu0
      %3910 = vmatprep.mubr.f32.mxu0 0.0
      %3911 = vmatmul.mubr.f32.gmra.mrb[0].mxu0 %v3789
      %v3912 = vpop.f32.mrb[0].mxu0
      %v3913 = vadd.f32 0.0, %v3912
      %v3914 = vpop.f32.mrb[0].mxu0
      %3915 = vmatprep.mubr.f32.mxu0 0.0
      %3916 = vmatmul.mubr.f32.gmra.mrb[0].mxu0 %v3792
      %v3917 = vpop.f32.mrb[0].mxu0
      %v3918 = vadd.f32 0.0, %v3917
      %v3919 = vpop.f32.mrb[0].mxu0
      %3920 = vmatprep.mubr.f32.mxu0 0.0
      %3921 = vmatmul.mubr.f32.gmra.mrb[0].mxu0 %v3795
      %v3922 = vpop.f32.mrb[0].mxu0
      %v3923 = vadd.f32 0.0, %v3922
      %v3924 = vpop.f32.mrb[0].mxu0
      %3925 = vmatprep.mubr.f32.mxu0 0.0
      %3926 = vmatmul.mubr.f32.gmra.mrb[0].mxu0 %v3798
      %v3927 = vpop.f32.mrb[0].mxu0
      %v3928 = vadd.f32 0.0, %v3927
      %v3929 = vpop.f32.mrb[0].mxu0
      %3930 = vmatprep.mubr.f32.mxu0 0.0
      %3931 = vmatmul.mubr.f32.gmra.mrb[0].mxu0 %v3801
      %v3932 = vpop.f32.mrb[0].mxu0
      %v3933 = vadd.f32 0.0, %v3932
      %v3934 = vpop.f32.mrb[0].mxu0
      %3935 = vmatprep.mubr.f32.mxu0 0.0
      %3936 = vmatmul.mubr.f32.gmra.mrb[0].mxu0 %v3804
      %v3937 = vpop.f32.mrb[0].mxu0
      %v3938 = vadd.f32 0.0, %v3937
      %v3939 = vpop.f32.mrb[0].mxu0
      %3940 = vmatprep.mubr.f32.mxu0 0.0
      %3941 = vmatmul.mubr.f32.gmra.mrb[0].mxu0 %v3807
      %v3942 = vpop.f32.mrb[0].mxu0
      %v3943 = vadd.f32 0.0, %v3942
      %v3944 = vpop.f32.mrb[0].mxu0
      %3945 = vmatprep.mubr.f32.mxu0 0.0
      %3946 = vmatmul.mubr.f32.gmra.mrb[0].mxu0 %v3810
      %v3947 = vpop.f32.mrb[0].mxu0
      %v3948 = vadd.f32 0.0, %v3947
      %v3949 = vpop.f32.mrb[0].mxu0
      %3950 = vmatprep.mubr.f32.mxu0 0.0
      %3951 = vmatmul.mubr.f32.gmra.mrb[0].mxu0 %v3813
      %v3952 = vpop.f32.mrb[0].mxu0
      %v3953 = vadd.f32 0.0, %v3952
      %v3954 = vpop.f32.mrb[0].mxu0
      %3955 = vmatprep.mubr.f32.mxu0 0.0
      %3956 = vmatmul.mubr.f32.gmra.mrb[0].mxu0 %v3816
      %v3957 = vpop.f32.mrb[0].mxu0
      %v3958 = vadd.f32 0.0, %v3957
      %v3959 = vpop.f32.mrb[0].mxu0
      %3960 = vmatprep.mubr.f32.mxu0 0.0
      %3961 = vmatmul.mubr.f32.gmra.mrb[0].mxu0 %v3819
      %v3962 = vpop.f32.mrb[0].mxu0
      %v3963 = vadd.f32 0.0, %v3962
      %v3964 = vpop.f32.mrb[0].mxu0
      %3965 = vdwg.mxu0
      %v3966 = vadd.f32 %v3676, %v3888
      %v3967 = vadd.f32 %v3681, %v3893
      %v3968 = vadd.f32 %v3686, %v3898
      %v3969 = vadd.f32 %v3691, %v3903
      %v3970 = vadd.f32 %v3696, %v3908
      %v3971 = vadd.f32 %v3701, %v3913
      %v3972 = vadd.f32 %v3706, %v3918
      %v3973 = vadd.f32 %v3711, %v3923
      %v3974 = vadd.f32 %v3716, %v3928
      %v3975 = vadd.f32 %v3721, %v3933
      %v3976 = vadd.f32 %v3726, %v3938
      %v3977 = vadd.f32 %v3731, %v3943
      %v3978 = vadd.f32 %v3736, %v3948
      %v3979 = vadd.f32 %v3741, %v3953
      %v3980 = vadd.f32 %v3746, %v3958
      %v3981 = vadd.f32 %v3751, %v3963
      %v3982 = vld [vmem:[#allocation2 + $0xa] sm:$0xff]
      %v3983 = vld [vmem:[#allocation2 + $0x12] sm:$0xff]
      %v3984 = vld [vmem:[#allocation2 + $0x2a] sm:$0xff]
      %v3985 = vld [vmem:[#allocation2 + $0x32] sm:$0xff]
      %v3986 = vld [vmem:[#allocation2 + $0x4a] sm:$0xff]
      %v3987 = vld [vmem:[#allocation2 + $0x52] sm:$0xff]
      %v3988 = vld [vmem:[#allocation2 + $0x6a] sm:$0xff]
      %v3989 = vld [vmem:[#allocation2 + $0x72] sm:$0xff]
      %v3990 = vld [vmem:[#allocation2 + $0x8a] sm:$0xff]
      %v3991 = vld [vmem:[#allocation2 + $0x92] sm:$0xff]
      %v3992 = vld [vmem:[#allocation2 + $0xaa] sm:$0xff]
      %v3993 = vld [vmem:[#allocation2 + $0xb2] sm:$0xff]
      %v3994 = vld [vmem:[#allocation2 + $0xca] sm:$0xff]
      %v3995 = vld [vmem:[#allocation2 + $0xd2] sm:$0xff]
      %v3996 = vld [vmem:[#allocation2 + $0xea] sm:$0xff]
      %v3997 = vld [vmem:[#allocation2 + $0xf2] sm:$0xff]
      %s3998 = scalar_lea.vmem %s7, 12
      %v3999 = vld [vmem:[%s3998] sm:$0xf]
      %v4000 = vunpack.c.l.bf16 %v3999
      %v4002 = vsel %vm1918, %v3982, 0
      %v4005 = vsel %vm1918, %v3983, 0
      %v4008 = vsel %vm1918, %v3984, 0
      %v4011 = vsel %vm1918, %v3985, 0
      %v4014 = vsel %vm1918, %v3986, 0
      %v4017 = vsel %vm1918, %v3987, 0
      %v4020 = vsel %vm1918, %v3988, 0
      %v4023 = vsel %vm1918, %v3989, 0
      %v4026 = vsel %vm1918, %v3990, 0
      %v4029 = vsel %vm1918, %v3991, 0
      %v4032 = vsel %vm1918, %v3992, 0
      %v4035 = vsel %vm1918, %v3993, 0
      %v4038 = vsel %vm1918, %v3994, 0
      %v4041 = vsel %vm1918, %v3995, 0
      %v4044 = vsel %vm1918, %v3996, 0
      %v4047 = vsel %vm1918, %v3997, 0
      %4049 = vmatprep.subr.mxu0 0.0
      %4050 = vmatpush1.msra.mxu0 %v4000
      %4051 = vmatprep.subr.mxu0 0.0
      %4052 = vmatpush1.msra.mxu0 0.0
      %4053 = vmatprep.subr.mxu0 0.0
      %4054 = vmatpush1.msra.mxu0 0.0
      %4055 = vmatprep.subr.mxu0 0.0
      %4056 = vmatpush1.msra.mxu0 0.0
      %4057 = vmatprep.subr.mxu0 0.0
      %4058 = vmatpush1.msra.mxu0 0.0
      %4059 = vmatprep.subr.mxu0 0.0
      %4060 = vmatpush1.msra.mxu0 0.0
      %4061 = vmatprep.subr.mxu0 0.0
      %4062 = vmatpush1.msra.mxu0 0.0
      %4063 = vmatprep.subr.mxu0 0.0
      %4064 = vmatpush1.msra.mxu0 0.0
      %4065 = vmatprep.subr.mxu0 0.0
      %4066 = vmatpush1.msra.mxu0 0.0
      %4067 = vmatprep.subr.mxu0 0.0
      %4068 = vmatpush1.msra.mxu0 0.0
      %4069 = vmatprep.subr.mxu0 0.0
      %4070 = vmatpush1.msra.mxu0 0.0
      %4071 = vmatprep.subr.mxu0 0.0
      %4072 = vmatpush1.msra.mxu0 0.0
      %4073 = vmatprep.subr.mxu0 0.0
      %4074 = vmatpush1.msra.mxu0 0.0
      %4075 = vmatprep.subr.mxu0 0.0
      %4076 = vmatpush1.msra.mxu0 0.0
      %4077 = vmatprep.subr.mxu0 0.0
      %4078 = vmatpush1.msra.mxu0 0.0
      %4079 = vmatprep.subr.mxu0 0.0
      %4080 = vmatpush1.msra.mxu0 0.0
      %4081 = vmatprep.subr.mxu0 0.0
      %4082 = vmatpush1.msra.mxu0 0.0
      %4083 = vmatprep.subr.mxu0 0.0
      %4084 = vmatpush1.msra.mxu0 0.0
      %4085 = vmatprep.subr.mxu0 0.0
      %4086 = vmatpush1.msra.mxu0 0.0
      %4087 = vmatprep.subr.mxu0 0.0
      %4088 = vmatpush1.msra.mxu0 0.0
      %4089 = vmatprep.subr.mxu0 0.0
      %4090 = vmatpush1.msra.mxu0 0.0
      %4091 = vmatprep.subr.mxu0 0.0
      %4092 = vmatpush1.msra.mxu0 0.0
      %4093 = vmatprep.subr.mxu0 0.0
      %4094 = vmatpush1.msra.mxu0 0.0
      %4095 = vmatprep.subr.mxu0 0.0
      %4096 = vmatpush1.msra.mxu0 0.0
      %4097 = vmatprep.subr.mxu0 0.0
      %4098 = vmatpush1.msra.mxu0 0.0
      %4099 = vmatprep.subr.mxu0 0.0
      %4100 = vmatpush1.msra.mxu0 0.0
      %4101 = vmatprep.subr.mxu0 0.0
      %4102 = vmatpush1.msra.mxu0 0.0
      %4103 = vmatprep.subr.mxu0 0.0
      %4104 = vmatpush1.msra.mxu0 0.0
      %4105 = vmatprep.subr.mxu0 0.0
      %4106 = vmatpush1.msra.mxu0 0.0
      %4107 = vmatprep.subr.mxu0 0.0
      %4108 = vmatpush1.msra.mxu0 0.0
      %4109 = vmatprep.subr.mxu0 0.0
      %4110 = vmatpush1.msra.mxu0 0.0
      %4111 = vmatprep.subr.mxu0 0.0
      %4112 = vmatpush1.msra.mxu0 0.0
      %4113 = vmatprep.mubr.f32.mxu0 0.0
      %4114 = vmatmul.mubr.f32.gmra.mrb[0].mxu0 %v4002
      %v4115 = vpop.f32.mrb[0].mxu0
      %v4116 = vadd.f32 0.0, %v4115
      %v4117 = vpop.f32.mrb[0].mxu0
      %4118 = vmatprep.mubr.f32.mxu0 0.0
      %4119 = vmatmul.mubr.f32.gmra.mrb[0].mxu0 %v4005
      %v4120 = vpop.f32.mrb[0].mxu0
      %v4121 = vadd.f32 0.0, %v4120
      %v4122 = vpop.f32.mrb[0].mxu0
      %4123 = vmatprep.mubr.f32.mxu0 0.0
      %4124 = vmatmul.mubr.f32.gmra.mrb[0].mxu0 %v4008
      %v4125 = vpop.f32.mrb[0].mxu0
      %v4126 = vadd.f32 0.0, %v4125
      %v4127 = vpop.f32.mrb[0].mxu0
      %4128 = vmatprep.mubr.f32.mxu0 0.0
      %4129 = vmatmul.mubr.f32.gmra.mrb[0].mxu0 %v4011
      %v4130 = vpop.f32.mrb[0].mxu0
      %v4131 = vadd.f32 0.0, %v4130
      %v4132 = vpop.f32.mrb[0].mxu0
      %4133 = vmatprep.mubr.f32.mxu0 0.0
      %4134 = vmatmul.mubr.f32.gmra.mrb[0].mxu0 %v4014
      %v4135 = vpop.f32.mrb[0].mxu0
      %v4136 = vadd.f32 0.0, %v4135
      %v4137 = vpop.f32.mrb[0].mxu0
      %4138 = vmatprep.mubr.f32.mxu0 0.0
      %4139 = vmatmul.mubr.f32.gmra.mrb[0].mxu0 %v4017
      %v4140 = vpop.f32.mrb[0].mxu0
      %v4141 = vadd.f32 0.0, %v4140
      %v4142 = vpop.f32.mrb[0].mxu0
      %4143 = vmatprep.mubr.f32.mxu0 0.0
      %4144 = vmatmul.mubr.f32.gmra.mrb[0].mxu0 %v4020
      %v4145 = vpop.f32.mrb[0].mxu0
      %v4146 = vadd.f32 0.0, %v4145
      %v4147 = vpop.f32.mrb[0].mxu0
      %4148 = vmatprep.mubr.f32.mxu0 0.0
      %4149 = vmatmul.mubr.f32.gmra.mrb[0].mxu0 %v4023
      %v4150 = vpop.f32.mrb[0].mxu0
      %v4151 = vadd.f32 0.0, %v4150
      %v4152 = vpop.f32.mrb[0].mxu0
      %4153 = vmatprep.mubr.f32.mxu0 0.0
      %4154 = vmatmul.mubr.f32.gmra.mrb[0].mxu0 %v4026
      %v4155 = vpop.f32.mrb[0].mxu0
      %v4156 = vadd.f32 0.0, %v4155
      %v4157 = vpop.f32.mrb[0].mxu0
      %4158 = vmatprep.mubr.f32.mxu0 0.0
      %4159 = vmatmul.mubr.f32.gmra.mrb[0].mxu0 %v4029
      %v4160 = vpop.f32.mrb[0].mxu0
      %v4161 = vadd.f32 0.0, %v4160
      %v4162 = vpop.f32.mrb[0].mxu0
      %4163 = vmatprep.mubr.f32.mxu0 0.0
      %4164 = vmatmul.mubr.f32.gmra.mrb[0].mxu0 %v4032
      %v4165 = vpop.f32.mrb[0].mxu0
      %v4166 = vadd.f32 0.0, %v4165
      %v4167 = vpop.f32.mrb[0].mxu0
      %4168 = vmatprep.mubr.f32.mxu0 0.0
      %4169 = vmatmul.mubr.f32.gmra.mrb[0].mxu0 %v4035
      %v4170 = vpop.f32.mrb[0].mxu0
      %v4171 = vadd.f32 0.0, %v4170
      %v4172 = vpop.f32.mrb[0].mxu0
      %4173 = vmatprep.mubr.f32.mxu0 0.0
      %4174 = vmatmul.mubr.f32.gmra.mrb[0].mxu0 %v4038
      %v4175 = vpop.f32.mrb[0].mxu0
      %v4176 = vadd.f32 0.0, %v4175
      %v4177 = vpop.f32.mrb[0].mxu0
      %4178 = vmatprep.mubr.f32.mxu0 0.0
      %4179 = vmatmul.mubr.f32.gmra.mrb[0].mxu0 %v4041
      %v4180 = vpop.f32.mrb[0].mxu0
      %v4181 = vadd.f32 0.0, %v4180
      %v4182 = vpop.f32.mrb[0].mxu0
      %4183 = vmatprep.mubr.f32.mxu0 0.0
      %4184 = vmatmul.mubr.f32.gmra.mrb[0].mxu0 %v4044
      %v4185 = vpop.f32.mrb[0].mxu0
      %v4186 = vadd.f32 0.0, %v4185
      %v4187 = vpop.f32.mrb[0].mxu0
      %4188 = vmatprep.mubr.f32.mxu0 0.0
      %4189 = vmatmul.mubr.f32.gmra.mrb[0].mxu0 %v4047
      %v4190 = vpop.f32.mrb[0].mxu0
      %v4191 = vadd.f32 0.0, %v4190
      %v4192 = vpop.f32.mrb[0].mxu0
      %4193 = vdwg.mxu0
      %v4194 = vadd.f32 %v3966, %v4116
      %v4195 = vadd.f32 %v3967, %v4121
      %v4196 = vadd.f32 %v3968, %v4126
      %v4197 = vadd.f32 %v3969, %v4131
      %v4198 = vadd.f32 %v3970, %v4136
      %v4199 = vadd.f32 %v3971, %v4141
      %v4200 = vadd.f32 %v3972, %v4146
      %v4201 = vadd.f32 %v3973, %v4151
      %v4202 = vadd.f32 %v3974, %v4156
      %v4203 = vadd.f32 %v3975, %v4161
      %v4204 = vadd.f32 %v3976, %v4166
      %v4205 = vadd.f32 %v3977, %v4171
      %v4206 = vadd.f32 %v3978, %v4176
      %v4207 = vadd.f32 %v3979, %v4181
      %v4208 = vadd.f32 %v3980, %v4186
      %v4209 = vadd.f32 %v3981, %v4191
      %v4210 = vld [vmem:[#allocation2 + $0xc] sm:$0xff]
      %v4211 = vld [vmem:[#allocation2 + $0x14] sm:$0xff]
      %v4212 = vld [vmem:[#allocation2 + $0x2c] sm:$0xff]
      %v4213 = vld [vmem:[#allocation2 + $0x34] sm:$0xff]
      %v4214 = vld [vmem:[#allocation2 + $0x4c] sm:$0xff]
      %v4215 = vld [vmem:[#allocation2 + $0x54] sm:$0xff]
      %v4216 = vld [vmem:[#allocation2 + $0x6c] sm:$0xff]
      %v4217 = vld [vmem:[#allocation2 + $0x74] sm:$0xff]
      %v4218 = vld [vmem:[#allocation2 + $0x8c] sm:$0xff]
      %v4219 = vld [vmem:[#allocation2 + $0x94] sm:$0xff]
      %v4220 = vld [vmem:[#allocation2 + $0xac] sm:$0xff]
      %v4221 = vld [vmem:[#allocation2 + $0xb4] sm:$0xff]
      %v4222 = vld [vmem:[#allocation2 + $0xcc] sm:$0xff]
      %v4223 = vld [vmem:[#allocation2 + $0xd4] sm:$0xff]
      %v4224 = vld [vmem:[#allocation2 + $0xec] sm:$0xff]
      %v4225 = vld [vmem:[#allocation2 + $0xf4] sm:$0xff]
      %s4226 = scalar_lea.vmem %s7, 16
      %v4227 = vld [vmem:[%s4226] sm:$0xf]
      %v4228 = vunpack.c.l.bf16 %v4227
      %v4230 = vsel %vm1918, %v4210, 0
      %v4233 = vsel %vm1918, %v4211, 0
      %v4236 = vsel %vm1918, %v4212, 0
      %v4239 = vsel %vm1918, %v4213, 0
      %v4242 = vsel %vm1918, %v4214, 0
      %v4245 = vsel %vm1918, %v4215, 0
      %v4248 = vsel %vm1918, %v4216, 0
      %v4251 = vsel %vm1918, %v4217, 0
      %v4254 = vsel %vm1918, %v4218, 0
      %v4257 = vsel %vm1918, %v4219, 0
      %v4260 = vsel %vm1918, %v4220, 0
      %v4263 = vsel %vm1918, %v4221, 0
      %v4266 = vsel %vm1918, %v4222, 0
      %v4269 = vsel %vm1918, %v4223, 0
      %v4272 = vsel %vm1918, %v4224, 0
      %v4275 = vsel %vm1918, %v4225, 0
      %4277 = vmatprep.subr.mxu0 0.0
      %4278 = vmatpush1.msra.mxu0 %v4228
      %4279 = vmatprep.subr.mxu0 0.0
      %4280 = vmatpush1.msra.mxu0 0.0
      %4281 = vmatprep.subr.mxu0 0.0
      %4282 = vmatpush1.msra.mxu0 0.0
      %4283 = vmatprep.subr.mxu0 0.0
      %4284 = vmatpush1.msra.mxu0 0.0
      %4285 = vmatprep.subr.mxu0 0.0
      %4286 = vmatpush1.msra.mxu0 0.0
      %4287 = vmatprep.subr.mxu0 0.0
      %4288 = vmatpush1.msra.mxu0 0.0
      %4289 = vmatprep.subr.mxu0 0.0
      %4290 = vmatpush1.msra.mxu0 0.0
      %4291 = vmatprep.subr.mxu0 0.0
      %4292 = vmatpush1.msra.mxu0 0.0
      %4293 = vmatprep.subr.mxu0 0.0
      %4294 = vmatpush1.msra.mxu0 0.0
      %4295 = vmatprep.subr.mxu0 0.0
      %4296 = vmatpush1.msra.mxu0 0.0
      %4297 = vmatprep.subr.mxu0 0.0
      %4298 = vmatpush1.msra.mxu0 0.0
      %4299 = vmatprep.subr.mxu0 0.0
      %4300 = vmatpush1.msra.mxu0 0.0
      %4301 = vmatprep.subr.mxu0 0.0
      %4302 = vmatpush1.msra.mxu0 0.0
      %4303 = vmatprep.subr.mxu0 0.0
      %4304 = vmatpush1.msra.mxu0 0.0
      %4305 = vmatprep.subr.mxu0 0.0
      %4306 = vmatpush1.msra.mxu0 0.0
      %4307 = vmatprep.subr.mxu0 0.0
      %4308 = vmatpush1.msra.mxu0 0.0
      %4309 = vmatprep.subr.mxu0 0.0
      %4310 = vmatpush1.msra.mxu0 0.0
      %4311 = vmatprep.subr.mxu0 0.0
      %4312 = vmatpush1.msra.mxu0 0.0
      %4313 = vmatprep.subr.mxu0 0.0
      %4314 = vmatpush1.msra.mxu0 0.0
      %4315 = vmatprep.subr.mxu0 0.0
      %4316 = vmatpush1.msra.mxu0 0.0
      %4317 = vmatprep.subr.mxu0 0.0
      %4318 = vmatpush1.msra.mxu0 0.0
      %4319 = vmatprep.subr.mxu0 0.0
      %4320 = vmatpush1.msra.mxu0 0.0
      %4321 = vmatprep.subr.mxu0 0.0
      %4322 = vmatpush1.msra.mxu0 0.0
      %4323 = vmatprep.subr.mxu0 0.0
      %4324 = vmatpush1.msra.mxu0 0.0
      %4325 = vmatprep.subr.mxu0 0.0
      %4326 = vmatpush1.msra.mxu0 0.0
      %4327 = vmatprep.subr.mxu0 0.0
      %4328 = vmatpush1.msra.mxu0 0.0
      %4329 = vmatprep.subr.mxu0 0.0
      %4330 = vmatpush1.msra.mxu0 0.0
      %4331 = vmatprep.subr.mxu0 0.0
      %4332 = vmatpush1.msra.mxu0 0.0
      %4333 = vmatprep.subr.mxu0 0.0
      %4334 = vmatpush1.msra.mxu0 0.0
      %4335 = vmatprep.subr.mxu0 0.0
      %4336 = vmatpush1.msra.mxu0 0.0
      %4337 = vmatprep.subr.mxu0 0.0
      %4338 = vmatpush1.msra.mxu0 0.0
      %4339 = vmatprep.subr.mxu0 0.0
      %4340 = vmatpush1.msra.mxu0 0.0
      %4341 = vmatprep.mubr.f32.mxu0 0.0
      %4342 = vmatmul.mubr.f32.gmra.mrb[0].mxu0 %v4230
      %v4343 = vpop.f32.mrb[0].mxu0
      %v4344 = vadd.f32 0.0, %v4343
      %v4345 = vpop.f32.mrb[0].mxu0
      %4346 = vmatprep.mubr.f32.mxu0 0.0
      %4347 = vmatmul.mubr.f32.gmra.mrb[0].mxu0 %v4233
      %v4348 = vpop.f32.mrb[0].mxu0
      %v4349 = vadd.f32 0.0, %v4348
      %v4350 = vpop.f32.mrb[0].mxu0
      %4351 = vmatprep.mubr.f32.mxu0 0.0
      %4352 = vmatmul.mubr.f32.gmra.mrb[0].mxu0 %v4236
      %v4353 = vpop.f32.mrb[0].mxu0
      %v4354 = vadd.f32 0.0, %v4353
      %v4355 = vpop.f32.mrb[0].mxu0
      %4356 = vmatprep.mubr.f32.mxu0 0.0
      %4357 = vmatmul.mubr.f32.gmra.mrb[0].mxu0 %v4239
      %v4358 = vpop.f32.mrb[0].mxu0
      %v4359 = vadd.f32 0.0, %v4358
      %v4360 = vpop.f32.mrb[0].mxu0
      %4361 = vmatprep.mubr.f32.mxu0 0.0
      %4362 = vmatmul.mubr.f32.gmra.mrb[0].mxu0 %v4242
      %v4363 = vpop.f32.mrb[0].mxu0
      %v4364 = vadd.f32 0.0, %v4363
      %v4365 = vpop.f32.mrb[0].mxu0
      %4366 = vmatprep.mubr.f32.mxu0 0.0
      %4367 = vmatmul.mubr.f32.gmra.mrb[0].mxu0 %v4245
      %v4368 = vpop.f32.mrb[0].mxu0
      %v4369 = vadd.f32 0.0, %v4368
      %v4370 = vpop.f32.mrb[0].mxu0
      %4371 = vmatprep.mubr.f32.mxu0 0.0
      %4372 = vmatmul.mubr.f32.gmra.mrb[0].mxu0 %v4248
      %v4373 = vpop.f32.mrb[0].mxu0
      %v4374 = vadd.f32 0.0, %v4373
      %v4375 = vpop.f32.mrb[0].mxu0
      %4376 = vmatprep.mubr.f32.mxu0 0.0
      %4377 = vmatmul.mubr.f32.gmra.mrb[0].mxu0 %v4251
      %v4378 = vpop.f32.mrb[0].mxu0
      %v4379 = vadd.f32 0.0, %v4378
      %v4380 = vpop.f32.mrb[0].mxu0
      %4381 = vmatprep.mubr.f32.mxu0 0.0
      %4382 = vmatmul.mubr.f32.gmra.mrb[0].mxu0 %v4254
      %v4383 = vpop.f32.mrb[0].mxu0
      %v4384 = vadd.f32 0.0, %v4383
      %v4385 = vpop.f32.mrb[0].mxu0
      %4386 = vmatprep.mubr.f32.mxu0 0.0
      %4387 = vmatmul.mubr.f32.gmra.mrb[0].mxu0 %v4257
      %v4388 = vpop.f32.mrb[0].mxu0
      %v4389 = vadd.f32 0.0, %v4388
      %v4390 = vpop.f32.mrb[0].mxu0
      %4391 = vmatprep.mubr.f32.mxu0 0.0
      %4392 = vmatmul.mubr.f32.gmra.mrb[0].mxu0 %v4260
      %v4393 = vpop.f32.mrb[0].mxu0
      %v4394 = vadd.f32 0.0, %v4393
      %v4395 = vpop.f32.mrb[0].mxu0
      %4396 = vmatprep.mubr.f32.mxu0 0.0
      %4397 = vmatmul.mubr.f32.gmra.mrb[0].mxu0 %v4263
      %v4398 = vpop.f32.mrb[0].mxu0
      %v4399 = vadd.f32 0.0, %v4398
      %v4400 = vpop.f32.mrb[0].mxu0
      %4401 = vmatprep.mubr.f32.mxu0 0.0
      %4402 = vmatmul.mubr.f32.gmra.mrb[0].mxu0 %v4266
      %v4403 = vpop.f32.mrb[0].mxu0
      %v4404 = vadd.f32 0.0, %v4403
      %v4405 = vpop.f32.mrb[0].mxu0
      %4406 = vmatprep.mubr.f32.mxu0 0.0
      %4407 = vmatmul.mubr.f32.gmra.mrb[0].mxu0 %v4269
      %v4408 = vpop.f32.mrb[0].mxu0
      %v4409 = vadd.f32 0.0, %v4408
      %v4410 = vpop.f32.mrb[0].mxu0
      %4411 = vmatprep.mubr.f32.mxu0 0.0
      %4412 = vmatmul.mubr.f32.gmra.mrb[0].mxu0 %v4272
      %v4413 = vpop.f32.mrb[0].mxu0
      %v4414 = vadd.f32 0.0, %v4413
      %v4415 = vpop.f32.mrb[0].mxu0
      %4416 = vmatprep.mubr.f32.mxu0 0.0
      %4417 = vmatmul.mubr.f32.gmra.mrb[0].mxu0 %v4275
      %v4418 = vpop.f32.mrb[0].mxu0
      %v4419 = vadd.f32 0.0, %v4418
      %v4420 = vpop.f32.mrb[0].mxu0
      %4421 = vdwg.mxu0
      %v4422 = vadd.f32 %v4194, %v4344
      %v4423 = vadd.f32 %v4195, %v4349
      %v4424 = vadd.f32 %v4196, %v4354
      %v4425 = vadd.f32 %v4197, %v4359
      %v4426 = vadd.f32 %v4198, %v4364
      %v4427 = vadd.f32 %v4199, %v4369
      %v4428 = vadd.f32 %v4200, %v4374
      %v4429 = vadd.f32 %v4201, %v4379
      %v4430 = vadd.f32 %v4202, %v4384
      %v4431 = vadd.f32 %v4203, %v4389
      %v4432 = vadd.f32 %v4204, %v4394
      %v4433 = vadd.f32 %v4205, %v4399
      %v4434 = vadd.f32 %v4206, %v4404
      %v4435 = vadd.f32 %v4207, %v4409
      %v4436 = vadd.f32 %v4208, %v4414
      %v4437 = vadd.f32 %v4209, %v4419
      %v4438 = vld [vmem:[%s8] sm:$0x1]
      %v4440 = vlaneseq
      %v4441 = vshrl.u32 %v4440, 7
      %v4442 = vsub.s32 0, %v4441
      %v4443 = vrot.slane %v4438, %v4442
      %v4445 = vadd.f32 %v4422, %v4443
      %v4446 = vadd.f32 %v4423, %v4443
      %v4447 = vadd.f32 %v4424, %v4443
      %v4448 = vadd.f32 %v4425, %v4443
      %v4449 = vadd.f32 %v4426, %v4443
      %v4450 = vadd.f32 %v4427, %v4443
      %v4451 = vadd.f32 %v4428, %v4443
      %v4452 = vadd.f32 %v4429, %v4443
      %v4453 = vadd.f32 %v4430, %v4443
      %v4454 = vadd.f32 %v4431, %v4443
      %v4455 = vadd.f32 %v4432, %v4443
      %v4456 = vadd.f32 %v4433, %v4443
      %v4457 = vadd.f32 %v4434, %v4443
      %v4458 = vadd.f32 %v4435, %v4443
      %v4459 = vadd.f32 %v4436, %v4443
      %v4460 = vadd.f32 %v4437, %v4443
      %v4461 = vmax.f32 %v4445, 0.0
      %v4462 = vmax.f32 %v4446, 0.0
      %v4463 = vmax.f32 %v4447, 0.0
      %v4464 = vmax.f32 %v4448, 0.0
      %v4465 = vmax.f32 %v4449, 0.0
      %v4466 = vmax.f32 %v4450, 0.0
      %v4467 = vmax.f32 %v4451, 0.0
      %v4468 = vmax.f32 %v4452, 0.0
      %v4469 = vmax.f32 %v4453, 0.0
      %v4470 = vmax.f32 %v4454, 0.0
      %v4471 = vmax.f32 %v4455, 0.0
      %v4472 = vmax.f32 %v4456, 0.0
      %v4473 = vmax.f32 %v4457, 0.0
      %v4474 = vmax.f32 %v4458, 0.0
      %v4475 = vmax.f32 %v4459, 0.0
      %v4476 = vmax.f32 %v4460, 0.0
      %4477 = vst.msk [vmem:[#allocation2 + $0x8] sm:$0xff] %vm501, %v4461
      %4478 = vst.msk [vmem:[#allocation2 + $0x10] sm:$0xff] %vm501, %v4462
      %4479 = vst.msk [vmem:[#allocation2 + $0x28] sm:$0xff] %vm501, %v4463
      %4480 = vst.msk [vmem:[#allocation2 + $0x30] sm:$0xff] %vm501, %v4464
      %4481 = vst.msk [vmem:[#allocation2 + $0x48] sm:$0xff] %vm501, %v4465
      %4482 = vst.msk [vmem:[#allocation2 + $0x50] sm:$0xff] %vm501, %v4466
      %4483 = vst.msk [vmem:[#allocation2 + $0x68] sm:$0xff] %vm501, %v4467
      %4484 = vst.msk [vmem:[#allocation2 + $0x70] sm:$0xff] %vm501, %v4468
      %4485 = vst.msk [vmem:[#allocation2 + $0x88] sm:$0xff] %vm501, %v4469
      %4486 = vst.msk [vmem:[#allocation2 + $0x90] sm:$0xff] %vm501, %v4470
      %4487 = vst.msk [vmem:[#allocation2 + $0xa8] sm:$0xff] %vm501, %v4471
      %4488 = vst.msk [vmem:[#allocation2 + $0xb0] sm:$0xff] %vm501, %v4472
      %4489 = vst.msk [vmem:[#allocation2 + $0xc8] sm:$0xff] %vm501, %v4473
      %4490 = vst.msk [vmem:[#allocation2 + $0xd0] sm:$0xff] %vm501, %v4474
      %4491 = vst.msk [vmem:[#allocation2 + $0xe8] sm:$0xff] %vm501, %v4475
      %4492 = vst.msk [vmem:[#allocation2 + $0xf0] sm:$0xff] %vm501, %v4476
      %v4493 = vld [vmem:[#allocation2 + $0x4] sm:$0xff]
      %v4494 = vld [vmem:[#allocation2 + $0xc] sm:$0xff]
      %v4495 = vld [vmem:[#allocation2 + $0x24] sm:$0xff]
      %v4496 = vld [vmem:[#allocation2 + $0x2c] sm:$0xff]
      %v4497 = vld [vmem:[#allocation2 + $0x44] sm:$0xff]
      %v4498 = vld [vmem:[#allocation2 + $0x4c] sm:$0xff]
      %v4499 = vld [vmem:[#allocation2 + $0x64] sm:$0xff]
      %v4500 = vld [vmem:[#allocation2 + $0x6c] sm:$0xff]
      %v4501 = vld [vmem:[#allocation2 + $0x84] sm:$0xff]
      %v4502 = vld [vmem:[#allocation2 + $0x8c] sm:$0xff]
      %v4503 = vld [vmem:[#allocation2 + $0xa4] sm:$0xff]
      %v4504 = vld [vmem:[#allocation2 + $0xac] sm:$0xff]
      %v4505 = vld [vmem:[#allocation2 + $0xc4] sm:$0xff]
      %v4506 = vld [vmem:[#allocation2 + $0xcc] sm:$0xff]
      %v4507 = vld [vmem:[#allocation2 + $0xe4] sm:$0xff]
      %v4508 = vld [vmem:[#allocation2 + $0xec] sm:$0xff]
      %v4509 = vld [vmem:[%s9] sm:$0xf]
      %v4510 = vld [vmem:[%s9 + $0x4] sm:$0xf]
      %v4511 = vunpack.c.l.bf16 %v4509
      %v4512 = vunpack.c.l.bf16 %v4510
      %v4513 = vld [vmem:[#allocation2 + $0x6] sm:$0xff]
      %v4514 = vld [vmem:[#allocation2 + $0xe] sm:$0xff]
      %v4515 = vld [vmem:[#allocation2 + $0x26] sm:$0xff]
      %v4516 = vld [vmem:[#allocation2 + $0x2e] sm:$0xff]
      %v4517 = vld [vmem:[#allocation2 + $0x46] sm:$0xff]
      %v4518 = vld [vmem:[#allocation2 + $0x4e] sm:$0xff]
      %v4519 = vld [vmem:[#allocation2 + $0x66] sm:$0xff]
      %v4520 = vld [vmem:[#allocation2 + $0x6e] sm:$0xff]
      %v4521 = vld [vmem:[#allocation2 + $0x86] sm:$0xff]
      %v4522 = vld [vmem:[#allocation2 + $0x8e] sm:$0xff]
      %v4523 = vld [vmem:[#allocation2 + $0xa6] sm:$0xff]
      %v4524 = vld [vmem:[#allocation2 + $0xae] sm:$0xff]
      %v4525 = vld [vmem:[#allocation2 + $0xc6] sm:$0xff]
      %v4526 = vld [vmem:[#allocation2 + $0xce] sm:$0xff]
      %v4527 = vld [vmem:[#allocation2 + $0xe6] sm:$0xff]
      %v4528 = vld [vmem:[#allocation2 + $0xee] sm:$0xff]
      %s4529 = scalar_lea.vmem %s9, 8
      %v4530 = vld [vmem:[%s4529] sm:$0xf]
      %v4531 = vld [vmem:[%s4529 + $0x4] sm:$0xf]
      %v4532 = vunpack.c.l.bf16 %v4530
      %v4533 = vunpack.c.l.bf16 %v4531
      %v4535 = vsel %vm501, %v4513, 0
      %v4538 = vsel %vm501, %v4514, 0
      %v4541 = vsel %vm501, %v4515, 0
      %v4544 = vsel %vm501, %v4516, 0
      %v4547 = vsel %vm501, %v4517, 0
      %v4550 = vsel %vm501, %v4518, 0
      %v4553 = vsel %vm501, %v4519, 0
      %v4556 = vsel %vm501, %v4520, 0
      %v4559 = vsel %vm501, %v4521, 0
      %v4562 = vsel %vm501, %v4522, 0
      %v4565 = vsel %vm501, %v4523, 0
      %v4568 = vsel %vm501, %v4524, 0
      %v4571 = vsel %vm501, %v4525, 0
      %v4574 = vsel %vm501, %v4526, 0
      %v4577 = vsel %vm501, %v4527, 0
      %v4580 = vsel %vm501, %v4528, 0
      %4582 = vmatprep.subr.mxu0 0.0
      %4583 = vmatpush1.msra.mxu0 %v4532
      %4584 = vmatprep.subr.mxu0 0.0
      %4585 = vmatpush1.msra.mxu0 %v4533
      %4586 = vmatprep.subr.mxu0 0.0
      %4587 = vmatpush1.msra.mxu0 0.0
      %4588 = vmatprep.subr.mxu0 0.0
      %4589 = vmatpush1.msra.mxu0 0.0
      %4590 = vmatprep.subr.mxu0 0.0
      %4591 = vmatpush1.msra.mxu0 0.0
      %4592 = vmatprep.subr.mxu0 0.0
      %4593 = vmatpush1.msra.mxu0 0.0
      %4594 = vmatprep.subr.mxu0 0.0
      %4595 = vmatpush1.msra.mxu0 0.0
      %4596 = vmatprep.subr.mxu0 0.0
      %4597 = vmatpush1.msra.mxu0 0.0
      %4598 = vmatprep.subr.mxu0 0.0
      %4599 = vmatpush1.msra.mxu0 0.0
      %4600 = vmatprep.subr.mxu0 0.0
      %4601 = vmatpush1.msra.mxu0 0.0
      %4602 = vmatprep.subr.mxu0 0.0
      %4603 = vmatpush1.msra.mxu0 0.0
      %4604 = vmatprep.subr.mxu0 0.0
      %4605 = vmatpush1.msra.mxu0 0.0
      %4606 = vmatprep.subr.mxu0 0.0
      %4607 = vmatpush1.msra.mxu0 0.0
      %4608 = vmatprep.subr.mxu0 0.0
      %4609 = vmatpush1.msra.mxu0 0.0
      %4610 = vmatprep.subr.mxu0 0.0
      %4611 = vmatpush1.msra.mxu0 0.0
      %4612 = vmatprep.subr.mxu0 0.0
      %4613 = vmatpush1.msra.mxu0 0.0
      %4614 = vmatprep.subr.mxu0 0.0
      %4615 = vmatpush1.msra.mxu0 0.0
      %4616 = vmatprep.subr.mxu0 0.0
      %4617 = vmatpush1.msra.mxu0 0.0
      %4618 = vmatprep.subr.mxu0 0.0
      %4619 = vmatpush1.msra.mxu0 0.0
      %4620 = vmatprep.subr.mxu0 0.0
      %4621 = vmatpush1.msra.mxu0 0.0
      %4622 = vmatprep.subr.mxu0 0.0
      %4623 = vmatpush1.msra.mxu0 0.0
      %4624 = vmatprep.subr.mxu0 0.0
      %4625 = vmatpush1.msra.mxu0 0.0
      %4626 = vmatprep.subr.mxu0 0.0
      %4627 = vmatpush1.msra.mxu0 0.0
      %4628 = vmatprep.subr.mxu0 0.0
      %4629 = vmatpush1.msra.mxu0 0.0
      %4630 = vmatprep.subr.mxu0 0.0
      %4631 = vmatpush1.msra.mxu0 0.0
      %4632 = vmatprep.subr.mxu0 0.0
      %4633 = vmatpush1.msra.mxu0 0.0
      %4634 = vmatprep.subr.mxu0 0.0
      %4635 = vmatpush1.msra.mxu0 0.0
      %4636 = vmatprep.subr.mxu0 0.0
      %4637 = vmatpush1.msra.mxu0 0.0
      %4638 = vmatprep.subr.mxu0 0.0
      %4639 = vmatpush1.msra.mxu0 0.0
      %4640 = vmatprep.subr.mxu0 0.0
      %4641 = vmatpush1.msra.mxu0 0.0
      %4642 = vmatprep.subr.mxu0 0.0
      %4643 = vmatpush1.msra.mxu0 0.0
      %4644 = vmatprep.subr.mxu0 0.0
      %4645 = vmatpush1.msra.mxu0 0.0
      %4646 = vmatprep.mubr.f32.mxu0 0.0
      %4647 = vmatmul.mubr.f32.gmra.mrb[0].mxu0 %v4535
      %v4648 = vpop.f32.mrb[0].mxu0
      %v4649 = vadd.f32 0.0, %v4648
      %v4650 = vpop.f32.mrb[0].mxu0
      %4651 = vmatprep.mubr.f32.mxu0 0.0
      %4652 = vmatmul.mubr.f32.gmra.mrb[0].mxu0 %v4538
      %v4653 = vpop.f32.mrb[0].mxu0
      %v4654 = vadd.f32 0.0, %v4653
      %v4655 = vpop.f32.mrb[0].mxu0
      %4656 = vmatprep.mubr.f32.mxu0 0.0
      %4657 = vmatmul.mubr.f32.gmra.mrb[0].mxu0 %v4541
      %v4658 = vpop.f32.mrb[0].mxu0
      %v4659 = vadd.f32 0.0, %v4658
      %v4660 = vpop.f32.mrb[0].mxu0
      %4661 = vmatprep.mubr.f32.mxu0 0.0
      %4662 = vmatmul.mubr.f32.gmra.mrb[0].mxu0 %v4544
      %v4663 = vpop.f32.mrb[0].mxu0
      %v4664 = vadd.f32 0.0, %v4663
      %v4665 = vpop.f32.mrb[0].mxu0
      %4666 = vmatprep.mubr.f32.mxu0 0.0
      %4667 = vmatmul.mubr.f32.gmra.mrb[0].mxu0 %v4547
      %v4668 = vpop.f32.mrb[0].mxu0
      %v4669 = vadd.f32 0.0, %v4668
      %v4670 = vpop.f32.mrb[0].mxu0
      %4671 = vmatprep.mubr.f32.mxu0 0.0
      %4672 = vmatmul.mubr.f32.gmra.mrb[0].mxu0 %v4550
      %v4673 = vpop.f32.mrb[0].mxu0
      %v4674 = vadd.f32 0.0, %v4673
      %v4675 = vpop.f32.mrb[0].mxu0
      %4676 = vmatprep.mubr.f32.mxu0 0.0
      %4677 = vmatmul.mubr.f32.gmra.mrb[0].mxu0 %v4553
      %v4678 = vpop.f32.mrb[0].mxu0
      %v4679 = vadd.f32 0.0, %v4678
      %v4680 = vpop.f32.mrb[0].mxu0
      %4681 = vmatprep.mubr.f32.mxu0 0.0
      %4682 = vmatmul.mubr.f32.gmra.mrb[0].mxu0 %v4556
      %v4683 = vpop.f32.mrb[0].mxu0
      %v4684 = vadd.f32 0.0, %v4683
      %v4685 = vpop.f32.mrb[0].mxu0
      %4686 = vmatprep.mubr.f32.mxu0 0.0
      %4687 = vmatmul.mubr.f32.gmra.mrb[0].mxu0 %v4559
      %v4688 = vpop.f32.mrb[0].mxu0
      %v4689 = vadd.f32 0.0, %v4688
      %v4690 = vpop.f32.mrb[0].mxu0
      %4691 = vmatprep.mubr.f32.mxu0 0.0
      %4692 = vmatmul.mubr.f32.gmra.mrb[0].mxu0 %v4562
      %v4693 = vpop.f32.mrb[0].mxu0
      %v4694 = vadd.f32 0.0, %v4693
      %v4695 = vpop.f32.mrb[0].mxu0
      %4696 = vmatprep.mubr.f32.mxu0 0.0
      %4697 = vmatmul.mubr.f32.gmra.mrb[0].mxu0 %v4565
      %v4698 = vpop.f32.mrb[0].mxu0
      %v4699 = vadd.f32 0.0, %v4698
      %v4700 = vpop.f32.mrb[0].mxu0
      %4701 = vmatprep.mubr.f32.mxu0 0.0
      %4702 = vmatmul.mubr.f32.gmra.mrb[0].mxu0 %v4568
      %v4703 = vpop.f32.mrb[0].mxu0
      %v4704 = vadd.f32 0.0, %v4703
      %v4705 = vpop.f32.mrb[0].mxu0
      %4706 = vmatprep.mubr.f32.mxu0 0.0
      %4707 = vmatmul.mubr.f32.gmra.mrb[0].mxu0 %v4571
      %v4708 = vpop.f32.mrb[0].mxu0
      %v4709 = vadd.f32 0.0, %v4708
      %v4710 = vpop.f32.mrb[0].mxu0
      %4711 = vmatprep.mubr.f32.mxu0 0.0
      %4712 = vmatmul.mubr.f32.gmra.mrb[0].mxu0 %v4574
      %v4713 = vpop.f32.mrb[0].mxu0
      %v4714 = vadd.f32 0.0, %v4713
      %v4715 = vpop.f32.mrb[0].mxu0
      %4716 = vmatprep.mubr.f32.mxu0 0.0
      %4717 = vmatmul.mubr.f32.gmra.mrb[0].mxu0 %v4577
      %v4718 = vpop.f32.mrb[0].mxu0
      %v4719 = vadd.f32 0.0, %v4718
      %v4720 = vpop.f32.mrb[0].mxu0
      %4721 = vmatprep.mubr.f32.mxu0 0.0
      %4722 = vmatmul.mubr.f32.gmra.mrb[0].mxu0 %v4580
      %v4723 = vpop.f32.mrb[0].mxu0
      %v4724 = vadd.f32 0.0, %v4723
      %v4725 = vpop.f32.mrb[0].mxu0
      %4726 = vdwg.mxu0
      %v4728 = vsel %vm501, %v4493, 0
      %v4731 = vsel %vm501, %v4494, 0
      %v4734 = vsel %vm501, %v4495, 0
      %v4737 = vsel %vm501, %v4496, 0
      %v4740 = vsel %vm501, %v4497, 0
      %v4743 = vsel %vm501, %v4498, 0
      %v4746 = vsel %vm501, %v4499, 0
      %v4749 = vsel %vm501, %v4500, 0
      %v4752 = vsel %vm501, %v4501, 0
      %v4755 = vsel %vm501, %v4502, 0
      %v4758 = vsel %vm501, %v4503, 0
      %v4761 = vsel %vm501, %v4504, 0
      %v4764 = vsel %vm501, %v4505, 0
      %v4767 = vsel %vm501, %v4506, 0
      %v4770 = vsel %vm501, %v4507, 0
      %v4773 = vsel %vm501, %v4508, 0
      %4775 = vmatprep.subr.mxu0 0.0
      %4776 = vmatpush1.msra.mxu0 %v4511
      %4777 = vmatprep.subr.mxu0 0.0
      %4778 = vmatpush1.msra.mxu0 %v4512
      %4779 = vmatprep.subr.mxu0 0.0
      %4780 = vmatpush1.msra.mxu0 0.0
      %4781 = vmatprep.subr.mxu0 0.0
      %4782 = vmatpush1.msra.mxu0 0.0
      %4783 = vmatprep.subr.mxu0 0.0
      %4784 = vmatpush1.msra.mxu0 0.0
      %4785 = vmatprep.subr.mxu0 0.0
      %4786 = vmatpush1.msra.mxu0 0.0
      %4787 = vmatprep.subr.mxu0 0.0
      %4788 = vmatpush1.msra.mxu0 0.0
      %4789 = vmatprep.subr.mxu0 0.0
      %4790 = vmatpush1.msra.mxu0 0.0
      %4791 = vmatprep.subr.mxu0 0.0
      %4792 = vmatpush1.msra.mxu0 0.0
      %4793 = vmatprep.subr.mxu0 0.0
      %4794 = vmatpush1.msra.mxu0 0.0
      %4795 = vmatprep.subr.mxu0 0.0
      %4796 = vmatpush1.msra.mxu0 0.0
      %4797 = vmatprep.subr.mxu0 0.0
      %4798 = vmatpush1.msra.mxu0 0.0
      %4799 = vmatprep.subr.mxu0 0.0
      %4800 = vmatpush1.msra.mxu0 0.0
      %4801 = vmatprep.subr.mxu0 0.0
      %4802 = vmatpush1.msra.mxu0 0.0
      %4803 = vmatprep.subr.mxu0 0.0
      %4804 = vmatpush1.msra.mxu0 0.0
      %4805 = vmatprep.subr.mxu0 0.0
      %4806 = vmatpush1.msra.mxu0 0.0
      %4807 = vmatprep.subr.mxu0 0.0
      %4808 = vmatpush1.msra.mxu0 0.0
      %4809 = vmatprep.subr.mxu0 0.0
      %4810 = vmatpush1.msra.mxu0 0.0
      %4811 = vmatprep.subr.mxu0 0.0
      %4812 = vmatpush1.msra.mxu0 0.0
      %4813 = vmatprep.subr.mxu0 0.0
      %4814 = vmatpush1.msra.mxu0 0.0
      %4815 = vmatprep.subr.mxu0 0.0
      %4816 = vmatpush1.msra.mxu0 0.0
      %4817 = vmatprep.subr.mxu0 0.0
      %4818 = vmatpush1.msra.mxu0 0.0
      %4819 = vmatprep.subr.mxu0 0.0
      %4820 = vmatpush1.msra.mxu0 0.0
      %4821 = vmatprep.subr.mxu0 0.0
      %4822 = vmatpush1.msra.mxu0 0.0
      %4823 = vmatprep.subr.mxu0 0.0
      %4824 = vmatpush1.msra.mxu0 0.0
      %4825 = vmatprep.subr.mxu0 0.0
      %4826 = vmatpush1.msra.mxu0 0.0
      %4827 = vmatprep.subr.mxu0 0.0
      %4828 = vmatpush1.msra.mxu0 0.0
      %4829 = vmatprep.subr.mxu0 0.0
      %4830 = vmatpush1.msra.mxu0 0.0
      %4831 = vmatprep.subr.mxu0 0.0
      %4832 = vmatpush1.msra.mxu0 0.0
      %4833 = vmatprep.subr.mxu0 0.0
      %4834 = vmatpush1.msra.mxu0 0.0
      %4835 = vmatprep.subr.mxu0 0.0
      %4836 = vmatpush1.msra.mxu0 0.0
      %4837 = vmatprep.subr.mxu0 0.0
      %4838 = vmatpush1.msra.mxu0 0.0
      %4839 = vmatprep.mubr.f32.mxu0 0.0
      %4840 = vmatmul.mubr.f32.gmra.mrb[0].mxu0 %v4728
      %v4841 = vpop.f32.mrb[0].mxu0
      %v4842 = vadd.f32 %v4649, %v4841
      %v4843 = vpop.f32.mrb[0].mxu0
      %4844 = vmatprep.mubr.f32.mxu0 0.0
      %4845 = vmatmul.mubr.f32.gmra.mrb[0].mxu0 %v4731
      %v4846 = vpop.f32.mrb[0].mxu0
      %v4847 = vadd.f32 %v4654, %v4846
      %v4848 = vpop.f32.mrb[0].mxu0
      %4849 = vmatprep.mubr.f32.mxu0 0.0
      %4850 = vmatmul.mubr.f32.gmra.mrb[0].mxu0 %v4734
      %v4851 = vpop.f32.mrb[0].mxu0
      %v4852 = vadd.f32 %v4659, %v4851
      %v4853 = vpop.f32.mrb[0].mxu0
      %4854 = vmatprep.mubr.f32.mxu0 0.0
      %4855 = vmatmul.mubr.f32.gmra.mrb[0].mxu0 %v4737
      %v4856 = vpop.f32.mrb[0].mxu0
      %v4857 = vadd.f32 %v4664, %v4856
      %v4858 = vpop.f32.mrb[0].mxu0
      %4859 = vmatprep.mubr.f32.mxu0 0.0
      %4860 = vmatmul.mubr.f32.gmra.mrb[0].mxu0 %v4740
      %v4861 = vpop.f32.mrb[0].mxu0
      %v4862 = vadd.f32 %v4669, %v4861
      %v4863 = vpop.f32.mrb[0].mxu0
      %4864 = vmatprep.mubr.f32.mxu0 0.0
      %4865 = vmatmul.mubr.f32.gmra.mrb[0].mxu0 %v4743
      %v4866 = vpop.f32.mrb[0].mxu0
      %v4867 = vadd.f32 %v4674, %v4866
      %v4868 = vpop.f32.mrb[0].mxu0
      %4869 = vmatprep.mubr.f32.mxu0 0.0
      %4870 = vmatmul.mubr.f32.gmra.mrb[0].mxu0 %v4746
      %v4871 = vpop.f32.mrb[0].mxu0
      %v4872 = vadd.f32 %v4679, %v4871
      %v4873 = vpop.f32.mrb[0].mxu0
      %4874 = vmatprep.mubr.f32.mxu0 0.0
      %4875 = vmatmul.mubr.f32.gmra.mrb[0].mxu0 %v4749
      %v4876 = vpop.f32.mrb[0].mxu0
      %v4877 = vadd.f32 %v4684, %v4876
      %v4878 = vpop.f32.mrb[0].mxu0
      %4879 = vmatprep.mubr.f32.mxu0 0.0
      %4880 = vmatmul.mubr.f32.gmra.mrb[0].mxu0 %v4752
      %v4881 = vpop.f32.mrb[0].mxu0
      %v4882 = vadd.f32 %v4689, %v4881
      %v4883 = vpop.f32.mrb[0].mxu0
      %4884 = vmatprep.mubr.f32.mxu0 0.0
      %4885 = vmatmul.mubr.f32.gmra.mrb[0].mxu0 %v4755
      %v4886 = vpop.f32.mrb[0].mxu0
      %v4887 = vadd.f32 %v4694, %v4886
      %v4888 = vpop.f32.mrb[0].mxu0
      %4889 = vmatprep.mubr.f32.mxu0 0.0
      %4890 = vmatmul.mubr.f32.gmra.mrb[0].mxu0 %v4758
      %v4891 = vpop.f32.mrb[0].mxu0
      %v4892 = vadd.f32 %v4699, %v4891
      %v4893 = vpop.f32.mrb[0].mxu0
      %4894 = vmatprep.mubr.f32.mxu0 0.0
      %4895 = vmatmul.mubr.f32.gmra.mrb[0].mxu0 %v4761
      %v4896 = vpop.f32.mrb[0].mxu0
      %v4897 = vadd.f32 %v4704, %v4896
      %v4898 = vpop.f32.mrb[0].mxu0
      %4899 = vmatprep.mubr.f32.mxu0 0.0
      %4900 = vmatmul.mubr.f32.gmra.mrb[0].mxu0 %v4764
      %v4901 = vpop.f32.mrb[0].mxu0
      %v4902 = vadd.f32 %v4709, %v4901
      %v4903 = vpop.f32.mrb[0].mxu0
      %4904 = vmatprep.mubr.f32.mxu0 0.0
      %4905 = vmatmul.mubr.f32.gmra.mrb[0].mxu0 %v4767
      %v4906 = vpop.f32.mrb[0].mxu0
      %v4907 = vadd.f32 %v4714, %v4906
      %v4908 = vpop.f32.mrb[0].mxu0
      %4909 = vmatprep.mubr.f32.mxu0 0.0
      %4910 = vmatmul.mubr.f32.gmra.mrb[0].mxu0 %v4770
      %v4911 = vpop.f32.mrb[0].mxu0
      %v4912 = vadd.f32 %v4719, %v4911
      %v4913 = vpop.f32.mrb[0].mxu0
      %4914 = vmatprep.mubr.f32.mxu0 0.0
      %4915 = vmatmul.mubr.f32.gmra.mrb[0].mxu0 %v4773
      %v4916 = vpop.f32.mrb[0].mxu0
      %v4917 = vadd.f32 %v4724, %v4916
      %v4918 = vpop.f32.mrb[0].mxu0
      %4919 = vdwg.mxu0
      %v4920 = vld [vmem:[#allocation2 + $0x8] sm:$0xff]
      %v4921 = vld [vmem:[#allocation2 + $0x10] sm:$0xff]
      %v4922 = vld [vmem:[#allocation2 + $0x28] sm:$0xff]
      %v4923 = vld [vmem:[#allocation2 + $0x30] sm:$0xff]
      %v4924 = vld [vmem:[#allocation2 + $0x48] sm:$0xff]
      %v4925 = vld [vmem:[#allocation2 + $0x50] sm:$0xff]
      %v4926 = vld [vmem:[#allocation2 + $0x68] sm:$0xff]
      %v4927 = vld [vmem:[#allocation2 + $0x70] sm:$0xff]
      %v4928 = vld [vmem:[#allocation2 + $0x88] sm:$0xff]
      %v4929 = vld [vmem:[#allocation2 + $0x90] sm:$0xff]
      %v4930 = vld [vmem:[#allocation2 + $0xa8] sm:$0xff]
      %v4931 = vld [vmem:[#allocation2 + $0xb0] sm:$0xff]
      %v4932 = vld [vmem:[#allocation2 + $0xc8] sm:$0xff]
      %v4933 = vld [vmem:[#allocation2 + $0xd0] sm:$0xff]
      %v4934 = vld [vmem:[#allocation2 + $0xe8] sm:$0xff]
      %v4935 = vld [vmem:[#allocation2 + $0xf0] sm:$0xff]
      %s4936 = scalar_lea.vmem %s9, 16
      %v4937 = vld [vmem:[%s4936] sm:$0xf]
      %v4938 = vld [vmem:[%s4936 + $0x4] sm:$0xf]
      %v4939 = vunpack.c.l.bf16 %v4937
      %v4940 = vunpack.c.l.bf16 %v4938
      %v4942 = vsel %vm501, %v4920, 0
      %v4945 = vsel %vm501, %v4921, 0
      %v4948 = vsel %vm501, %v4922, 0
      %v4951 = vsel %vm501, %v4923, 0
      %v4954 = vsel %vm501, %v4924, 0
      %v4957 = vsel %vm501, %v4925, 0
      %v4960 = vsel %vm501, %v4926, 0
      %v4963 = vsel %vm501, %v4927, 0
      %v4966 = vsel %vm501, %v4928, 0
      %v4969 = vsel %vm501, %v4929, 0
      %v4972 = vsel %vm501, %v4930, 0
      %v4975 = vsel %vm501, %v4931, 0
      %v4978 = vsel %vm501, %v4932, 0
      %v4981 = vsel %vm501, %v4933, 0
      %v4984 = vsel %vm501, %v4934, 0
      %v4987 = vsel %vm501, %v4935, 0
      %4989 = vmatprep.subr.mxu0 0.0
      %4990 = vmatpush1.msra.mxu0 %v4939
      %4991 = vmatprep.subr.mxu0 0.0
      %4992 = vmatpush1.msra.mxu0 %v4940
      %4993 = vmatprep.subr.mxu0 0.0
      %4994 = vmatpush1.msra.mxu0 0.0
      %4995 = vmatprep.subr.mxu0 0.0
      %4996 = vmatpush1.msra.mxu0 0.0
      %4997 = vmatprep.subr.mxu0 0.0
      %4998 = vmatpush1.msra.mxu0 0.0
      %4999 = vmatprep.subr.mxu0 0.0
      %5000 = vmatpush1.msra.mxu0 0.0
      %5001 = vmatprep.subr.mxu0 0.0
      %5002 = vmatpush1.msra.mxu0 0.0
      %5003 = vmatprep.subr.mxu0 0.0
      %5004 = vmatpush1.msra.mxu0 0.0
      %5005 = vmatprep.subr.mxu0 0.0
      %5006 = vmatpush1.msra.mxu0 0.0
      %5007 = vmatprep.subr.mxu0 0.0
      %5008 = vmatpush1.msra.mxu0 0.0
      %5009 = vmatprep.subr.mxu0 0.0
      %5010 = vmatpush1.msra.mxu0 0.0
      %5011 = vmatprep.subr.mxu0 0.0
      %5012 = vmatpush1.msra.mxu0 0.0
      %5013 = vmatprep.subr.mxu0 0.0
      %5014 = vmatpush1.msra.mxu0 0.0
      %5015 = vmatprep.subr.mxu0 0.0
      %5016 = vmatpush1.msra.mxu0 0.0
      %5017 = vmatprep.subr.mxu0 0.0
      %5018 = vmatpush1.msra.mxu0 0.0
      %5019 = vmatprep.subr.mxu0 0.0
      %5020 = vmatpush1.msra.mxu0 0.0
      %5021 = vmatprep.subr.mxu0 0.0
      %5022 = vmatpush1.msra.mxu0 0.0
      %5023 = vmatprep.subr.mxu0 0.0
      %5024 = vmatpush1.msra.mxu0 0.0
      %5025 = vmatprep.subr.mxu0 0.0
      %5026 = vmatpush1.msra.mxu0 0.0
      %5027 = vmatprep.subr.mxu0 0.0
      %5028 = vmatpush1.msra.mxu0 0.0
      %5029 = vmatprep.subr.mxu0 0.0
      %5030 = vmatpush1.msra.mxu0 0.0
      %5031 = vmatprep.subr.mxu0 0.0
      %5032 = vmatpush1.msra.mxu0 0.0
      %5033 = vmatprep.subr.mxu0 0.0
      %5034 = vmatpush1.msra.mxu0 0.0
      %5035 = vmatprep.subr.mxu0 0.0
      %5036 = vmatpush1.msra.mxu0 0.0
      %5037 = vmatprep.subr.mxu0 0.0
      %5038 = vmatpush1.msra.mxu0 0.0
      %5039 = vmatprep.subr.mxu0 0.0
      %5040 = vmatpush1.msra.mxu0 0.0
      %5041 = vmatprep.subr.mxu0 0.0
      %5042 = vmatpush1.msra.mxu0 0.0
      %5043 = vmatprep.subr.mxu0 0.0
      %5044 = vmatpush1.msra.mxu0 0.0
      %5045 = vmatprep.subr.mxu0 0.0
      %5046 = vmatpush1.msra.mxu0 0.0
      %5047 = vmatprep.subr.mxu0 0.0
      %5048 = vmatpush1.msra.mxu0 0.0
      %5049 = vmatprep.subr.mxu0 0.0
      %5050 = vmatpush1.msra.mxu0 0.0
      %5051 = vmatprep.subr.mxu0 0.0
      %5052 = vmatpush1.msra.mxu0 0.0
      %5053 = vmatprep.mubr.f32.mxu0 0.0
      %5054 = vmatmul.mubr.f32.gmra.mrb[0].mxu0 %v4942
      %v5055 = vpop.f32.mrb[0].mxu0
      %v5056 = vadd.f32 0.0, %v5055
      %v5057 = vpop.f32.mrb[0].mxu0
      %5058 = vmatprep.mubr.f32.mxu0 0.0
      %5059 = vmatmul.mubr.f32.gmra.mrb[0].mxu0 %v4945
      %v5060 = vpop.f32.mrb[0].mxu0
      %v5061 = vadd.f32 0.0, %v5060
      %v5062 = vpop.f32.mrb[0].mxu0
      %5063 = vmatprep.mubr.f32.mxu0 0.0
      %5064 = vmatmul.mubr.f32.gmra.mrb[0].mxu0 %v4948
      %v5065 = vpop.f32.mrb[0].mxu0
      %v5066 = vadd.f32 0.0, %v5065
      %v5067 = vpop.f32.mrb[0].mxu0
      %5068 = vmatprep.mubr.f32.mxu0 0.0
      %5069 = vmatmul.mubr.f32.gmra.mrb[0].mxu0 %v4951
      %v5070 = vpop.f32.mrb[0].mxu0
      %v5071 = vadd.f32 0.0, %v5070
      %v5072 = vpop.f32.mrb[0].mxu0
      %5073 = vmatprep.mubr.f32.mxu0 0.0
      %5074 = vmatmul.mubr.f32.gmra.mrb[0].mxu0 %v4954
      %v5075 = vpop.f32.mrb[0].mxu0
      %v5076 = vadd.f32 0.0, %v5075
      %v5077 = vpop.f32.mrb[0].mxu0
      %5078 = vmatprep.mubr.f32.mxu0 0.0
      %5079 = vmatmul.mubr.f32.gmra.mrb[0].mxu0 %v4957
      %v5080 = vpop.f32.mrb[0].mxu0
      %v5081 = vadd.f32 0.0, %v5080
      %v5082 = vpop.f32.mrb[0].mxu0
      %5083 = vmatprep.mubr.f32.mxu0 0.0
      %5084 = vmatmul.mubr.f32.gmra.mrb[0].mxu0 %v4960
      %v5085 = vpop.f32.mrb[0].mxu0
      %v5086 = vadd.f32 0.0, %v5085
      %v5087 = vpop.f32.mrb[0].mxu0
      %5088 = vmatprep.mubr.f32.mxu0 0.0
      %5089 = vmatmul.mubr.f32.gmra.mrb[0].mxu0 %v4963
      %v5090 = vpop.f32.mrb[0].mxu0
      %v5091 = vadd.f32 0.0, %v5090
      %v5092 = vpop.f32.mrb[0].mxu0
      %5093 = vmatprep.mubr.f32.mxu0 0.0
      %5094 = vmatmul.mubr.f32.gmra.mrb[0].mxu0 %v4966
      %v5095 = vpop.f32.mrb[0].mxu0
      %v5096 = vadd.f32 0.0, %v5095
      %v5097 = vpop.f32.mrb[0].mxu0
      %5098 = vmatprep.mubr.f32.mxu0 0.0
      %5099 = vmatmul.mubr.f32.gmra.mrb[0].mxu0 %v4969
      %v5100 = vpop.f32.mrb[0].mxu0
      %v5101 = vadd.f32 0.0, %v5100
      %v5102 = vpop.f32.mrb[0].mxu0
      %5103 = vmatprep.mubr.f32.mxu0 0.0
      %5104 = vmatmul.mubr.f32.gmra.mrb[0].mxu0 %v4972
      %v5105 = vpop.f32.mrb[0].mxu0
      %v5106 = vadd.f32 0.0, %v5105
      %v5107 = vpop.f32.mrb[0].mxu0
      %5108 = vmatprep.mubr.f32.mxu0 0.0
      %5109 = vmatmul.mubr.f32.gmra.mrb[0].mxu0 %v4975
      %v5110 = vpop.f32.mrb[0].mxu0
      %v5111 = vadd.f32 0.0, %v5110
      %v5112 = vpop.f32.mrb[0].mxu0
      %5113 = vmatprep.mubr.f32.mxu0 0.0
      %5114 = vmatmul.mubr.f32.gmra.mrb[0].mxu0 %v4978
      %v5115 = vpop.f32.mrb[0].mxu0
      %v5116 = vadd.f32 0.0, %v5115
      %v5117 = vpop.f32.mrb[0].mxu0
      %5118 = vmatprep.mubr.f32.mxu0 0.0
      %5119 = vmatmul.mubr.f32.gmra.mrb[0].mxu0 %v4981
      %v5120 = vpop.f32.mrb[0].mxu0
      %v5121 = vadd.f32 0.0, %v5120
      %v5122 = vpop.f32.mrb[0].mxu0
      %5123 = vmatprep.mubr.f32.mxu0 0.0
      %5124 = vmatmul.mubr.f32.gmra.mrb[0].mxu0 %v4984
      %v5125 = vpop.f32.mrb[0].mxu0
      %v5126 = vadd.f32 0.0, %v5125
      %v5127 = vpop.f32.mrb[0].mxu0
      %5128 = vmatprep.mubr.f32.mxu0 0.0
      %5129 = vmatmul.mubr.f32.gmra.mrb[0].mxu0 %v4987
      %v5130 = vpop.f32.mrb[0].mxu0
      %v5131 = vadd.f32 0.0, %v5130
      %v5132 = vpop.f32.mrb[0].mxu0
      %5133 = vdwg.mxu0
      %v5134 = vadd.f32 %v4842, %v5056
      %v5135 = vadd.f32 %v4847, %v5061
      %v5136 = vadd.f32 %v4852, %v5066
      %v5137 = vadd.f32 %v4857, %v5071
      %v5138 = vadd.f32 %v4862, %v5076
      %v5139 = vadd.f32 %v4867, %v5081
      %v5140 = vadd.f32 %v4872, %v5086
      %v5141 = vadd.f32 %v4877, %v5091
      %v5142 = vadd.f32 %v4882, %v5096
      %v5143 = vadd.f32 %v4887, %v5101
      %v5144 = vadd.f32 %v4892, %v5106
      %v5145 = vadd.f32 %v4897, %v5111
      %v5146 = vadd.f32 %v4902, %v5116
      %v5147 = vadd.f32 %v4907, %v5121
      %v5148 = vadd.f32 %v4912, %v5126
      %v5149 = vadd.f32 %v4917, %v5131
      %v5150 = vld [vmem:[#allocation2 + $0xa] sm:$0xff]
      %v5151 = vld [vmem:[#allocation2 + $0x12] sm:$0xff]
      %v5152 = vld [vmem:[#allocation2 + $0x2a] sm:$0xff]
      %v5153 = vld [vmem:[#allocation2 + $0x32] sm:$0xff]
      %v5154 = vld [vmem:[#allocation2 + $0x4a] sm:$0xff]
      %v5155 = vld [vmem:[#allocation2 + $0x52] sm:$0xff]
      %v5156 = vld [vmem:[#allocation2 + $0x6a] sm:$0xff]
      %v5157 = vld [vmem:[#allocation2 + $0x72] sm:$0xff]
      %v5158 = vld [vmem:[#allocation2 + $0x8a] sm:$0xff]
      %v5159 = vld [vmem:[#allocation2 + $0x92] sm:$0xff]
      %v5160 = vld [vmem:[#allocation2 + $0xaa] sm:$0xff]
      %v5161 = vld [vmem:[#allocation2 + $0xb2] sm:$0xff]
      %v5162 = vld [vmem:[#allocation2 + $0xca] sm:$0xff]
      %v5163 = vld [vmem:[#allocation2 + $0xd2] sm:$0xff]
      %v5164 = vld [vmem:[#allocation2 + $0xea] sm:$0xff]
      %v5165 = vld [vmem:[#allocation2 + $0xf2] sm:$0xff]
      %s5166 = scalar_lea.vmem %s9, 24
      %v5167 = vld [vmem:[%s5166] sm:$0xf]
      %v5168 = vld [vmem:[%s5166 + $0x4] sm:$0xf]
      %v5169 = vunpack.c.l.bf16 %v5167
      %v5170 = vunpack.c.l.bf16 %v5168
      %v5172 = vsel %vm501, %v5150, 0
      %v5175 = vsel %vm501, %v5151, 0
      %v5178 = vsel %vm501, %v5152, 0
      %v5181 = vsel %vm501, %v5153, 0
      %v5184 = vsel %vm501, %v5154, 0
      %v5187 = vsel %vm501, %v5155, 0
      %v5190 = vsel %vm501, %v5156, 0
      %v5193 = vsel %vm501, %v5157, 0
      %v5196 = vsel %vm501, %v5158, 0
      %v5199 = vsel %vm501, %v5159, 0
      %v5202 = vsel %vm501, %v5160, 0
      %v5205 = vsel %vm501, %v5161, 0
      %v5208 = vsel %vm501, %v5162, 0
      %v5211 = vsel %vm501, %v5163, 0
      %v5214 = vsel %vm501, %v5164, 0
      %v5217 = vsel %vm501, %v5165, 0
      %5219 = vmatprep.subr.mxu0 0.0
      %5220 = vmatpush1.msra.mxu0 %v5169
      %5221 = vmatprep.subr.mxu0 0.0
      %5222 = vmatpush1.msra.mxu0 %v5170
      %5223 = vmatprep.subr.mxu0 0.0
      %5224 = vmatpush1.msra.mxu0 0.0
      %5225 = vmatprep.subr.mxu0 0.0
      %5226 = vmatpush1.msra.mxu0 0.0
      %5227 = vmatprep.subr.mxu0 0.0
      %5228 = vmatpush1.msra.mxu0 0.0
      %5229 = vmatprep.subr.mxu0 0.0
      %5230 = vmatpush1.msra.mxu0 0.0
      %5231 = vmatprep.subr.mxu0 0.0
      %5232 = vmatpush1.msra.mxu0 0.0
      %5233 = vmatprep.subr.mxu0 0.0
      %5234 = vmatpush1.msra.mxu0 0.0
      %5235 = vmatprep.subr.mxu0 0.0
      %5236 = vmatpush1.msra.mxu0 0.0
      %5237 = vmatprep.subr.mxu0 0.0
      %5238 = vmatpush1.msra.mxu0 0.0
      %5239 = vmatprep.subr.mxu0 0.0
      %5240 = vmatpush1.msra.mxu0 0.0
      %5241 = vmatprep.subr.mxu0 0.0
      %5242 = vmatpush1.msra.mxu0 0.0
      %5243 = vmatprep.subr.mxu0 0.0
      %5244 = vmatpush1.msra.mxu0 0.0
      %5245 = vmatprep.subr.mxu0 0.0
      %5246 = vmatpush1.msra.mxu0 0.0
      %5247 = vmatprep.subr.mxu0 0.0
      %5248 = vmatpush1.msra.mxu0 0.0
      %5249 = vmatprep.subr.mxu0 0.0
      %5250 = vmatpush1.msra.mxu0 0.0
      %5251 = vmatprep.subr.mxu0 0.0
      %5252 = vmatpush1.msra.mxu0 0.0
      %5253 = vmatprep.subr.mxu0 0.0
      %5254 = vmatpush1.msra.mxu0 0.0
      %5255 = vmatprep.subr.mxu0 0.0
      %5256 = vmatpush1.msra.mxu0 0.0
      %5257 = vmatprep.subr.mxu0 0.0
      %5258 = vmatpush1.msra.mxu0 0.0
      %5259 = vmatprep.subr.mxu0 0.0
      %5260 = vmatpush1.msra.mxu0 0.0
      %5261 = vmatprep.subr.mxu0 0.0
      %5262 = vmatpush1.msra.mxu0 0.0
      %5263 = vmatprep.subr.mxu0 0.0
      %5264 = vmatpush1.msra.mxu0 0.0
      %5265 = vmatprep.subr.mxu0 0.0
      %5266 = vmatpush1.msra.mxu0 0.0
      %5267 = vmatprep.subr.mxu0 0.0
      %5268 = vmatpush1.msra.mxu0 0.0
      %5269 = vmatprep.subr.mxu0 0.0
      %5270 = vmatpush1.msra.mxu0 0.0
      %5271 = vmatprep.subr.mxu0 0.0
      %5272 = vmatpush1.msra.mxu0 0.0
      %5273 = vmatprep.subr.mxu0 0.0
      %5274 = vmatpush1.msra.mxu0 0.0
      %5275 = vmatprep.subr.mxu0 0.0
      %5276 = vmatpush1.msra.mxu0 0.0
      %5277 = vmatprep.subr.mxu0 0.0
      %5278 = vmatpush1.msra.mxu0 0.0
      %5279 = vmatprep.subr.mxu0 0.0
      %5280 = vmatpush1.msra.mxu0 0.0
      %5281 = vmatprep.subr.mxu0 0.0
      %5282 = vmatpush1.msra.mxu0 0.0
      %5283 = vmatprep.mubr.f32.mxu0 0.0
      %5284 = vmatmul.mubr.f32.gmra.mrb[0].mxu0 %v5172
      %v5285 = vpop.f32.mrb[0].mxu0
      %v5286 = vadd.f32 0.0, %v5285
      %v5287 = vpop.f32.mrb[0].mxu0
      %5288 = vmatprep.mubr.f32.mxu0 0.0
      %5289 = vmatmul.mubr.f32.gmra.mrb[0].mxu0 %v5175
      %v5290 = vpop.f32.mrb[0].mxu0
      %v5291 = vadd.f32 0.0, %v5290
      %v5292 = vpop.f32.mrb[0].mxu0
      %5293 = vmatprep.mubr.f32.mxu0 0.0
      %5294 = vmatmul.mubr.f32.gmra.mrb[0].mxu0 %v5178
      %v5295 = vpop.f32.mrb[0].mxu0
      %v5296 = vadd.f32 0.0, %v5295
      %v5297 = vpop.f32.mrb[0].mxu0
      %5298 = vmatprep.mubr.f32.mxu0 0.0
      %5299 = vmatmul.mubr.f32.gmra.mrb[0].mxu0 %v5181
      %v5300 = vpop.f32.mrb[0].mxu0
      %v5301 = vadd.f32 0.0, %v5300
      %v5302 = vpop.f32.mrb[0].mxu0
      %5303 = vmatprep.mubr.f32.mxu0 0.0
      %5304 = vmatmul.mubr.f32.gmra.mrb[0].mxu0 %v5184
      %v5305 = vpop.f32.mrb[0].mxu0
      %v5306 = vadd.f32 0.0, %v5305
      %v5307 = vpop.f32.mrb[0].mxu0
      %5308 = vmatprep.mubr.f32.mxu0 0.0
      %5309 = vmatmul.mubr.f32.gmra.mrb[0].mxu0 %v5187
      %v5310 = vpop.f32.mrb[0].mxu0
      %v5311 = vadd.f32 0.0, %v5310
      %v5312 = vpop.f32.mrb[0].mxu0
      %5313 = vmatprep.mubr.f32.mxu0 0.0
      %5314 = vmatmul.mubr.f32.gmra.mrb[0].mxu0 %v5190
      %v5315 = vpop.f32.mrb[0].mxu0
      %v5316 = vadd.f32 0.0, %v5315
      %v5317 = vpop.f32.mrb[0].mxu0
      %5318 = vmatprep.mubr.f32.mxu0 0.0
      %5319 = vmatmul.mubr.f32.gmra.mrb[0].mxu0 %v5193
      %v5320 = vpop.f32.mrb[0].mxu0
      %v5321 = vadd.f32 0.0, %v5320
      %v5322 = vpop.f32.mrb[0].mxu0
      %5323 = vmatprep.mubr.f32.mxu0 0.0
      %5324 = vmatmul.mubr.f32.gmra.mrb[0].mxu0 %v5196
      %v5325 = vpop.f32.mrb[0].mxu0
      %v5326 = vadd.f32 0.0, %v5325
      %v5327 = vpop.f32.mrb[0].mxu0
      %5328 = vmatprep.mubr.f32.mxu0 0.0
      %5329 = vmatmul.mubr.f32.gmra.mrb[0].mxu0 %v5199
      %v5330 = vpop.f32.mrb[0].mxu0
      %v5331 = vadd.f32 0.0, %v5330
      %v5332 = vpop.f32.mrb[0].mxu0
      %5333 = vmatprep.mubr.f32.mxu0 0.0
      %5334 = vmatmul.mubr.f32.gmra.mrb[0].mxu0 %v5202
      %v5335 = vpop.f32.mrb[0].mxu0
      %v5336 = vadd.f32 0.0, %v5335
      %v5337 = vpop.f32.mrb[0].mxu0
      %5338 = vmatprep.mubr.f32.mxu0 0.0
      %5339 = vmatmul.mubr.f32.gmra.mrb[0].mxu0 %v5205
      %v5340 = vpop.f32.mrb[0].mxu0
      %v5341 = vadd.f32 0.0, %v5340
      %v5342 = vpop.f32.mrb[0].mxu0
      %5343 = vmatprep.mubr.f32.mxu0 0.0
      %5344 = vmatmul.mubr.f32.gmra.mrb[0].mxu0 %v5208
      %v5345 = vpop.f32.mrb[0].mxu0
      %v5346 = vadd.f32 0.0, %v5345
      %v5347 = vpop.f32.mrb[0].mxu0
      %5348 = vmatprep.mubr.f32.mxu0 0.0
      %5349 = vmatmul.mubr.f32.gmra.mrb[0].mxu0 %v5211
      %v5350 = vpop.f32.mrb[0].mxu0
      %v5351 = vadd.f32 0.0, %v5350
      %v5352 = vpop.f32.mrb[0].mxu0
      %5353 = vmatprep.mubr.f32.mxu0 0.0
      %5354 = vmatmul.mubr.f32.gmra.mrb[0].mxu0 %v5214
      %v5355 = vpop.f32.mrb[0].mxu0
      %v5356 = vadd.f32 0.0, %v5355
      %v5357 = vpop.f32.mrb[0].mxu0
      %5358 = vmatprep.mubr.f32.mxu0 0.0
      %5359 = vmatmul.mubr.f32.gmra.mrb[0].mxu0 %v5217
      %v5360 = vpop.f32.mrb[0].mxu0
      %v5361 = vadd.f32 0.0, %v5360
      %v5362 = vpop.f32.mrb[0].mxu0
      %5363 = vdwg.mxu0
      %v5364 = vadd.f32 %v5134, %v5286
      %v5365 = vadd.f32 %v5135, %v5291
      %v5366 = vadd.f32 %v5136, %v5296
      %v5367 = vadd.f32 %v5137, %v5301
      %v5368 = vadd.f32 %v5138, %v5306
      %v5369 = vadd.f32 %v5139, %v5311
      %v5370 = vadd.f32 %v5140, %v5316
      %v5371 = vadd.f32 %v5141, %v5321
      %v5372 = vadd.f32 %v5142, %v5326
      %v5373 = vadd.f32 %v5143, %v5331
      %v5374 = vadd.f32 %v5144, %v5336
      %v5375 = vadd.f32 %v5145, %v5341
      %v5376 = vadd.f32 %v5146, %v5346
      %v5377 = vadd.f32 %v5147, %v5351
      %v5378 = vadd.f32 %v5148, %v5356
      %v5379 = vadd.f32 %v5149, %v5361
      %v5380 = vld [vmem:[#allocation2 + $0xc] sm:$0xff]
      %v5381 = vld [vmem:[#allocation2 + $0x14] sm:$0xff]
      %v5382 = vld [vmem:[#allocation2 + $0x2c] sm:$0xff]
      %v5383 = vld [vmem:[#allocation2 + $0x34] sm:$0xff]
      %v5384 = vld [vmem:[#allocation2 + $0x4c] sm:$0xff]
      %v5385 = vld [vmem:[#allocation2 + $0x54] sm:$0xff]
      %v5386 = vld [vmem:[#allocation2 + $0x6c] sm:$0xff]
      %v5387 = vld [vmem:[#allocation2 + $0x74] sm:$0xff]
      %v5388 = vld [vmem:[#allocation2 + $0x8c] sm:$0xff]
      %v5389 = vld [vmem:[#allocation2 + $0x94] sm:$0xff]
      %v5390 = vld [vmem:[#allocation2 + $0xac] sm:$0xff]
      %v5391 = vld [vmem:[#allocation2 + $0xb4] sm:$0xff]
      %v5392 = vld [vmem:[#allocation2 + $0xcc] sm:$0xff]
      %v5393 = vld [vmem:[#allocation2 + $0xd4] sm:$0xff]
      %v5394 = vld [vmem:[#allocation2 + $0xec] sm:$0xff]
      %v5395 = vld [vmem:[#allocation2 + $0xf4] sm:$0xff]
      %s5396 = scalar_lea.vmem %s9, 32
      %v5397 = vld [vmem:[%s5396] sm:$0xf]
      %v5398 = vld [vmem:[%s5396 + $0x4] sm:$0xf]
      %v5399 = vunpack.c.l.bf16 %v5397
      %v5400 = vunpack.c.l.bf16 %v5398
      %v5402 = vsel %vm501, %v5380, 0
      %v5405 = vsel %vm501, %v5381, 0
      %v5408 = vsel %vm501, %v5382, 0
      %v5411 = vsel %vm501, %v5383, 0
      %v5414 = vsel %vm501, %v5384, 0
      %v5417 = vsel %vm501, %v5385, 0
      %v5420 = vsel %vm501, %v5386, 0
      %v5423 = vsel %vm501, %v5387, 0
      %v5426 = vsel %vm501, %v5388, 0
      %v5429 = vsel %vm501, %v5389, 0
      %v5432 = vsel %vm501, %v5390, 0
      %v5435 = vsel %vm501, %v5391, 0
      %v5438 = vsel %vm501, %v5392, 0
      %v5441 = vsel %vm501, %v5393, 0
      %v5444 = vsel %vm501, %v5394, 0
      %v5447 = vsel %vm501, %v5395, 0
      %5449 = vmatprep.subr.mxu0 0.0
      %5450 = vmatpush1.msra.mxu0 %v5399
      %5451 = vmatprep.subr.mxu0 0.0
      %5452 = vmatpush1.msra.mxu0 %v5400
      %5453 = vmatprep.subr.mxu0 0.0
      %5454 = vmatpush1.msra.mxu0 0.0
      %5455 = vmatprep.subr.mxu0 0.0
      %5456 = vmatpush1.msra.mxu0 0.0
      %5457 = vmatprep.subr.mxu0 0.0
      %5458 = vmatpush1.msra.mxu0 0.0
      %5459 = vmatprep.subr.mxu0 0.0
      %5460 = vmatpush1.msra.mxu0 0.0
      %5461 = vmatprep.subr.mxu0 0.0
      %5462 = vmatpush1.msra.mxu0 0.0
      %5463 = vmatprep.subr.mxu0 0.0
      %5464 = vmatpush1.msra.mxu0 0.0
      %5465 = vmatprep.subr.mxu0 0.0
      %5466 = vmatpush1.msra.mxu0 0.0
      %5467 = vmatprep.subr.mxu0 0.0
      %5468 = vmatpush1.msra.mxu0 0.0
      %5469 = vmatprep.subr.mxu0 0.0
      %5470 = vmatpush1.msra.mxu0 0.0
      %5471 = vmatprep.subr.mxu0 0.0
      %5472 = vmatpush1.msra.mxu0 0.0
      %5473 = vmatprep.subr.mxu0 0.0
      %5474 = vmatpush1.msra.mxu0 0.0
      %5475 = vmatprep.subr.mxu0 0.0
      %5476 = vmatpush1.msra.mxu0 0.0
      %5477 = vmatprep.subr.mxu0 0.0
      %5478 = vmatpush1.msra.mxu0 0.0
      %5479 = vmatprep.subr.mxu0 0.0
      %5480 = vmatpush1.msra.mxu0 0.0
      %5481 = vmatprep.subr.mxu0 0.0
      %5482 = vmatpush1.msra.mxu0 0.0
      %5483 = vmatprep.subr.mxu0 0.0
      %5484 = vmatpush1.msra.mxu0 0.0
      %5485 = vmatprep.subr.mxu0 0.0
      %5486 = vmatpush1.msra.mxu0 0.0
      %5487 = vmatprep.subr.mxu0 0.0
      %5488 = vmatpush1.msra.mxu0 0.0
      %5489 = vmatprep.subr.mxu0 0.0
      %5490 = vmatpush1.msra.mxu0 0.0
      %5491 = vmatprep.subr.mxu0 0.0
      %5492 = vmatpush1.msra.mxu0 0.0
      %5493 = vmatprep.subr.mxu0 0.0
      %5494 = vmatpush1.msra.mxu0 0.0
      %5495 = vmatprep.subr.mxu0 0.0
      %5496 = vmatpush1.msra.mxu0 0.0
      %5497 = vmatprep.subr.mxu0 0.0
      %5498 = vmatpush1.msra.mxu0 0.0
      %5499 = vmatprep.subr.mxu0 0.0
      %5500 = vmatpush1.msra.mxu0 0.0
      %5501 = vmatprep.subr.mxu0 0.0
      %5502 = vmatpush1.msra.mxu0 0.0
      %5503 = vmatprep.subr.mxu0 0.0
      %5504 = vmatpush1.msra.mxu0 0.0
      %5505 = vmatprep.subr.mxu0 0.0
      %5506 = vmatpush1.msra.mxu0 0.0
      %5507 = vmatprep.subr.mxu0 0.0
      %5508 = vmatpush1.msra.mxu0 0.0
      %5509 = vmatprep.subr.mxu0 0.0
      %5510 = vmatpush1.msra.mxu0 0.0
      %5511 = vmatprep.subr.mxu0 0.0
      %5512 = vmatpush1.msra.mxu0 0.0
      %5513 = vmatprep.mubr.f32.mxu0 0.0
      %5514 = vmatmul.mubr.f32.gmra.mrb[0].mxu0 %v5402
      %v5515 = vpop.f32.mrb[0].mxu0
      %v5516 = vadd.f32 0.0, %v5515
      %v5517 = vpop.f32.mrb[0].mxu0
      %5518 = vmatprep.mubr.f32.mxu0 0.0
      %5519 = vmatmul.mubr.f32.gmra.mrb[0].mxu0 %v5405
      %v5520 = vpop.f32.mrb[0].mxu0
      %v5521 = vadd.f32 0.0, %v5520
      %v5522 = vpop.f32.mrb[0].mxu0
      %5523 = vmatprep.mubr.f32.mxu0 0.0
      %5524 = vmatmul.mubr.f32.gmra.mrb[0].mxu0 %v5408
      %v5525 = vpop.f32.mrb[0].mxu0
      %v5526 = vadd.f32 0.0, %v5525
      %v5527 = vpop.f32.mrb[0].mxu0
      %5528 = vmatprep.mubr.f32.mxu0 0.0
      %5529 = vmatmul.mubr.f32.gmra.mrb[0].mxu0 %v5411
      %v5530 = vpop.f32.mrb[0].mxu0
      %v5531 = vadd.f32 0.0, %v5530
      %v5532 = vpop.f32.mrb[0].mxu0
      %5533 = vmatprep.mubr.f32.mxu0 0.0
      %5534 = vmatmul.mubr.f32.gmra.mrb[0].mxu0 %v5414
      %v5535 = vpop.f32.mrb[0].mxu0
      %v5536 = vadd.f32 0.0, %v5535
      %v5537 = vpop.f32.mrb[0].mxu0
      %5538 = vmatprep.mubr.f32.mxu0 0.0
      %5539 = vmatmul.mubr.f32.gmra.mrb[0].mxu0 %v5417
      %v5540 = vpop.f32.mrb[0].mxu0
      %v5541 = vadd.f32 0.0, %v5540
      %v5542 = vpop.f32.mrb[0].mxu0
      %5543 = vmatprep.mubr.f32.mxu0 0.0
      %5544 = vmatmul.mubr.f32.gmra.mrb[0].mxu0 %v5420
      %v5545 = vpop.f32.mrb[0].mxu0
      %v5546 = vadd.f32 0.0, %v5545
      %v5547 = vpop.f32.mrb[0].mxu0
      %5548 = vmatprep.mubr.f32.mxu0 0.0
      %5549 = vmatmul.mubr.f32.gmra.mrb[0].mxu0 %v5423
      %v5550 = vpop.f32.mrb[0].mxu0
      %v5551 = vadd.f32 0.0, %v5550
      %v5552 = vpop.f32.mrb[0].mxu0
      %5553 = vmatprep.mubr.f32.mxu0 0.0
      %5554 = vmatmul.mubr.f32.gmra.mrb[0].mxu0 %v5426
      %v5555 = vpop.f32.mrb[0].mxu0
      %v5556 = vadd.f32 0.0, %v5555
      %v5557 = vpop.f32.mrb[0].mxu0
      %5558 = vmatprep.mubr.f32.mxu0 0.0
      %5559 = vmatmul.mubr.f32.gmra.mrb[0].mxu0 %v5429
      %v5560 = vpop.f32.mrb[0].mxu0
      %v5561 = vadd.f32 0.0, %v5560
      %v5562 = vpop.f32.mrb[0].mxu0
      %5563 = vmatprep.mubr.f32.mxu0 0.0
      %5564 = vmatmul.mubr.f32.gmra.mrb[0].mxu0 %v5432
      %v5565 = vpop.f32.mrb[0].mxu0
      %v5566 = vadd.f32 0.0, %v5565
      %v5567 = vpop.f32.mrb[0].mxu0
      %5568 = vmatprep.mubr.f32.mxu0 0.0
      %5569 = vmatmul.mubr.f32.gmra.mrb[0].mxu0 %v5435
      %v5570 = vpop.f32.mrb[0].mxu0
      %v5571 = vadd.f32 0.0, %v5570
      %v5572 = vpop.f32.mrb[0].mxu0
      %5573 = vmatprep.mubr.f32.mxu0 0.0
      %5574 = vmatmul.mubr.f32.gmra.mrb[0].mxu0 %v5438
      %v5575 = vpop.f32.mrb[0].mxu0
      %v5576 = vadd.f32 0.0, %v5575
      %v5577 = vpop.f32.mrb[0].mxu0
      %5578 = vmatprep.mubr.f32.mxu0 0.0
      %5579 = vmatmul.mubr.f32.gmra.mrb[0].mxu0 %v5441
      %v5580 = vpop.f32.mrb[0].mxu0
      %v5581 = vadd.f32 0.0, %v5580
      %v5582 = vpop.f32.mrb[0].mxu0
      %5583 = vmatprep.mubr.f32.mxu0 0.0
      %5584 = vmatmul.mubr.f32.gmra.mrb[0].mxu0 %v5444
      %v5585 = vpop.f32.mrb[0].mxu0
      %v5586 = vadd.f32 0.0, %v5585
      %v5587 = vpop.f32.mrb[0].mxu0
      %5588 = vmatprep.mubr.f32.mxu0 0.0
      %5589 = vmatmul.mubr.f32.gmra.mrb[0].mxu0 %v5447
      %v5590 = vpop.f32.mrb[0].mxu0
      %v5591 = vadd.f32 0.0, %v5590
      %v5592 = vpop.f32.mrb[0].mxu0
      %5593 = vdwg.mxu0
      %v5594 = vadd.f32 %v5364, %v5516
      %v5595 = vadd.f32 %v5365, %v5521
      %v5596 = vadd.f32 %v5366, %v5526
      %v5597 = vadd.f32 %v5367, %v5531
      %v5598 = vadd.f32 %v5368, %v5536
      %v5599 = vadd.f32 %v5369, %v5541
      %v5600 = vadd.f32 %v5370, %v5546
      %v5601 = vadd.f32 %v5371, %v5551
      %v5602 = vadd.f32 %v5372, %v5556
      %v5603 = vadd.f32 %v5373, %v5561
      %v5604 = vadd.f32 %v5374, %v5566
      %v5605 = vadd.f32 %v5375, %v5571
      %v5606 = vadd.f32 %v5376, %v5576
      %v5607 = vadd.f32 %v5377, %v5581
      %v5608 = vadd.f32 %v5378, %v5586
      %v5609 = vadd.f32 %v5379, %v5591
      %v5610 = vld [vmem:[%s10] sm:$0x1]
      %v5612 = vlaneseq
      %v5613 = vshrl.u32 %v5612, 7
      %v5614 = vsub.s32 0, %v5613
      %v5615 = vrot.slane %v5610, %v5614
      %v5617 = vadd.f32 %v5594, %v5615
      %v5618 = vadd.f32 %v5595, %v5615
      %v5619 = vadd.f32 %v5596, %v5615
      %v5620 = vadd.f32 %v5597, %v5615
      %v5621 = vadd.f32 %v5598, %v5615
      %v5622 = vadd.f32 %v5599, %v5615
      %v5623 = vadd.f32 %v5600, %v5615
      %v5624 = vadd.f32 %v5601, %v5615
      %v5625 = vadd.f32 %v5602, %v5615
      %v5626 = vadd.f32 %v5603, %v5615
      %v5627 = vadd.f32 %v5604, %v5615
      %v5628 = vadd.f32 %v5605, %v5615
      %v5629 = vadd.f32 %v5606, %v5615
      %v5630 = vadd.f32 %v5607, %v5615
      %v5631 = vadd.f32 %v5608, %v5615
      %v5632 = vadd.f32 %v5609, %v5615
      %v5633 = vmax.f32 %v5617, 0.0
      %v5634 = vmax.f32 %v5618, 0.0
      %v5635 = vmax.f32 %v5619, 0.0
      %v5636 = vmax.f32 %v5620, 0.0
      %v5637 = vmax.f32 %v5621, 0.0
      %v5638 = vmax.f32 %v5622, 0.0
      %v5639 = vmax.f32 %v5623, 0.0
      %v5640 = vmax.f32 %v5624, 0.0
      %v5641 = vmax.f32 %v5625, 0.0
      %v5642 = vmax.f32 %v5626, 0.0
      %v5643 = vmax.f32 %v5627, 0.0
      %v5644 = vmax.f32 %v5628, 0.0
      %v5645 = vmax.f32 %v5629, 0.0
      %v5646 = vmax.f32 %v5630, 0.0
      %v5647 = vmax.f32 %v5631, 0.0
      %v5648 = vmax.f32 %v5632, 0.0
      %v5649 = vadd.f32 %v5633, %v3237
      %v5650 = vadd.f32 %v5634, %v3242
      %v5651 = vadd.f32 %v5635, %v3247
      %v5652 = vadd.f32 %v5636, %v3252
      %v5653 = vadd.f32 %v5637, %v3257
      %v5654 = vadd.f32 %v5638, %v3262
      %v5655 = vadd.f32 %v5639, %v3267
      %v5656 = vadd.f32 %v5640, %v3272
      %v5657 = vadd.f32 %v5641, %v3277
      %v5658 = vadd.f32 %v5642, %v3282
      %v5659 = vadd.f32 %v5643, %v3287
      %v5660 = vadd.f32 %v5644, %v3292
      %v5661 = vadd.f32 %v5645, %v3297
      %v5662 = vadd.f32 %v5646, %v3302
      %v5663 = vadd.f32 %v5647, %v3307
      %v5664 = vadd.f32 %v5648, %v3312
      %v5665 = vmax.f32 %v5649, 0.0
      %v5666 = vmax.f32 %v5650, 0.0
      %v5667 = vmax.f32 %v5651, 0.0
      %v5668 = vmax.f32 %v5652, 0.0
      %v5669 = vmax.f32 %v5653, 0.0
      %v5670 = vmax.f32 %v5654, 0.0
      %v5671 = vmax.f32 %v5655, 0.0
      %v5672 = vmax.f32 %v5656, 0.0
      %v5673 = vmax.f32 %v5657, 0.0
      %v5674 = vmax.f32 %v5658, 0.0
      %v5675 = vmax.f32 %v5659, 0.0
      %v5676 = vmax.f32 %v5660, 0.0
      %v5677 = vmax.f32 %v5661, 0.0
      %v5678 = vmax.f32 %v5662, 0.0
      %v5679 = vmax.f32 %v5663, 0.0
      %v5680 = vmax.f32 %v5664, 0.0
      %v5681 = vld [vmem:[%s13] sm:$0xf]
      %v5682 = vld [vmem:[%s13 + $0x4] sm:$0xf]
      %v5683 = vunpack.c.l.bf16 %v5681
      %v5684 = vunpack.c.l.bf16 %v5682
      %v5685 = vld [vmem:[%s14] sm:$0x1]
      %v5687 = vlaneseq
      %v5688 = vshrl.u32 %v5687, 7
      %v5689 = vsub.s32 0, %v5688
      %v5690 = vrot.slane %v5685, %v5689
      %v5693 = vsel %vm501, %v5665, 0
      %v5696 = vsel %vm501, %v5666, 0
      %v5699 = vsel %vm501, %v5667, 0
      %v5702 = vsel %vm501, %v5668, 0
      %v5705 = vsel %vm501, %v5669, 0
      %v5708 = vsel %vm501, %v5670, 0
      %v5711 = vsel %vm501, %v5671, 0
      %v5714 = vsel %vm501, %v5672, 0
      %v5717 = vsel %vm501, %v5673, 0
      %v5720 = vsel %vm501, %v5674, 0
      %v5723 = vsel %vm501, %v5675, 0
      %v5726 = vsel %vm501, %v5676, 0
      %v5729 = vsel %vm501, %v5677, 0
      %v5732 = vsel %vm501, %v5678, 0
      %v5735 = vsel %vm501, %v5679, 0
      %v5738 = vsel %vm501, %v5680, 0
      %5740 = vmatprep.subr.mxu0 0.0
      %5741 = vmatpush1.msra.mxu0 %v5683
      %5742 = vmatprep.subr.mxu0 0.0
      %5743 = vmatpush1.msra.mxu0 %v5684
      %5744 = vmatprep.subr.mxu0 0.0
      %5745 = vmatpush1.msra.mxu0 0.0
      %5746 = vmatprep.subr.mxu0 0.0
      %5747 = vmatpush1.msra.mxu0 0.0
      %5748 = vmatprep.subr.mxu0 0.0
      %5749 = vmatpush1.msra.mxu0 0.0
      %5750 = vmatprep.subr.mxu0 0.0
      %5751 = vmatpush1.msra.mxu0 0.0
      %5752 = vmatprep.subr.mxu0 0.0
      %5753 = vmatpush1.msra.mxu0 0.0
      %5754 = vmatprep.subr.mxu0 0.0
      %5755 = vmatpush1.msra.mxu0 0.0
      %5756 = vmatprep.subr.mxu0 0.0
      %5757 = vmatpush1.msra.mxu0 0.0
      %5758 = vmatprep.subr.mxu0 0.0
      %5759 = vmatpush1.msra.mxu0 0.0
      %5760 = vmatprep.subr.mxu0 0.0
      %5761 = vmatpush1.msra.mxu0 0.0
      %5762 = vmatprep.subr.mxu0 0.0
      %5763 = vmatpush1.msra.mxu0 0.0
      %5764 = vmatprep.subr.mxu0 0.0
      %5765 = vmatpush1.msra.mxu0 0.0
      %5766 = vmatprep.subr.mxu0 0.0
      %5767 = vmatpush1.msra.mxu0 0.0
      %5768 = vmatprep.subr.mxu0 0.0
      %5769 = vmatpush1.msra.mxu0 0.0
      %5770 = vmatprep.subr.mxu0 0.0
      %5771 = vmatpush1.msra.mxu0 0.0
      %5772 = vmatprep.subr.mxu0 0.0
      %5773 = vmatpush1.msra.mxu0 0.0
      %5774 = vmatprep.subr.mxu0 0.0
      %5775 = vmatpush1.msra.mxu0 0.0
      %5776 = vmatprep.subr.mxu0 0.0
      %5777 = vmatpush1.msra.mxu0 0.0
      %5778 = vmatprep.subr.mxu0 0.0
      %5779 = vmatpush1.msra.mxu0 0.0
      %5780 = vmatprep.subr.mxu0 0.0
      %5781 = vmatpush1.msra.mxu0 0.0
      %5782 = vmatprep.subr.mxu0 0.0
      %5783 = vmatpush1.msra.mxu0 0.0
      %5784 = vmatprep.subr.mxu0 0.0
      %5785 = vmatpush1.msra.mxu0 0.0
      %5786 = vmatprep.subr.mxu0 0.0
      %5787 = vmatpush1.msra.mxu0 0.0
      %5788 = vmatprep.subr.mxu0 0.0
      %5789 = vmatpush1.msra.mxu0 0.0
      %5790 = vmatprep.subr.mxu0 0.0
      %5791 = vmatpush1.msra.mxu0 0.0
      %5792 = vmatprep.subr.mxu0 0.0
      %5793 = vmatpush1.msra.mxu0 0.0
      %5794 = vmatprep.subr.mxu0 0.0
      %5795 = vmatpush1.msra.mxu0 0.0
      %5796 = vmatprep.subr.mxu0 0.0
      %5797 = vmatpush1.msra.mxu0 0.0
      %5798 = vmatprep.subr.mxu0 0.0
      %5799 = vmatpush1.msra.mxu0 0.0
      %5800 = vmatprep.subr.mxu0 0.0
      %5801 = vmatpush1.msra.mxu0 0.0
      %5802 = vmatprep.subr.mxu0 0.0
      %5803 = vmatpush1.msra.mxu0 0.0
      %5804 = vmatprep.mubr.f32.mxu0 0.0
      %5805 = vmatmul.mubr.f32.gmra.mrb[0].mxu0 %v5693
      %v5806 = vpop.f32.mrb[0].mxu0
      %v5807 = vadd.f32 %v5690, %v5806
      %v5808 = vpop.f32.mrb[0].mxu0
      %5809 = vmatprep.mubr.f32.mxu0 0.0
      %5810 = vmatmul.mubr.f32.gmra.mrb[0].mxu0 %v5696
      %v5811 = vpop.f32.mrb[0].mxu0
      %v5812 = vadd.f32 %v5690, %v5811
      %v5813 = vpop.f32.mrb[0].mxu0
      %5814 = vmatprep.mubr.f32.mxu0 0.0
      %5815 = vmatmul.mubr.f32.gmra.mrb[0].mxu0 %v5699
      %v5816 = vpop.f32.mrb[0].mxu0
      %v5817 = vadd.f32 %v5690, %v5816
      %v5818 = vpop.f32.mrb[0].mxu0
      %5819 = vmatprep.mubr.f32.mxu0 0.0
      %5820 = vmatmul.mubr.f32.gmra.mrb[0].mxu0 %v5702
      %v5821 = vpop.f32.mrb[0].mxu0
      %v5822 = vadd.f32 %v5690, %v5821
      %v5823 = vpop.f32.mrb[0].mxu0
      %5824 = vmatprep.mubr.f32.mxu0 0.0
      %5825 = vmatmul.mubr.f32.gmra.mrb[0].mxu0 %v5705
      %v5826 = vpop.f32.mrb[0].mxu0
      %v5827 = vadd.f32 %v5690, %v5826
      %v5828 = vpop.f32.mrb[0].mxu0
      %5829 = vmatprep.mubr.f32.mxu0 0.0
      %5830 = vmatmul.mubr.f32.gmra.mrb[0].mxu0 %v5708
      %v5831 = vpop.f32.mrb[0].mxu0
      %v5832 = vadd.f32 %v5690, %v5831
      %v5833 = vpop.f32.mrb[0].mxu0
      %5834 = vmatprep.mubr.f32.mxu0 0.0
      %5835 = vmatmul.mubr.f32.gmra.mrb[0].mxu0 %v5711
      %v5836 = vpop.f32.mrb[0].mxu0
      %v5837 = vadd.f32 %v5690, %v5836
      %v5838 = vpop.f32.mrb[0].mxu0
      %5839 = vmatprep.mubr.f32.mxu0 0.0
      %5840 = vmatmul.mubr.f32.gmra.mrb[0].mxu0 %v5714
      %v5841 = vpop.f32.mrb[0].mxu0
      %v5842 = vadd.f32 %v5690, %v5841
      %v5843 = vpop.f32.mrb[0].mxu0
      %5844 = vmatprep.mubr.f32.mxu0 0.0
      %5845 = vmatmul.mubr.f32.gmra.mrb[0].mxu0 %v5717
      %v5846 = vpop.f32.mrb[0].mxu0
      %v5847 = vadd.f32 %v5690, %v5846
      %v5848 = vpop.f32.mrb[0].mxu0
      %5849 = vmatprep.mubr.f32.mxu0 0.0
      %5850 = vmatmul.mubr.f32.gmra.mrb[0].mxu0 %v5720
      %v5851 = vpop.f32.mrb[0].mxu0
      %v5852 = vadd.f32 %v5690, %v5851
      %v5853 = vpop.f32.mrb[0].mxu0
      %5854 = vmatprep.mubr.f32.mxu0 0.0
      %5855 = vmatmul.mubr.f32.gmra.mrb[0].mxu0 %v5723
      %v5856 = vpop.f32.mrb[0].mxu0
      %v5857 = vadd.f32 %v5690, %v5856
      %v5858 = vpop.f32.mrb[0].mxu0
      %5859 = vmatprep.mubr.f32.mxu0 0.0
      %5860 = vmatmul.mubr.f32.gmra.mrb[0].mxu0 %v5726
      %v5861 = vpop.f32.mrb[0].mxu0
      %v5862 = vadd.f32 %v5690, %v5861
      %v5863 = vpop.f32.mrb[0].mxu0
      %5864 = vmatprep.mubr.f32.mxu0 0.0
      %5865 = vmatmul.mubr.f32.gmra.mrb[0].mxu0 %v5729
      %v5866 = vpop.f32.mrb[0].mxu0
      %v5867 = vadd.f32 %v5690, %v5866
      %v5868 = vpop.f32.mrb[0].mxu0
      %5869 = vmatprep.mubr.f32.mxu0 0.0
      %5870 = vmatmul.mubr.f32.gmra.mrb[0].mxu0 %v5732
      %v5871 = vpop.f32.mrb[0].mxu0
      %v5872 = vadd.f32 %v5690, %v5871
      %v5873 = vpop.f32.mrb[0].mxu0
      %5874 = vmatprep.mubr.f32.mxu0 0.0
      %5875 = vmatmul.mubr.f32.gmra.mrb[0].mxu0 %v5735
      %v5876 = vpop.f32.mrb[0].mxu0
      %v5877 = vadd.f32 %v5690, %v5876
      %v5878 = vpop.f32.mrb[0].mxu0
      %5879 = vmatprep.mubr.f32.mxu0 0.0
      %5880 = vmatmul.mubr.f32.gmra.mrb[0].mxu0 %v5738
      %v5881 = vpop.f32.mrb[0].mxu0
      %v5882 = vadd.f32 %v5690, %v5881
      %v5883 = vpop.f32.mrb[0].mxu0
      %5884 = vdwg.mxu0
      %5885 = vst [vmem:[%s499] sm:$0xff] %v5807
      %5886 = vst [vmem:[%s499 + $0x8] sm:$0xff] %v5812
      %5887 = vst [vmem:[%s499 + $0x10] sm:$0xff] %v5817
      %5888 = vst [vmem:[%s499 + $0x18] sm:$0xff] %v5822
      %5889 = vst [vmem:[%s499 + $0x20] sm:$0xff] %v5827
      %5890 = vst [vmem:[%s499 + $0x28] sm:$0xff] %v5832
      %5891 = vst [vmem:[%s499 + $0x30] sm:$0xff] %v5837
      %5892 = vst [vmem:[%s499 + $0x38] sm:$0xff] %v5842
      %5893 = vst [vmem:[%s499 + $0x40] sm:$0xff] %v5847
      %5894 = vst [vmem:[%s499 + $0x48] sm:$0xff] %v5852
      %5895 = vst [vmem:[%s499 + $0x50] sm:$0xff] %v5857
      %5896 = vst [vmem:[%s499 + $0x58] sm:$0xff] %v5862
      %5897 = vst [vmem:[%s499 + $0x60] sm:$0xff] %v5867
      %5898 = vst [vmem:[%s499 + $0x68] sm:$0xff] %v5872
      %5899 = vst [vmem:[%s499 + $0x70] sm:$0xff] %v5877
      %5900 = vst [vmem:[%s499 + $0x78] sm:$0xff] %v5882
      %s5901 = smul.u32 16, %s26
      %p5902 = scmp.lt.s32.totalorder %s5901, 31
      %s5903 = scalar_select %p5902, %s5901, 31
      %s5904 = smul.addr %s5903, 8
      %s5905 = scalar_lea.vmem %s15, %s5904
      // Predicated region
      $region81: #{forward.1} parent=79 // pred_check
        %p5906 = pneg %p364
      $region82: #{forward.1} parent=79 // pred_check_branch
        %5908 = sbr.rel (%p5906) target = $region84
      $region83: #{forward.1} parent=79 // pred_region
        %s5909 = smul.u32 16, %s26
      $region84: #{forward.1} parent=79 // pred_fallthru
        _
    $region80: #{forward.1} parent=5 // pred_fallthru
      _
    %p5910 = scmp.le.s32.totalorder 2, %s21
    // Predicated region
    $region85: #{forward.1} parent=5 // pred_check
      %p5911 = pneg %p5910
    $region86: #{forward.1} parent=5 // pred_check_branch
      %5913 = sbr.rel (%p5911) target = $region88
    $region87: #{forward.1} parent=5 // pred_region
      %s5914 = ssub.s32 %s21, 2
      // Predicated region
      $region89: #{forward.1} parent=87 // pred_check
        %p5915 = pneg %p370
      $region90: #{forward.1} parent=87 // pred_check_branch
        %5917 = sbr.rel (%p5915) target = $region92
      $region91: #{forward.1} parent=87 // pred_region
        %s5918 = smul.u32 16, %s27
        %p5919 = scmp.lt.s32.totalorder %s5918, 31
        %s5920 = scalar_select %p5919, %s5918, 31
        %s5921 = smul.addr %s5920, 8
        %s5922 = scalar_lea.vmem %s15, %s5921
      $region92: #{forward.1} parent=87 // pred_fallthru
        _
    $region88: #{forward.1} parent=5 // pred_fallthru
      _
  $region6: #{forward.1} parent=0 // loop_footer
    %s25 = sadd.s32 1, %s21
  $region7: #{forward.1} parent=0 // loop_footer_branch
    %20 = sbr.rel target = $region3
  $region8: #{forward.1} parent=0 // loop_exit
    _

</llo_original>
